<compile_context>
chip_gen: v7x
topology: tpu7x:2x2x1
jax: 0.10.0
libtpu: 0.0.40
codegen_flags: <defaults>
</compile_context>

<pallas_src>
import functools

import jax
import jax.numpy as jnp
from jax.experimental import pallas as pl
from jax.experimental.pallas import tpu as pltpu


# ----------------------------------------------------------------------------
# Fused kernel: bilinear upsample (MXU) + softmax + CE sum + dice statistics.
# One grid step handles (batch n, output-row tile t): TR complete output rows.
# ----------------------------------------------------------------------------
def _aux_stats_kernel(x_ref, rh_ref, rwt_ref, lab_ref,
                      ce_ref, inter_ref, z_ref, acc_ref,
                      *, n_classes, n_row_tiles):
    t = pl.program_id(1)

    @pl.when(t == 0)
    def _():
        acc_ref[...] = jnp.zeros_like(acc_ref)

    rh = rh_ref[...]          # (TR, h)   rows of the height-resize matrix
    rwt = rwt_ref[...]        # (w, Wo)   width-resize matrix, pre-transposed
    lab = lab_ref[...]        # (TR, Wo)  int32 labels for this row tile

    # ---- fused bilinear upsample: two small MXU matmuls per class ----------
    # plane_c[tr, ow] = sum_ih sum_iw Rh[tr, ih] * x[c, ih, iw] * Rw[ow, iw]
    planes = []
    for c in range(n_classes):
        rows = jnp.dot(rh, x_ref[c], preferred_element_type=jnp.float32)       # (TR, w)
        planes.append(jnp.dot(rows, rwt, preferred_element_type=jnp.float32))  # (TR, Wo)

    # ---- softmax across the class planes: elementwise VPU/EUP ops only -----
    m = planes[0]
    for c in range(1, n_classes):
        m = jnp.maximum(m, planes[c])
    exps = [jnp.exp(p - m) for p in planes]
    denom = exps[0]
    for c in range(1, n_classes):
        denom = denom + exps[c]
    inv = pl.reciprocal(denom, approx=True)      # EUP slot (nearly free)
    log_denom = jnp.log(denom)

    # ---- cross entropy: logit at the label via per-class selects -----------
    x_at_lab = jnp.zeros_like(m)
    for c in range(n_classes):
        x_at_lab = jnp.where(lab == c, planes[c], x_at_lab)
    ce_pix = log_denom + m - x_at_lab            # (TR, Wo) = -log softmax[label]

    # ---- per-tile partial sums (sublane reduce only), lane-wide scratch ----
    probs = [e * inv for e in exps]
    rows_out = [jnp.sum(ce_pix, axis=0, keepdims=True)]                       # (1, Wo)
    for c in range(n_classes):
        tgt = (lab == c).astype(jnp.float32)
        rows_out.append(jnp.sum(probs[c] * tgt, axis=0, keepdims=True))       # intersect_c
    for c in range(n_classes):
        rows_out.append(jnp.sum(probs[c] * probs[c], axis=0, keepdims=True))  # z_c
    acc_ref[...] += jnp.concatenate(rows_out, axis=0)                         # (2C+1, Wo)

    # ---- one cross-lane reduce + narrow store per batch element ------------
    @pl.when(t == n_row_tiles - 1)
    def _():
        totals = jnp.sum(acc_ref[...], axis=1, keepdims=True)                 # (2C+1, 1)
        ce_ref[...] = totals[0:1, :]
        inter_ref[...] = totals[1:1 + n_classes, :]
        z_ref[...] = totals[1 + n_classes:2 * n_classes + 1, :]


def _choose_tr(out_h, out_w, n_classes):
    """Largest row-tile TR that (a) divides out_h exactly (no ragged tail),
    (b) is a multiple of 8 (f32/int32 sublane tiling) or equals out_h, and
    (c) keeps the in-kernel f32 working set well under VMEM on all gens."""
    budget = 8 * 1024 * 1024                          # conservative (v7x: 64 MiB VMEM)
    bytes_per_row = (2 * n_classes + 6) * out_w * 4   # logit + exp planes + temps
    cap = max(8, budget // max(bytes_per_row, 1))
    best = None
    for tr in range(8, out_h + 1, 8):
        if out_h % tr == 0 and tr <= cap:
            best = tr
    if best is None:
        best = out_h      # no multiple-of-8 divisor; full height (full-dim block is legal)
    return best


def _aux_stats(fm, rh, rwt, labels, out_h, out_w):
    """Per-feature-map statistics: (ce_sum, intersect[C], z_sum[C]).

    fm:     (N, C, h, w) float32 low-res logits
    rh:     (Ho, h) float32 height-resize matrix
    rwt:    (w, Wo) float32 width-resize matrix (transposed)
    labels: (N, Ho, Wo) int32
    """
    N, C, h, w = fm.shape
    TR = _choose_tr(out_h, out_w, C)
    n_tiles = out_h // TR if out_h % TR == 0 else 1
    if out_h % TR != 0:           # only possible when TR == out_h
        TR = out_h
        n_tiles = 1

    kernel = functools.partial(_aux_stats_kernel, n_classes=C, n_row_tiles=n_tiles)

    ce_p, inter_p, z_p = pl.pallas_call(
        kernel,
        out_shape=(
            jax.ShapeDtypeStruct((N, 1, 1), jnp.float32),
            jax.ShapeDtypeStruct((N, C, 1), jnp.float32),
            jax.ShapeDtypeStruct((N, C, 1), jnp.float32),
        ),
        grid=(N, n_tiles),
        in_specs=[
            # low-res map: constant across row tiles -> fetched once per batch elem
            pl.BlockSpec((None, C, h, w), lambda n, t: (n, 0, 0, 0)),
            # TR rows of the height-resize matrix per tile
            pl.BlockSpec((TR, h), lambda n, t: (t, 0)),
            # full width-resize matrix (constant across the whole grid)
            pl.BlockSpec((w, out_w), lambda n, t: (0, 0)),
            # labels for this row tile
            pl.BlockSpec((None, TR, out_w), lambda n, t: (n, t, 0)),
        ],
        out_specs=(
            pl.BlockSpec((None, 1, 1), lambda n, t: (n, 0, 0)),
            pl.BlockSpec((None, C, 1), lambda n, t: (n, 0, 0)),
            pl.BlockSpec((None, C, 1), lambda n, t: (n, 0, 0)),
        ),
        scratch_shapes=[pltpu.VMEM((2 * C + 1, out_w), jnp.float32)],
        compiler_params=pltpu.CompilerParams(
            dimension_semantics=("parallel", "arbitrary"),
            vmem_limit_bytes=32 * 1024 * 1024,
        ),
    )(fm, rh, rwt, labels)

    ce_sum = jnp.sum(ce_p)
    inter = jnp.sum(inter_p, axis=0)[:, 0]
    z_sum = jnp.sum(z_p, axis=0)[:, 0]
    return ce_sum, inter, z_sum


# ----------------------------------------------------------------------------
# Bilinear resize matrix matching torch F.interpolate(mode='bilinear',
# align_corners=False).  out = Rh @ x @ Rw^T.
# ----------------------------------------------------------------------------
def _resize_matrix(out_size, in_size):
    scale = in_size / out_size
    src = (jnp.arange(out_size, dtype=jnp.float32) + 0.5) * scale - 0.5
    src = jnp.maximum(src, 0.0)
    i0 = jnp.minimum(jnp.floor(src).astype(jnp.int32), in_size - 1)
    i1 = jnp.minimum(i0 + 1, in_size - 1)
    w1 = src - i0.astype(jnp.float32)
    w0 = 1.0 - w1
    rows = jnp.arange(out_size)
    R = jnp.zeros((out_size, in_size), jnp.float32)
    R = R.at[rows, i0].add(w0)
    R = R.at[rows, i1].add(w1)
    return R                                           # (out_size, in_size)


def bilinear_resize_nchw(x, out_h, out_w):
    # Reference-path resize (NCHW), same matrices as the fused kernel.
    _, _, H, W = x.shape
    Rh = _resize_matrix(out_h, H)                      # (Ho, H)
    Rw = _resize_matrix(out_w, W)                      # (Wo, W)
    tmp = jnp.einsum("oh,nchw->ncow", Rh, x)
    return jnp.einsum("ncow,pw->ncop", tmp, Rw)


# ----------------------------------------------------------------------------
# AuxLoss forward.
# ----------------------------------------------------------------------------
@functools.partial(jax.jit, static_argnames=("n_classes", "resize"))
def aux_loss(feat_maps, labels, *, n_classes, resize):
    """JAX/Pallas equivalent of AuxLoss.forward.

    feat_maps: tuple of (N, n_classes, h, w) arrays (NCHW, like PyTorch).
    labels:    (N, Ho, Wo) integer class labels.
    """
    Ho, Wo = resize
    N = labels.shape[0]
    P = N * Ho * Wo
    lab = labels.astype(jnp.int32)                     # (N, Ho, Wo)

    # per-class label pixel counts (y_sum) -- identical for every feature map
    y_sum = jnp.bincount(lab.reshape(-1), length=n_classes).astype(jnp.float32)

    smooth = 1e-5
    loss_ce = jnp.float32(0.0)
    loss_dice = jnp.float32(0.0)
    for fm in feat_maps:
        h, w = fm.shape[2], fm.shape[3]
        Rh = _resize_matrix(Ho, h)                     # (Ho, h)
        RwT = _resize_matrix(Wo, w).T                  # (w, Wo)  pre-transposed
        ce_sum, inter, z_sum = _aux_stats(fm.astype(jnp.float32), Rh, RwT, lab, Ho, Wo)
        loss_ce += ce_sum / P                          # mean over pixels (torch CE default)
        dice_per_class = 1.0 - (2.0 * inter + smooth) / (z_sum + y_sum + smooth)
        loss_dice += jnp.sum(dice_per_class) / n_classes

    length = len(feat_maps)
    return loss_ce / length + loss_dice / length


# ----------------------------------------------------------------------------
# Pure-JAX reference (f32 end-to-end; checks the kernel math).
# ----------------------------------------------------------------------------
def aux_loss_ref(feat_maps, labels, *, n_classes, resize):
    Ho, Wo = resize
    smooth = 1e-5
    loss_ce = 0.0
    loss_dice = 0.0
    for fm in feat_maps:
        fm_r = bilinear_resize_nchw(fm.astype(jnp.float32), Ho, Wo)
        logp = jax.nn.log_softmax(fm_r, axis=1)
        prob = jax.nn.softmax(fm_r, axis=1)
        onehot = jax.nn.one_hot(labels, n_classes, axis=1, dtype=jnp.float32)
        loss_ce += -jnp.mean(jnp.sum(onehot * logp, axis=1))
        dice = 0.0
        for c in range(n_classes):
            s, tgt = prob[:, c], onehot[:, c]
            inter = jnp.sum(s * tgt)
            dice += 1.0 - (2.0 * inter + smooth) / (jnp.sum(s * s) + jnp.sum(tgt * tgt) + smooth)
        loss_dice += dice / n_classes
    length = len(feat_maps)
    return loss_ce / length + loss_dice / length


if __name__ == "__main__":
    key = jax.random.PRNGKey(0)
    N, C = 2, 4
    resize = (16, 16)

    k1, k2, k3 = jax.random.split(key, 3)
    # Two aux feature maps at different resolutions (NCHW), like decoder heads.
    feat_maps = (
        jax.random.normal(k1, (N, C, 8, 8), dtype=jnp.float32),
        jax.random.normal(k2, (N, C, 16, 16), dtype=jnp.float32),
    )
    labels = jax.random.randint(k3, (N, resize[0], resize[1]), 0, C, dtype=jnp.int32)

    out = aux_loss(feat_maps, labels, n_classes=C, resize=resize)
    out = jax.block_until_ready(out)

    ref = aux_loss_ref(feat_maps, labels, n_classes=C, resize=resize)
    # f32 end-to-end; only the approx EUP reciprocal perturbs the dice terms (~1e-4).
    assert jnp.abs(out - ref) < 5e-3, (out, ref)

    print("KERNEL_OK")
</pallas_src>

<mosaic_0001>
module attributes {stable_mosaic.version = 11 : i64} {
  func.func private @main(%arg0: i32) attributes {dimension_semantics = [#tpu.dimension_semantics<core_parallel>], iteration_bounds = array<i64: 2>, tpu.core_type = #tpu.core_type<sc_scalar_subcore>, window_params = []} {
    return
  }
}

module attributes {stable_mosaic.version = 11 : i64} {
  func.func private @main(%arg0: i32) attributes {dimension_semantics = [#tpu.dimension_semantics<core_parallel>], iteration_bounds = array<i64: 2>, tpu.core_type = #tpu.core_type<sc_scalar_subcore>, window_params = []} {
    return
  }
}

module attributes {stable_mosaic.version = 11 : i64} {
  func.func @_aux_stats_kernel(%arg0: i32, %arg1: i32, %arg2: memref<1x4x16x16xf32, #tpu.memory_space<vmem>>, %arg3: memref<16x16xf32, #tpu.memory_space<vmem>>, %arg4: memref<16x16xf32, #tpu.memory_space<vmem>>, %arg5: memref<1x16x16xi32, #tpu.memory_space<vmem>>, %arg6: memref<1x1x1xf32, #tpu.memory_space<vmem>>, %arg7: memref<1x4x1xf32, #tpu.memory_space<vmem>>, %arg8: memref<1x4x1xf32, #tpu.memory_space<vmem>>, %arg9: memref<9x16xf32, #tpu.memory_space<vmem>>) attributes {dimension_semantics = [#tpu.dimension_semantics<parallel>, #tpu.dimension_semantics<arbitrary>], iteration_bounds = array<i64: 2, 1>, scalar_prefetch = 0 : i64, scratch_operands = 1 : i64, tpu.core_type = #tpu.core_type<tc>, window_params = [{transform_indices = @transform_0, window_bounds = array<i64: 1, 4, 16, 16>}, {transform_indices = @transform_1, window_bounds = array<i64: 16, 16>}, {pipeline_mode = #tpu.pipeline_mode<synchronous>, transform_indices = @transform_2, window_bounds = array<i64: 16, 16>}, {transform_indices = @transform_3, window_bounds = array<i64: 1, 16, 16>}, {transform_indices = @transform_4, window_bounds = array<i64: 1, 1, 1>}, {transform_indices = @transform_5, window_bounds = array<i64: 1, 4, 1>}, {transform_indices = @transform_6, window_bounds = array<i64: 1, 4, 1>}]} {
    %c0_i32 = arith.constant 0 : i32
    %0 = arith.cmpi eq, %arg1, %c0_i32 : i32
    %1 = arith.extui %0 : i1 to i32
    %c0_i32_0 = arith.constant 0 : i32
    %2 = arith.cmpi ne, %1, %c0_i32_0 : i32
    scf.if %2 {
      %cst_48 = arith.constant 0.000000e+00 : f32
      %107 = vector.broadcast %cst_48 : f32 to vector<9x16xf32>
      %c0_49 = arith.constant 0 : index
      %c0_50 = arith.constant 0 : index
      %108 = vector.load %arg9[%c0_49, %c0_50] : memref<9x16xf32, #tpu.memory_space<vmem>>, vector<9x16xf32>
      tpu.vector_store %arg9[%c0_49, %c0_50], %107 {strides = array<i32>} : memref<9x16xf32, #tpu.memory_space<vmem>>, vector<9x16xf32>,
    } else {
    }
    %c0 = arith.constant 0 : index
    %c0_1 = arith.constant 0 : index
    %3 = vector.load %arg3[%c0, %c0_1] : memref<16x16xf32, #tpu.memory_space<vmem>>, vector<16x16xf32>
    %c0_2 = arith.constant 0 : index
    %c0_3 = arith.constant 0 : index
    %4 = vector.load %arg4[%c0_2, %c0_3] : memref<16x16xf32, #tpu.memory_space<vmem>>, vector<16x16xf32>
    %c0_4 = arith.constant 0 : index
    %c0_5 = arith.constant 0 : index
    %c0_6 = arith.constant 0 : index
    %5 = vector.load %arg5[%c0_4, %c0_5, %c0_6] : memref<1x16x16xi32, #tpu.memory_space<vmem>>, vector<1x16x16xi32>
    %6 = vector.shape_cast %5 : vector<1x16x16xi32> to vector<16x16xi32>
    %c0_7 = arith.constant 0 : index
    %c0_8 = arith.constant 0 : index
    %c0_9 = arith.constant 0 : index
    %c0_10 = arith.constant 0 : index
    %7 = vector.load %arg2[%c0_7, %c0_8, %c0_9, %c0_10] : memref<1x4x16x16xf32, #tpu.memory_space<vmem>>, vector<1x1x16x16xf32>
    %8 = vector.shape_cast %7 : vector<1x1x16x16xf32> to vector<16x16xf32>
    %cst = arith.constant dense<0.000000e+00> : vector<16x16xf32>
    %9 = tpu.matmul %3, %8, %cst {dimension_numbers = #tpu.dot_dimension_numbers<[1], [0], [0], [1], [0, 0, 1, 1], [], []>} : vector<16x16xf32>, vector<16x16xf32>, vector<16x16xf32> -> vector<16x16xf32>
    %cst_11 = arith.constant dense<0.000000e+00> : vector<16x16xf32>
    %10 = tpu.matmul %9, %4, %cst_11 {dimension_numbers = #tpu.dot_dimension_numbers<[1], [0], [0], [1], [0, 0, 1, 1], [], []>} : vector<16x16xf32>, vector<16x16xf32>, vector<16x16xf32> -> vector<16x16xf32>
    %c0_12 = arith.constant 0 : index
    %c1 = arith.constant 1 : index
    %c0_13 = arith.constant 0 : index
    %c0_14 = arith.constant 0 : index
    %11 = vector.load %arg2[%c0_12, %c1, %c0_13, %c0_14] : memref<1x4x16x16xf32, #tpu.memory_space<vmem>>, vector<1x1x16x16xf32>
    %12 = vector.shape_cast %11 : vector<1x1x16x16xf32> to vector<16x16xf32>
    %cst_15 = arith.constant dense<0.000000e+00> : vector<16x16xf32>
    %13 = tpu.matmul %3, %12, %cst_15 {dimension_numbers = #tpu.dot_dimension_numbers<[1], [0], [0], [1], [0, 0, 1, 1], [], []>} : vector<16x16xf32>, vector<16x16xf32>, vector<16x16xf32> -> vector<16x16xf32>
    %cst_16 = arith.constant dense<0.000000e+00> : vector<16x16xf32>
    %14 = tpu.matmul %13, %4, %cst_16 {dimension_numbers = #tpu.dot_dimension_numbers<[1], [0], [0], [1], [0, 0, 1, 1], [], []>} : vector<16x16xf32>, vector<16x16xf32>, vector<16x16xf32> -> vector<16x16xf32>
    %c0_17 = arith.constant 0 : index
    %c2 = arith.constant 2 : index
    %c0_18 = arith.constant 0 : index
    %c0_19 = arith.constant 0 : index
    %15 = vector.load %arg2[%c0_17, %c2, %c0_18, %c0_19] : memref<1x4x16x16xf32, #tpu.memory_space<vmem>>, vector<1x1x16x16xf32>
    %16 = vector.shape_cast %15 : vector<1x1x16x16xf32> to vector<16x16xf32>
    %cst_20 = arith.constant dense<0.000000e+00> : vector<16x16xf32>
    %17 = tpu.matmul %3, %16, %cst_20 {dimension_numbers = #tpu.dot_dimension_numbers<[1], [0], [0], [1], [0, 0, 1, 1], [], []>} : vector<16x16xf32>, vector<16x16xf32>, vector<16x16xf32> -> vector<16x16xf32>
    %cst_21 = arith.constant dense<0.000000e+00> : vector<16x16xf32>
    %18 = tpu.matmul %17, %4, %cst_21 {dimension_numbers = #tpu.dot_dimension_numbers<[1], [0], [0], [1], [0, 0, 1, 1], [], []>} : vector<16x16xf32>, vector<16x16xf32>, vector<16x16xf32> -> vector<16x16xf32>
    %c0_22 = arith.constant 0 : index
    %c3 = arith.constant 3 : index
    %c0_23 = arith.constant 0 : index
    %c0_24 = arith.constant 0 : index
    %19 = vector.load %arg2[%c0_22, %c3, %c0_23, %c0_24] : memref<1x4x16x16xf32, #tpu.memory_space<vmem>>, vector<1x1x16x16xf32>
    %20 = vector.shape_cast %19 : vector<1x1x16x16xf32> to vector<16x16xf32>
    %cst_25 = arith.constant dense<0.000000e+00> : vector<16x16xf32>
    %21 = tpu.matmul %3, %20, %cst_25 {dimension_numbers = #tpu.dot_dimension_numbers<[1], [0], [0], [1], [0, 0, 1, 1], [], []>} : vector<16x16xf32>, vector<16x16xf32>, vector<16x16xf32> -> vector<16x16xf32>
    %cst_26 = arith.constant dense<0.000000e+00> : vector<16x16xf32>
    %22 = tpu.matmul %21, %4, %cst_26 {dimension_numbers = #tpu.dot_dimension_numbers<[1], [0], [0], [1], [0, 0, 1, 1], [], []>} : vector<16x16xf32>, vector<16x16xf32>, vector<16x16xf32> -> vector<16x16xf32>
    %23 = arith.maximumf %10, %14 : vector<16x16xf32>
    %24 = arith.maximumf %23, %18 : vector<16x16xf32>
    %25 = arith.maximumf %24, %22 : vector<16x16xf32>
    %26 = arith.subf %10, %25 : vector<16x16xf32>
    %27 = math.exp %26 : vector<16x16xf32>
    %28 = arith.subf %14, %25 : vector<16x16xf32>
    %29 = math.exp %28 : vector<16x16xf32>
    %30 = arith.subf %18, %25 : vector<16x16xf32>
    %31 = math.exp %30 : vector<16x16xf32>
    %32 = arith.subf %22, %25 : vector<16x16xf32>
    %33 = math.exp %32 : vector<16x16xf32>
    %34 = arith.addf %27, %29 : vector<16x16xf32>
    %35 = arith.addf %34, %31 : vector<16x16xf32>
    %36 = arith.addf %35, %33 : vector<16x16xf32>
    %37 = tpu.reciprocal %36 {approx = true} : vector<16x16xf32> -> vector<16x16xf32>
    %38 = math.log %36 : vector<16x16xf32>
    %cst_27 = arith.constant 0.000000e+00 : f32
    %39 = vector.broadcast %cst_27 : f32 to vector<16x16xf32>
    %c0_i32_28 = arith.constant 0 : i32
    %40 = vector.broadcast %c0_i32_28 : i32 to vector<16x16xi32>
    %41 = arith.cmpi eq, %6, %40 : vector<16x16xi32>
    %42 = arith.select %41, %10, %39 : vector<16x16xi1>, vector<16x16xf32>
    %c1_i32 = arith.constant 1 : i32
    %43 = vector.broadcast %c1_i32 : i32 to vector<16x16xi32>
    %44 = arith.cmpi eq, %6, %43 : vector<16x16xi32>
    %45 = arith.select %44, %14, %42 : vector<16x16xi1>, vector<16x16xf32>
    %c2_i32 = arith.constant 2 : i32
    %46 = vector.broadcast %c2_i32 : i32 to vector<16x16xi32>
    %47 = arith.cmpi eq, %6, %46 : vector<16x16xi32>
    %48 = arith.select %47, %18, %45 : vector<16x16xi1>, vector<16x16xf32>
    %c3_i32 = arith.constant 3 : i32
    %49 = vector.broadcast %c3_i32 : i32 to vector<16x16xi32>
    %50 = arith.cmpi eq, %6, %49 : vector<16x16xi32>
    %51 = arith.select %50, %22, %48 : vector<16x16xi1>, vector<16x16xf32>
    %52 = arith.addf %38, %25 : vector<16x16xf32>
    %53 = arith.subf %52, %51 : vector<16x16xf32>
    %54 = arith.mulf %27, %37 : vector<16x16xf32>
    %55 = arith.mulf %29, %37 : vector<16x16xf32>
    %56 = arith.mulf %31, %37 : vector<16x16xf32>
    %57 = arith.mulf %33, %37 : vector<16x16xf32>
    %cst_29 = arith.constant dense<0.000000e+00> : vector<16xf32>
    %58 = vector.multi_reduction <add>, %53, %cst_29 [0] : vector<16x16xf32> to vector<16xf32>
    %59 = vector.shape_cast %58 : vector<16xf32> to vector<1x16xf32>
    %c0_i32_30 = arith.constant 0 : i32
    %60 = vector.broadcast %c0_i32_30 : i32 to vector<16x16xi32>
    %61 = arith.cmpi eq, %6, %60 : vector<16x16xi32>
    %62 = arith.extui %61 : vector<16x16xi1> to vector<16x16xi32>
    %63 = arith.sitofp %62 : vector<16x16xi32> to vector<16x16xf32>
    %64 = arith.mulf %54, %63 : vector<16x16xf32>
    %cst_31 = arith.constant dense<0.000000e+00> : vector<16xf32>
    %65 = vector.multi_reduction <add>, %64, %cst_31 [0] : vector<16x16xf32> to vector<16xf32>
    %66 = vector.shape_cast %65 : vector<16xf32> to vector<1x16xf32>
    %c1_i32_32 = arith.constant 1 : i32
    %67 = vector.broadcast %c1_i32_32 : i32 to vector<16x16xi32>
    %68 = arith.cmpi eq, %6, %67 : vector<16x16xi32>
    %69 = arith.extui %68 : vector<16x16xi1> to vector<16x16xi32>
    %70 = arith.sitofp %69 : vector<16x16xi32> to vector<16x16xf32>
    %71 = arith.mulf %55, %70 : vector<16x16xf32>
    %cst_33 = arith.constant dense<0.000000e+00> : vector<16xf32>
    %72 = vector.multi_reduction <add>, %71, %cst_33 [0] : vector<16x16xf32> to vector<16xf32>
    %73 = vector.shape_cast %72 : vector<16xf32> to vector<1x16xf32>
    %c2_i32_34 = arith.constant 2 : i32
    %74 = vector.broadcast %c2_i32_34 : i32 to vector<16x16xi32>
    %75 = arith.cmpi eq, %6, %74 : vector<16x16xi32>
    %76 = arith.extui %75 : vector<16x16xi1> to vector<16x16xi32>
    %77 = arith.sitofp %76 : vector<16x16xi32> to vector<16x16xf32>
    %78 = arith.mulf %56, %77 : vector<16x16xf32>
    %cst_35 = arith.constant dense<0.000000e+00> : vector<16xf32>
    %79 = vector.multi_reduction <add>, %78, %cst_35 [0] : vector<16x16xf32> to vector<16xf32>
    %80 = vector.shape_cast %79 : vector<16xf32> to vector<1x16xf32>
    %c3_i32_36 = arith.constant 3 : i32
    %81 = vector.broadcast %c3_i32_36 : i32 to vector<16x16xi32>
    %82 = arith.cmpi eq, %6, %81 : vector<16x16xi32>
    %83 = arith.extui %82 : vector<16x16xi1> to vector<16x16xi32>
    %84 = arith.sitofp %83 : vector<16x16xi32> to vector<16x16xf32>
    %85 = arith.mulf %57, %84 : vector<16x16xf32>
    %cst_37 = arith.constant dense<0.000000e+00> : vector<16xf32>
    %86 = vector.multi_reduction <add>, %85, %cst_37 [0] : vector<16x16xf32> to vector<16xf32>
    %87 = vector.shape_cast %86 : vector<16xf32> to vector<1x16xf32>
    %88 = arith.mulf %54, %54 : vector<16x16xf32>
    %cst_38 = arith.constant dense<0.000000e+00> : vector<16xf32>
    %89 = vector.multi_reduction <add>, %88, %cst_38 [0] : vector<16x16xf32> to vector<16xf32>
    %90 = vector.shape_cast %89 : vector<16xf32> to vector<1x16xf32>
    %91 = arith.mulf %55, %55 : vector<16x16xf32>
    %cst_39 = arith.constant dense<0.000000e+00> : vector<16xf32>
    %92 = vector.multi_reduction <add>, %91, %cst_39 [0] : vector<16x16xf32> to vector<16xf32>
    %93 = vector.shape_cast %92 : vector<16xf32> to vector<1x16xf32>
    %94 = arith.mulf %56, %56 : vector<16x16xf32>
    %cst_40 = arith.constant dense<0.000000e+00> : vector<16xf32>
    %95 = vector.multi_reduction <add>, %94, %cst_40 [0] : vector<16x16xf32> to vector<16xf32>
    %96 = vector.shape_cast %95 : vector<16xf32> to vector<1x16xf32>
    %97 = arith.mulf %57, %57 : vector<16x16xf32>
    %cst_41 = arith.constant dense<0.000000e+00> : vector<16xf32>
    %98 = vector.multi_reduction <add>, %97, %cst_41 [0] : vector<16x16xf32> to vector<16xf32>
    %99 = vector.shape_cast %98 : vector<16xf32> to vector<1x16xf32>
    %c0_42 = arith.constant 0 : index
    %c0_43 = arith.constant 0 : index
    %100 = vector.load %arg9[%c0_42, %c0_43] : memref<9x16xf32, #tpu.memory_space<vmem>>, vector<9x16xf32>
    %101 = tpu.concatenate %59, %66, %73, %80, %87, %90, %93, %96, %99 in 0 : vector<1x16xf32>, vector<1x16xf32>, vector<1x16xf32>, vector<1x16xf32>, vector<1x16xf32>, vector<1x16xf32>, vector<1x16xf32>, vector<1x16xf32>, vector<1x16xf32> -> vector<9x16xf32>
    %102 = arith.addf %100, %101 : vector<9x16xf32>
    %c0_44 = arith.constant 0 : index
    %c0_45 = arith.constant 0 : index
    %103 = vector.load %arg9[%c0_44, %c0_45] : memref<9x16xf32, #tpu.memory_space<vmem>>, vector<9x16xf32>
    tpu.vector_store %arg9[%c0_44, %c0_45], %102 {strides = array<i32>} : memref<9x16xf32, #tpu.memory_space<vmem>>, vector<9x16xf32>,
    %c0_i32_46 = arith.constant 0 : i32
    %104 = arith.cmpi eq, %arg1, %c0_i32_46 : i32
    %105 = arith.extui %104 : i1 to i32
    %c0_i32_47 = arith.constant 0 : i32
    %106 = arith.cmpi ne, %105, %c0_i32_47 : i32
    scf.if %106 {
      %c0_48 = arith.constant 0 : index
      %c0_49 = arith.constant 0 : index
      %107 = vector.load %arg9[%c0_48, %c0_49] : memref<9x16xf32, #tpu.memory_space<vmem>>, vector<9x16xf32>
      %cst_50 = arith.constant dense<0.000000e+00> : vector<9xf32>
      %108 = vector.multi_reduction <add>, %107, %cst_50 [1] : vector<9x16xf32> to vector<9xf32>
      %109 = vector.shape_cast %108 : vector<9xf32> to vector<9x1xf32>
      %110 = vector.extract_strided_slice %109 {offsets = [0, 0], sizes = [1, 1], strides = [1, 1]} : vector<9x1xf32> to vector<1x1xf32>
      %c0_51 = arith.constant 0 : index
      %c0_52 = arith.constant 0 : index
      %c0_53 = arith.constant 0 : index
      %111 = vector.load %arg6[%c0_51, %c0_52, %c0_53] : memref<1x1x1xf32, #tpu.memory_space<vmem>>, vector<1x1x1xf32>
      %112 = vector.shape_cast %111 : vector<1x1x1xf32> to vector<1x1xf32>
      %113 = vector.shape_cast %110 : vector<1x1xf32> to vector<1x1x1xf32>
      tpu.vector_store %arg6[%c0_51, %c0_52, %c0_53], %113 {strides = array<i32>} : memref<1x1x1xf32, #tpu.memory_space<vmem>>, vector<1x1x1xf32>,
      %114 = vector.extract_strided_slice %109 {offsets = [1, 0], sizes = [4, 1], strides = [1, 1]} : vector<9x1xf32> to vector<4x1xf32>
      %c0_54 = arith.constant 0 : index
      %c0_55 = arith.constant 0 : index
      %c0_56 = arith.constant 0 : index
      %115 = vector.load %arg7[%c0_54, %c0_55, %c0_56] : memref<1x4x1xf32, #tpu.memory_space<vmem>>, vector<1x4x1xf32>
      %116 = vector.shape_cast %115 : vector<1x4x1xf32> to vector<4x1xf32>
      %117 = vector.shape_cast %114 : vector<4x1xf32> to vector<1x4x1xf32>
      tpu.vector_store %arg7[%c0_54, %c0_55, %c0_56], %117 {strides = array<i32>} : memref<1x4x1xf32, #tpu.memory_space<vmem>>, vector<1x4x1xf32>,
      %118 = vector.extract_strided_slice %109 {offsets = [5, 0], sizes = [4, 1], strides = [1, 1]} : vector<9x1xf32> to vector<4x1xf32>
      %c0_57 = arith.constant 0 : index
      %c0_58 = arith.constant 0 : index
      %c0_59 = arith.constant 0 : index
      %119 = vector.load %arg8[%c0_57, %c0_58, %c0_59] : memref<1x4x1xf32, #tpu.memory_space<vmem>>, vector<1x4x1xf32>
      %120 = vector.shape_cast %119 : vector<1x4x1xf32> to vector<4x1xf32>
      %121 = vector.shape_cast %118 : vector<4x1xf32> to vector<1x4x1xf32>
      tpu.vector_store %arg8[%c0_57, %c0_58, %c0_59], %121 {strides = array<i32>} : memref<1x4x1xf32, #tpu.memory_space<vmem>>, vector<1x4x1xf32>,
    } else {
    }
    return
  }
  func.func @transform_0(%arg0: i32, %arg1: i32) -> (i32, i32, i32, i32) {
    %c0_i32 = arith.constant 0 : i32
    %c0_i32_0 = arith.constant 0 : i32
    %c0_i32_1 = arith.constant 0 : i32
    %c0_i32_2 = arith.constant 0 : i32
    return %arg0, %c0_i32, %c0_i32_0, %c0_i32_1 : i32, i32, i32, i32
  }
  func.func @transform_1(%arg0: i32, %arg1: i32) -> (i32, i32) {
    %c0_i32 = arith.constant 0 : i32
    %c0_i32_0 = arith.constant 0 : i32
    return %arg1, %c0_i32 : i32, i32
  }
  func.func @transform_2(%arg0: i32, %arg1: i32) -> (i32, i32) {
    %c0_i32 = arith.constant 0 : i32
    %c0_i32_0 = arith.constant 0 : i32
    %c0_i32_1 = arith.constant 0 : i32
    return %c0_i32, %c0_i32_0 : i32, i32
  }
  func.func @transform_3(%arg0: i32, %arg1: i32) -> (i32, i32, i32) {
    %c0_i32 = arith.constant 0 : i32
    %c0_i32_0 = arith.constant 0 : i32
    return %arg0, %arg1, %c0_i32 : i32, i32, i32
  }
  func.func @transform_4(%arg0: i32, %arg1: i32) -> (i32, i32, i32) {
    %c0_i32 = arith.constant 0 : i32
    %c0_i32_0 = arith.constant 0 : i32
    %c0_i32_1 = arith.constant 0 : i32
    return %arg0, %c0_i32, %c0_i32_0 : i32, i32, i32
  }
  func.func @transform_5(%arg0: i32, %arg1: i32) -> (i32, i32, i32) {
    %c0_i32 = arith.constant 0 : i32
    %c0_i32_0 = arith.constant 0 : i32
    %c0_i32_1 = arith.constant 0 : i32
    return %arg0, %c0_i32, %c0_i32_0 : i32, i32, i32
  }
  func.func @transform_6(%arg0: i32, %arg1: i32) -> (i32, i32, i32) {
    %c0_i32 = arith.constant 0 : i32
    %c0_i32_0 = arith.constant 0 : i32
    %c0_i32_1 = arith.constant 0 : i32
    return %arg0, %c0_i32, %c0_i32_0 : i32, i32, i32
  }
}

module attributes {stable_mosaic.version = 11 : i64} {
  func.func @_aux_stats_kernel(%arg0: i32, %arg1: i32, %arg2: memref<1x4x8x8xf32, #tpu.memory_space<vmem>>, %arg3: memref<16x8xf32, #tpu.memory_space<vmem>>, %arg4: memref<8x16xf32, #tpu.memory_space<vmem>>, %arg5: memref<1x16x16xi32, #tpu.memory_space<vmem>>, %arg6: memref<1x1x1xf32, #tpu.memory_space<vmem>>, %arg7: memref<1x4x1xf32, #tpu.memory_space<vmem>>, %arg8: memref<1x4x1xf32, #tpu.memory_space<vmem>>, %arg9: memref<9x16xf32, #tpu.memory_space<vmem>>) attributes {dimension_semantics = [#tpu.dimension_semantics<parallel>, #tpu.dimension_semantics<arbitrary>], iteration_bounds = array<i64: 2, 1>, scalar_prefetch = 0 : i64, scratch_operands = 1 : i64, tpu.core_type = #tpu.core_type<tc>, window_params = [{transform_indices = @transform_0, window_bounds = array<i64: 1, 4, 8, 8>}, {transform_indices = @transform_1, window_bounds = array<i64: 16, 8>}, {pipeline_mode = #tpu.pipeline_mode<synchronous>, transform_indices = @transform_2, window_bounds = array<i64: 8, 16>}, {transform_indices = @transform_3, window_bounds = array<i64: 1, 16, 16>}, {transform_indices = @transform_4, window_bounds = array<i64: 1, 1, 1>}, {transform_indices = @transform_5, window_bounds = array<i64: 1, 4, 1>}, {transform_indices = @transform_6, window_bounds = array<i64: 1, 4, 1>}]} {
    %c0_i32 = arith.constant 0 : i32
    %0 = arith.cmpi eq, %arg1, %c0_i32 : i32
    %1 = arith.extui %0 : i1 to i32
    %c0_i32_0 = arith.constant 0 : i32
    %2 = arith.cmpi ne, %1, %c0_i32_0 : i32
    scf.if %2 {
      %cst_48 = arith.constant 0.000000e+00 : f32
      %107 = vector.broadcast %cst_48 : f32 to vector<9x16xf32>
      %c0_49 = arith.constant 0 : index
      %c0_50 = arith.constant 0 : index
      %108 = vector.load %arg9[%c0_49, %c0_50] : memref<9x16xf32, #tpu.memory_space<vmem>>, vector<9x16xf32>
      tpu.vector_store %arg9[%c0_49, %c0_50], %107 {strides = array<i32>} : memref<9x16xf32, #tpu.memory_space<vmem>>, vector<9x16xf32>,
    } else {
    }
    %c0 = arith.constant 0 : index
    %c0_1 = arith.constant 0 : index
    %3 = vector.load %arg3[%c0, %c0_1] : memref<16x8xf32, #tpu.memory_space<vmem>>, vector<16x8xf32>
    %c0_2 = arith.constant 0 : index
    %c0_3 = arith.constant 0 : index
    %4 = vector.load %arg4[%c0_2, %c0_3] : memref<8x16xf32, #tpu.memory_space<vmem>>, vector<8x16xf32>
    %c0_4 = arith.constant 0 : index
    %c0_5 = arith.constant 0 : index
    %c0_6 = arith.constant 0 : index
    %5 = vector.load %arg5[%c0_4, %c0_5, %c0_6] : memref<1x16x16xi32, #tpu.memory_space<vmem>>, vector<1x16x16xi32>
    %6 = vector.shape_cast %5 : vector<1x16x16xi32> to vector<16x16xi32>
    %c0_7 = arith.constant 0 : index
    %c0_8 = arith.constant 0 : index
    %c0_9 = arith.constant 0 : index
    %c0_10 = arith.constant 0 : index
    %7 = vector.load %arg2[%c0_7, %c0_8, %c0_9, %c0_10] : memref<1x4x8x8xf32, #tpu.memory_space<vmem>>, vector<1x1x8x8xf32>
    %8 = vector.shape_cast %7 : vector<1x1x8x8xf32> to vector<8x8xf32>
    %cst = arith.constant dense<0.000000e+00> : vector<16x8xf32>
    %9 = tpu.matmul %3, %8, %cst {dimension_numbers = #tpu.dot_dimension_numbers<[1], [0], [0], [1], [0, 0, 1, 1], [], []>} : vector<16x8xf32>, vector<8x8xf32>, vector<16x8xf32> -> vector<16x8xf32>
    %cst_11 = arith.constant dense<0.000000e+00> : vector<16x16xf32>
    %10 = tpu.matmul %9, %4, %cst_11 {dimension_numbers = #tpu.dot_dimension_numbers<[1], [0], [0], [1], [0, 0, 1, 1], [], []>} : vector<16x8xf32>, vector<8x16xf32>, vector<16x16xf32> -> vector<16x16xf32>
    %c0_12 = arith.constant 0 : index
    %c1 = arith.constant 1 : index
    %c0_13 = arith.constant 0 : index
    %c0_14 = arith.constant 0 : index
    %11 = vector.load %arg2[%c0_12, %c1, %c0_13, %c0_14] : memref<1x4x8x8xf32, #tpu.memory_space<vmem>>, vector<1x1x8x8xf32>
    %12 = vector.shape_cast %11 : vector<1x1x8x8xf32> to vector<8x8xf32>
    %cst_15 = arith.constant dense<0.000000e+00> : vector<16x8xf32>
    %13 = tpu.matmul %3, %12, %cst_15 {dimension_numbers = #tpu.dot_dimension_numbers<[1], [0], [0], [1], [0, 0, 1, 1], [], []>} : vector<16x8xf32>, vector<8x8xf32>, vector<16x8xf32> -> vector<16x8xf32>
    %cst_16 = arith.constant dense<0.000000e+00> : vector<16x16xf32>
    %14 = tpu.matmul %13, %4, %cst_16 {dimension_numbers = #tpu.dot_dimension_numbers<[1], [0], [0], [1], [0, 0, 1, 1], [], []>} : vector<16x8xf32>, vector<8x16xf32>, vector<16x16xf32> -> vector<16x16xf32>
    %c0_17 = arith.constant 0 : index
    %c2 = arith.constant 2 : index
    %c0_18 = arith.constant 0 : index
    %c0_19 = arith.constant 0 : index
    %15 = vector.load %arg2[%c0_17, %c2, %c0_18, %c0_19] : memref<1x4x8x8xf32, #tpu.memory_space<vmem>>, vector<1x1x8x8xf32>
    %16 = vector.shape_cast %15 : vector<1x1x8x8xf32> to vector<8x8xf32>
    %cst_20 = arith.constant dense<0.000000e+00> : vector<16x8xf32>
    %17 = tpu.matmul %3, %16, %cst_20 {dimension_numbers = #tpu.dot_dimension_numbers<[1], [0], [0], [1], [0, 0, 1, 1], [], []>} : vector<16x8xf32>, vector<8x8xf32>, vector<16x8xf32> -> vector<16x8xf32>
    %cst_21 = arith.constant dense<0.000000e+00> : vector<16x16xf32>
    %18 = tpu.matmul %17, %4, %cst_21 {dimension_numbers = #tpu.dot_dimension_numbers<[1], [0], [0], [1], [0, 0, 1, 1], [], []>} : vector<16x8xf32>, vector<8x16xf32>, vector<16x16xf32> -> vector<16x16xf32>
    %c0_22 = arith.constant 0 : index
    %c3 = arith.constant 3 : index
    %c0_23 = arith.constant 0 : index
    %c0_24 = arith.constant 0 : index
    %19 = vector.load %arg2[%c0_22, %c3, %c0_23, %c0_24] : memref<1x4x8x8xf32, #tpu.memory_space<vmem>>, vector<1x1x8x8xf32>
    %20 = vector.shape_cast %19 : vector<1x1x8x8xf32> to vector<8x8xf32>
    %cst_25 = arith.constant dense<0.000000e+00> : vector<16x8xf32>
    %21 = tpu.matmul %3, %20, %cst_25 {dimension_numbers = #tpu.dot_dimension_numbers<[1], [0], [0], [1], [0, 0, 1, 1], [], []>} : vector<16x8xf32>, vector<8x8xf32>, vector<16x8xf32> -> vector<16x8xf32>
    %cst_26 = arith.constant dense<0.000000e+00> : vector<16x16xf32>
    %22 = tpu.matmul %21, %4, %cst_26 {dimension_numbers = #tpu.dot_dimension_numbers<[1], [0], [0], [1], [0, 0, 1, 1], [], []>} : vector<16x8xf32>, vector<8x16xf32>, vector<16x16xf32> -> vector<16x16xf32>
    %23 = arith.maximumf %10, %14 : vector<16x16xf32>
    %24 = arith.maximumf %23, %18 : vector<16x16xf32>
    %25 = arith.maximumf %24, %22 : vector<16x16xf32>
    %26 = arith.subf %10, %25 : vector<16x16xf32>
    %27 = math.exp %26 : vector<16x16xf32>
    %28 = arith.subf %14, %25 : vector<16x16xf32>
    %29 = math.exp %28 : vector<16x16xf32>
    %30 = arith.subf %18, %25 : vector<16x16xf32>
    %31 = math.exp %30 : vector<16x16xf32>
    %32 = arith.subf %22, %25 : vector<16x16xf32>
    %33 = math.exp %32 : vector<16x16xf32>
    %34 = arith.addf %27, %29 : vector<16x16xf32>
    %35 = arith.addf %34, %31 : vector<16x16xf32>
    %36 = arith.addf %35, %33 : vector<16x16xf32>
    %37 = tpu.reciprocal %36 {approx = true} : vector<16x16xf32> -> vector<16x16xf32>
    %38 = math.log %36 : vector<16x16xf32>
    %cst_27 = arith.constant 0.000000e+00 : f32
    %39 = vector.broadcast %cst_27 : f32 to vector<16x16xf32>
    %c0_i32_28 = arith.constant 0 : i32
    %40 = vector.broadcast %c0_i32_28 : i32 to vector<16x16xi32>
    %41 = arith.cmpi eq, %6, %40 : vector<16x16xi32>
    %42 = arith.select %41, %10, %39 : vector<16x16xi1>, vector<16x16xf32>
    %c1_i32 = arith.constant 1 : i32
    %43 = vector.broadcast %c1_i32 : i32 to vector<16x16xi32>
    %44 = arith.cmpi eq, %6, %43 : vector<16x16xi32>
    %45 = arith.select %44, %14, %42 : vector<16x16xi1>, vector<16x16xf32>
    %c2_i32 = arith.constant 2 : i32
    %46 = vector.broadcast %c2_i32 : i32 to vector<16x16xi32>
    %47 = arith.cmpi eq, %6, %46 : vector<16x16xi32>
    %48 = arith.select %47, %18, %45 : vector<16x16xi1>, vector<16x16xf32>
    %c3_i32 = arith.constant 3 : i32
    %49 = vector.broadcast %c3_i32 : i32 to vector<16x16xi32>
    %50 = arith.cmpi eq, %6, %49 : vector<16x16xi32>
    %51 = arith.select %50, %22, %48 : vector<16x16xi1>, vector<16x16xf32>
    %52 = arith.addf %38, %25 : vector<16x16xf32>
    %53 = arith.subf %52, %51 : vector<16x16xf32>
    %54 = arith.mulf %27, %37 : vector<16x16xf32>
    %55 = arith.mulf %29, %37 : vector<16x16xf32>
    %56 = arith.mulf %31, %37 : vector<16x16xf32>
    %57 = arith.mulf %33, %37 : vector<16x16xf32>
    %cst_29 = arith.constant dense<0.000000e+00> : vector<16xf32>
    %58 = vector.multi_reduction <add>, %53, %cst_29 [0] : vector<16x16xf32> to vector<16xf32>
    %59 = vector.shape_cast %58 : vector<16xf32> to vector<1x16xf32>
    %c0_i32_30 = arith.constant 0 : i32
    %60 = vector.broadcast %c0_i32_30 : i32 to vector<16x16xi32>
    %61 = arith.cmpi eq, %6, %60 : vector<16x16xi32>
    %62 = arith.extui %61 : vector<16x16xi1> to vector<16x16xi32>
    %63 = arith.sitofp %62 : vector<16x16xi32> to vector<16x16xf32>
    %64 = arith.mulf %54, %63 : vector<16x16xf32>
    %cst_31 = arith.constant dense<0.000000e+00> : vector<16xf32>
    %65 = vector.multi_reduction <add>, %64, %cst_31 [0] : vector<16x16xf32> to vector<16xf32>
    %66 = vector.shape_cast %65 : vector<16xf32> to vector<1x16xf32>
    %c1_i32_32 = arith.constant 1 : i32
    %67 = vector.broadcast %c1_i32_32 : i32 to vector<16x16xi32>
    %68 = arith.cmpi eq, %6, %67 : vector<16x16xi32>
    %69 = arith.extui %68 : vector<16x16xi1> to vector<16x16xi32>
    %70 = arith.sitofp %69 : vector<16x16xi32> to vector<16x16xf32>
    %71 = arith.mulf %55, %70 : vector<16x16xf32>
    %cst_33 = arith.constant dense<0.000000e+00> : vector<16xf32>
    %72 = vector.multi_reduction <add>, %71, %cst_33 [0] : vector<16x16xf32> to vector<16xf32>
    %73 = vector.shape_cast %72 : vector<16xf32> to vector<1x16xf32>
    %c2_i32_34 = arith.constant 2 : i32
    %74 = vector.broadcast %c2_i32_34 : i32 to vector<16x16xi32>
    %75 = arith.cmpi eq, %6, %74 : vector<16x16xi32>
    %76 = arith.extui %75 : vector<16x16xi1> to vector<16x16xi32>
    %77 = arith.sitofp %76 : vector<16x16xi32> to vector<16x16xf32>
    %78 = arith.mulf %56, %77 : vector<16x16xf32>
    %cst_35 = arith.constant dense<0.000000e+00> : vector<16xf32>
    %79 = vector.multi_reduction <add>, %78, %cst_35 [0] : vector<16x16xf32> to vector<16xf32>
    %80 = vector.shape_cast %79 : vector<16xf32> to vector<1x16xf32>
    %c3_i32_36 = arith.constant 3 : i32
    %81 = vector.broadcast %c3_i32_36 : i32 to vector<16x16xi32>
    %82 = arith.cmpi eq, %6, %81 : vector<16x16xi32>
    %83 = arith.extui %82 : vector<16x16xi1> to vector<16x16xi32>
    %84 = arith.sitofp %83 : vector<16x16xi32> to vector<16x16xf32>
    %85 = arith.mulf %57, %84 : vector<16x16xf32>
    %cst_37 = arith.constant dense<0.000000e+00> : vector<16xf32>
    %86 = vector.multi_reduction <add>, %85, %cst_37 [0] : vector<16x16xf32> to vector<16xf32>
    %87 = vector.shape_cast %86 : vector<16xf32> to vector<1x16xf32>
    %88 = arith.mulf %54, %54 : vector<16x16xf32>
    %cst_38 = arith.constant dense<0.000000e+00> : vector<16xf32>
    %89 = vector.multi_reduction <add>, %88, %cst_38 [0] : vector<16x16xf32> to vector<16xf32>
    %90 = vector.shape_cast %89 : vector<16xf32> to vector<1x16xf32>
    %91 = arith.mulf %55, %55 : vector<16x16xf32>
    %cst_39 = arith.constant dense<0.000000e+00> : vector<16xf32>
    %92 = vector.multi_reduction <add>, %91, %cst_39 [0] : vector<16x16xf32> to vector<16xf32>
    %93 = vector.shape_cast %92 : vector<16xf32> to vector<1x16xf32>
    %94 = arith.mulf %56, %56 : vector<16x16xf32>
    %cst_40 = arith.constant dense<0.000000e+00> : vector<16xf32>
    %95 = vector.multi_reduction <add>, %94, %cst_40 [0] : vector<16x16xf32> to vector<16xf32>
    %96 = vector.shape_cast %95 : vector<16xf32> to vector<1x16xf32>
    %97 = arith.mulf %57, %57 : vector<16x16xf32>
    %cst_41 = arith.constant dense<0.000000e+00> : vector<16xf32>
    %98 = vector.multi_reduction <add>, %97, %cst_41 [0] : vector<16x16xf32> to vector<16xf32>
    %99 = vector.shape_cast %98 : vector<16xf32> to vector<1x16xf32>
    %c0_42 = arith.constant 0 : index
    %c0_43 = arith.constant 0 : index
    %100 = vector.load %arg9[%c0_42, %c0_43] : memref<9x16xf32, #tpu.memory_space<vmem>>, vector<9x16xf32>
    %101 = tpu.concatenate %59, %66, %73, %80, %87, %90, %93, %96, %99 in 0 : vector<1x16xf32>, vector<1x16xf32>, vector<1x16xf32>, vector<1x16xf32>, vector<1x16xf32>, vector<1x16xf32>, vector<1x16xf32>, vector<1x16xf32>, vector<1x16xf32> -> vector<9x16xf32>
    %102 = arith.addf %100, %101 : vector<9x16xf32>
    %c0_44 = arith.constant 0 : index
    %c0_45 = arith.constant 0 : index
    %103 = vector.load %arg9[%c0_44, %c0_45] : memref<9x16xf32, #tpu.memory_space<vmem>>, vector<9x16xf32>
    tpu.vector_store %arg9[%c0_44, %c0_45], %102 {strides = array<i32>} : memref<9x16xf32, #tpu.memory_space<vmem>>, vector<9x16xf32>,
    %c0_i32_46 = arith.constant 0 : i32
    %104 = arith.cmpi eq, %arg1, %c0_i32_46 : i32
    %105 = arith.extui %104 : i1 to i32
    %c0_i32_47 = arith.constant 0 : i32
    %106 = arith.cmpi ne, %105, %c0_i32_47 : i32
    scf.if %106 {
      %c0_48 = arith.constant 0 : index
      %c0_49 = arith.constant 0 : index
      %107 = vector.load %arg9[%c0_48, %c0_49] : memref<9x16xf32, #tpu.memory_space<vmem>>, vector<9x16xf32>
      %cst_50 = arith.constant dense<0.000000e+00> : vector<9xf32>
      %108 = vector.multi_reduction <add>, %107, %cst_50 [1] : vector<9x16xf32> to vector<9xf32>
      %109 = vector.shape_cast %108 : vector<9xf32> to vector<9x1xf32>
      %110 = vector.extract_strided_slice %109 {offsets = [0, 0], sizes = [1, 1], strides = [1, 1]} : vector<9x1xf32> to vector<1x1xf32>
      %c0_51 = arith.constant 0 : index
      %c0_52 = arith.constant 0 : index
      %c0_53 = arith.constant 0 : index
      %111 = vector.load %arg6[%c0_51, %c0_52, %c0_53] : memref<1x1x1xf32, #tpu.memory_space<vmem>>, vector<1x1x1xf32>
      %112 = vector.shape_cast %111 : vector<1x1x1xf32> to vector<1x1xf32>
      %113 = vector.shape_cast %110 : vector<1x1xf32> to vector<1x1x1xf32>
      tpu.vector_store %arg6[%c0_51, %c0_52, %c0_53], %113 {strides = array<i32>} : memref<1x1x1xf32, #tpu.memory_space<vmem>>, vector<1x1x1xf32>,
      %114 = vector.extract_strided_slice %109 {offsets = [1, 0], sizes = [4, 1], strides = [1, 1]} : vector<9x1xf32> to vector<4x1xf32>
      %c0_54 = arith.constant 0 : index
      %c0_55 = arith.constant 0 : index
      %c0_56 = arith.constant 0 : index
      %115 = vector.load %arg7[%c0_54, %c0_55, %c0_56] : memref<1x4x1xf32, #tpu.memory_space<vmem>>, vector<1x4x1xf32>
      %116 = vector.shape_cast %115 : vector<1x4x1xf32> to vector<4x1xf32>
      %117 = vector.shape_cast %114 : vector<4x1xf32> to vector<1x4x1xf32>
      tpu.vector_store %arg7[%c0_54, %c0_55, %c0_56], %117 {strides = array<i32>} : memref<1x4x1xf32, #tpu.memory_space<vmem>>, vector<1x4x1xf32>,
      %118 = vector.extract_strided_slice %109 {offsets = [5, 0], sizes = [4, 1], strides = [1, 1]} : vector<9x1xf32> to vector<4x1xf32>
      %c0_57 = arith.constant 0 : index
      %c0_58 = arith.constant 0 : index
      %c0_59 = arith.constant 0 : index
      %119 = vector.load %arg8[%c0_57, %c0_58, %c0_59] : memref<1x4x1xf32, #tpu.memory_space<vmem>>, vector<1x4x1xf32>
      %120 = vector.shape_cast %119 : vector<1x4x1xf32> to vector<4x1xf32>
      %121 = vector.shape_cast %118 : vector<4x1xf32> to vector<1x4x1xf32>
      tpu.vector_store %arg8[%c0_57, %c0_58, %c0_59], %121 {strides = array<i32>} : memref<1x4x1xf32, #tpu.memory_space<vmem>>, vector<1x4x1xf32>,
    } else {
    }
    return
  }
  func.func @transform_0(%arg0: i32, %arg1: i32) -> (i32, i32, i32, i32) {
    %c0_i32 = arith.constant 0 : i32
    %c0_i32_0 = arith.constant 0 : i32
    %c0_i32_1 = arith.constant 0 : i32
    %c0_i32_2 = arith.constant 0 : i32
    return %arg0, %c0_i32, %c0_i32_0, %c0_i32_1 : i32, i32, i32, i32
  }
  func.func @transform_1(%arg0: i32, %arg1: i32) -> (i32, i32) {
    %c0_i32 = arith.constant 0 : i32
    %c0_i32_0 = arith.constant 0 : i32
    return %arg1, %c0_i32 : i32, i32
  }
  func.func @transform_2(%arg0: i32, %arg1: i32) -> (i32, i32) {
    %c0_i32 = arith.constant 0 : i32
    %c0_i32_0 = arith.constant 0 : i32
    %c0_i32_1 = arith.constant 0 : i32
    return %c0_i32, %c0_i32_0 : i32, i32
  }
  func.func @transform_3(%arg0: i32, %arg1: i32) -> (i32, i32, i32) {
    %c0_i32 = arith.constant 0 : i32
    %c0_i32_0 = arith.constant 0 : i32
    return %arg0, %arg1, %c0_i32 : i32, i32, i32
  }
  func.func @transform_4(%arg0: i32, %arg1: i32) -> (i32, i32, i32) {
    %c0_i32 = arith.constant 0 : i32
    %c0_i32_0 = arith.constant 0 : i32
    %c0_i32_1 = arith.constant 0 : i32
    return %arg0, %c0_i32, %c0_i32_0 : i32, i32, i32
  }
  func.func @transform_5(%arg0: i32, %arg1: i32) -> (i32, i32, i32) {
    %c0_i32 = arith.constant 0 : i32
    %c0_i32_0 = arith.constant 0 : i32
    %c0_i32_1 = arith.constant 0 : i32
    return %arg0, %c0_i32, %c0_i32_0 : i32, i32, i32
  }
  func.func @transform_6(%arg0: i32, %arg1: i32) -> (i32, i32, i32) {
    %c0_i32 = arith.constant 0 : i32
    %c0_i32_0 = arith.constant 0 : i32
    %c0_i32_1 = arith.constant 0 : i32
    return %arg0, %c0_i32, %c0_i32_0 : i32, i32, i32
  }
}

</mosaic_0001>

<llo_original>
// kernel: aux_loss.2
$region0: #{aux_loss.2}
  #allocation0 [shape = 'u32[]', space=smem, size = 0x4, offset = 0x4, fixed_abs, tag = 'smem constant byte address 0x4 - core index']
  #allocation1 [shape = 'u32[144,128]{1,0:T(1,128)}', space=vmem, size = 0x12000, scoped, tag = 'internal scratch']
  #allocation2 [shape = 'f32[9,16]{1,0:T(8,128)}', space=vmem, size = 0x2000, scoped, tag = 'scratch operand']
  %s0 = inlined_call_operand.vmem [shape: f32[2,4,8,8], index: 0, kind: input, shape index: {}]
  %s1 = inlined_call_operand.vmem [shape: f32[16,8], index: 1, kind: input, shape index: {}]
  %s2 = inlined_call_operand.vmem [shape: f32[8,16], index: 2, kind: input, shape index: {}]
  %s3 = inlined_call_operand.vmem [shape: s32[2,16,16], index: 3, kind: input, shape index: {}]
  %s4 = inlined_call_operand.vmem [shape: f32[2,1,1], index: 4, kind: output, shape index: {0}]
  %s5 = inlined_call_operand.vmem [shape: f32[2,4,1], index: 5, kind: output, shape index: {1}]
  %s6 = inlined_call_operand.vmem [shape: f32[2,4,1], index: 6, kind: output, shape index: {2}]
  %7 = xla_tuple %s4, %s5, %s6
  %s8 = sld [smem:[#allocation0]]
  $region73: #{aux_loss.2} parent=0
    _
  %s10 = ssub.s32 1, %s8
  %s11 = scalar_select 0, %s10, %s8
  loop: start=0, step=1, limit=4
  $region2: #{aux_loss.2} parent=0 // loop_pre_header
    _
  $region3: #{aux_loss.2} parent=0 // loop_header
    %s13 = sphi 0, %s17
    %p14 = scmp.ge.s32.totalorder %s13, 4
    %s20 = sphi 0, %s32
    %s21 = sphi 0, %s28
    %s22 = sphi 0, %s20
    %s23 = sphi 0, %s21
    %s24 = sphi 0, %s22
    %s25 = sphi 0, %s23
    %s35 = sphi 0, %s37
    %s38 = sphi 0, %s35
    %s39 = sphi 0, %s38
    %s55 = sphi 0, %s39
    %s61 = sphi 0, %s63
    %s64 = sphi 0, %s61
    %s65 = sphi 0, %s64
    %s81 = sphi 0, %s65
    %s85 = sphi 0, %s85
    %s87 = sphi 0, %s85
    %s88 = sphi 0, %s87
    %s102 = sphi 0, %s88
    %s110 = sphi 0, %s112
    %s113 = sphi 0, %s110
    %s114 = sphi 0, %s113
    %s130 = sphi 0, %s114
    %s136 = sphi 0, %s138
    %s139 = sphi 0, %s136
    %s140 = sphi 0, %s139
    %s156 = sphi 0, %s140
    %s162 = sphi 0, %s164
    %s165 = sphi 0, %s162
    %s166 = sphi 0, %s165
    %s182 = sphi 0, %s166
    %s188 = sphi 0, %s190
    %s191 = sphi 0, %s188
    %s192 = sphi 0, %s191
    %s208 = sphi 0, %s192
  $region4: #{aux_loss.2} parent=0 // loop_header_branch
    %16 = sbr.rel (%p14) target = $region8
  $region5: #{aux_loss.2} parent=0 // loop_body
    %s18 = ssub.s32 %s13, 1
    %s19 = ssub.s32 %s13, 2
    %s26 = sadd.s32 1, %s21
    %p27 = scmp.ge.s32.totalorder %s26, 1
    %s28 = scalar_select %p27, 0, %s26
    %s29 = sadd.s32 1, %s20
    %s30 = scalar_select %p27, %s29, %s20
    %p31 = scmp.ge.s32.totalorder %s30, 2
    %s32 = scalar_select %p31, 0, %s30
    %s33 = ssub.s32 %s20, %s32
    %p34 = scmp.eq.s32.totalorder %s33, 0
    %s36 = sadd.s32 %s35, 1
    %s37 = scalar_select %p34, %s35, %s36
    %p40 = pneg %p34
    %p41 = scmp.eq.s32.totalorder %s13, 1
    %p42 = por %p40, %p41
    %p43 = scmp.ne.s32.totalorder %s35, %s38
    %p44 = scmp.eq.s32.totalorder %s13, 0
    %p45 = por %p43, %p44
    %p46 = scmp.ne.s32.totalorder %s35, %s38
    %p47 = scmp.eq.s32.totalorder %s18, 1
    %p48 = por %p46, %p47
    %p49 = scmp.ne.s32.totalorder %s38, %s39
    %p50 = scmp.eq.s32.totalorder %s18, 0
    %p51 = por %p49, %p50
    %p52 = scmp.ne.s32.totalorder %s38, %s39
    %p53 = scmp.eq.s32.totalorder %s19, 1
    %p54 = por %p52, %p53
    %p56 = scmp.ne.s32.totalorder %s39, %s55
    %p57 = scmp.eq.s32.totalorder %s19, 0
    %p58 = por %p56, %p57
    %s59 = ssub.s32 %s21, %s28
    %p60 = scmp.eq.s32.totalorder %s59, 0
    %s62 = sadd.s32 %s61, 1
    %s63 = scalar_select %p60, %s61, %s62
    %p66 = pneg %p60
    %p67 = scmp.eq.s32.totalorder %s13, 1
    %p68 = por %p66, %p67
    %p69 = scmp.ne.s32.totalorder %s61, %s64
    %p70 = scmp.eq.s32.totalorder %s13, 0
    %p71 = por %p69, %p70
    %p72 = scmp.ne.s32.totalorder %s61, %s64
    %p73 = scmp.eq.s32.totalorder %s18, 1
    %p74 = por %p72, %p73
    %p75 = scmp.ne.s32.totalorder %s64, %s65
    %p76 = scmp.eq.s32.totalorder %s18, 0
    %p77 = por %p75, %p76
    %p78 = scmp.ne.s32.totalorder %s64, %s65
    %p79 = scmp.eq.s32.totalorder %s19, 1
    %p80 = por %p78, %p79
    %p82 = scmp.ne.s32.totalorder %s65, %s81
    %p83 = scmp.eq.s32.totalorder %s19, 0
    %p84 = por %p82, %p83
    %s86 = sadd.s32 %s85, 1
    %p89 = scmp.eq.s32.totalorder %s13, 1
    %p90 = scmp.ne.s32.totalorder %s85, %s87
    %p91 = scmp.eq.s32.totalorder %s13, 0
    %p92 = por %p90, %p91
    %p93 = scmp.ne.s32.totalorder %s85, %s87
    %p94 = scmp.eq.s32.totalorder %s18, 1
    %p95 = por %p93, %p94
    %p96 = scmp.ne.s32.totalorder %s87, %s88
    %p97 = scmp.eq.s32.totalorder %s18, 0
    %p98 = por %p96, %p97
    %p99 = scmp.ne.s32.totalorder %s87, %s88
    %p100 = scmp.eq.s32.totalorder %s19, 1
    %p101 = por %p99, %p100
    %p103 = scmp.ne.s32.totalorder %s88, %s102
    %p104 = scmp.eq.s32.totalorder %s19, 0
    %p105 = por %p103, %p104
    %s106 = ssub.s32 %s20, %s32
    %s107 = ssub.s32 %s21, %s28
    %s108 = sor.u32 %s106, %s107
    %p109 = scmp.eq.s32.totalorder %s108, 0
    %s111 = sadd.s32 %s110, 1
    %s112 = scalar_select %p109, %s110, %s111
    %p115 = pneg %p109
    %p116 = scmp.eq.s32.totalorder %s13, 1
    %p117 = por %p115, %p116
    %p118 = scmp.ne.s32.totalorder %s110, %s113
    %p119 = scmp.eq.s32.totalorder %s13, 0
    %p120 = por %p118, %p119
    %p121 = scmp.ne.s32.totalorder %s110, %s113
    %p122 = scmp.eq.s32.totalorder %s18, 1
    %p123 = por %p121, %p122
    %p124 = scmp.ne.s32.totalorder %s113, %s114
    %p125 = scmp.eq.s32.totalorder %s18, 0
    %p126 = por %p124, %p125
    %p127 = scmp.ne.s32.totalorder %s113, %s114
    %p128 = scmp.eq.s32.totalorder %s19, 1
    %p129 = por %p127, %p128
    %p131 = scmp.ne.s32.totalorder %s114, %s130
    %p132 = scmp.eq.s32.totalorder %s19, 0
    %p133 = por %p131, %p132
    %s134 = ssub.s32 %s20, %s32
    %p135 = scmp.eq.s32.totalorder %s134, 0
    %s137 = sadd.s32 %s136, 1
    %s138 = scalar_select %p135, %s136, %s137
    %p141 = pneg %p135
    %p142 = scmp.eq.s32.totalorder %s13, 1
    %p143 = por %p141, %p142
    %p144 = scmp.ne.s32.totalorder %s136, %s139
    %p145 = scmp.eq.s32.totalorder %s13, 0
    %p146 = por %p144, %p145
    %p147 = scmp.ne.s32.totalorder %s136, %s139
    %p148 = scmp.eq.s32.totalorder %s18, 1
    %p149 = por %p147, %p148
    %p150 = scmp.ne.s32.totalorder %s139, %s140
    %p151 = scmp.eq.s32.totalorder %s18, 0
    %p152 = por %p150, %p151
    %p153 = scmp.ne.s32.totalorder %s139, %s140
    %p154 = scmp.eq.s32.totalorder %s19, 1
    %p155 = por %p153, %p154
    %p157 = scmp.ne.s32.totalorder %s140, %s156
    %p158 = scmp.eq.s32.totalorder %s19, 0
    %p159 = por %p157, %p158
    %s160 = ssub.s32 %s20, %s32
    %p161 = scmp.eq.s32.totalorder %s160, 0
    %s163 = sadd.s32 %s162, 1
    %s164 = scalar_select %p161, %s162, %s163
    %p167 = pneg %p161
    %p168 = scmp.eq.s32.totalorder %s13, 1
    %p169 = por %p167, %p168
    %p170 = scmp.ne.s32.totalorder %s162, %s165
    %p171 = scmp.eq.s32.totalorder %s13, 0
    %p172 = por %p170, %p171
    %p173 = scmp.ne.s32.totalorder %s162, %s165
    %p174 = scmp.eq.s32.totalorder %s18, 1
    %p175 = por %p173, %p174
    %p176 = scmp.ne.s32.totalorder %s165, %s166
    %p177 = scmp.eq.s32.totalorder %s18, 0
    %p178 = por %p176, %p177
    %p179 = scmp.ne.s32.totalorder %s165, %s166
    %p180 = scmp.eq.s32.totalorder %s19, 1
    %p181 = por %p179, %p180
    %p183 = scmp.ne.s32.totalorder %s166, %s182
    %p184 = scmp.eq.s32.totalorder %s19, 0
    %p185 = por %p183, %p184
    %s186 = ssub.s32 %s20, %s32
    %p187 = scmp.eq.s32.totalorder %s186, 0
    %s189 = sadd.s32 %s188, 1
    %s190 = scalar_select %p187, %s188, %s189
    %p193 = pneg %p187
    %p194 = scmp.eq.s32.totalorder %s13, 1
    %p195 = por %p193, %p194
    %p196 = scmp.ne.s32.totalorder %s188, %s191
    %p197 = scmp.eq.s32.totalorder %s13, 0
    %p198 = por %p196, %p197
    %p199 = scmp.ne.s32.totalorder %s188, %s191
    %p200 = scmp.eq.s32.totalorder %s18, 1
    %p201 = por %p199, %p200
    %p202 = scmp.ne.s32.totalorder %s191, %s192
    %p203 = scmp.eq.s32.totalorder %s18, 0
    %p204 = por %p202, %p203
    %p205 = scmp.ne.s32.totalorder %s191, %s192
    %p206 = scmp.eq.s32.totalorder %s19, 1
    %p207 = por %p205, %p206
    %p209 = scmp.ne.s32.totalorder %s192, %s208
    %p210 = scmp.eq.s32.totalorder %s19, 0
    %p211 = por %p209, %p210
    %p212 = scmp.le.s32.totalorder 1, %s13
    %p213 = scmp.lt.s32.totalorder %s13, 3
    %p214 = pnand %p212, %p213
    %p215 = pneg %p214
    // Predicated region
    $region9: #{aux_loss.2} parent=5 // pred_check
      _
    $region10: #{aux_loss.2} parent=5 // pred_check_branch
      %217 = sbr.rel (%p214) target = $region12
    $region11: #{aux_loss.2} parent=5 // pred_region
      %s218 = ssub.s32 %s13, 1
      // Predicated region
      $region13: #{aux_loss.2} parent=11 // pred_check
        %p219 = pneg %p77
      $region14: #{aux_loss.2} parent=11 // pred_check_branch
        %221 = sbr.rel (%p219) target = $region16
      $region15: #{aux_loss.2} parent=11 // pred_region
        %s222 = smul.u32 2, %s23
        %p223 = scmp.lt.s32.totalorder %s222, 1
        %s224 = scalar_select %p223, %s222, 1
        %s225 = smul.addr %s224, 8
        %s226 = scalar_lea.vmem %s1, %s225
        %s227 = smul.u32 2, %s23
      $region16: #{aux_loss.2} parent=11 // pred_fallthru
        _
      // Predicated region
      $region17: #{aux_loss.2} parent=11 // pred_check
        %p228 = pneg %p98
      $region18: #{aux_loss.2} parent=11 // pred_check_branch
        %230 = sbr.rel (%p228) target = $region20
      $region19: #{aux_loss.2} parent=11 // pred_region
        _
      $region20: #{aux_loss.2} parent=11 // pred_fallthru
        _
    $region12: #{aux_loss.2} parent=5 // pred_fallthru
      _
    %p231 = scmp.lt.s32.totalorder %s13, 2
    // Predicated region
    $region21: #{aux_loss.2} parent=5 // pred_check
      %p232 = pneg %p231
    $region22: #{aux_loss.2} parent=5 // pred_check_branch
      %234 = sbr.rel (%p232) target = $region24
    $region23: #{aux_loss.2} parent=5 // pred_region
      // Predicated region
      $region25: #{aux_loss.2} parent=23 // pred_check
        %p235 = pneg %p45
      $region26: #{aux_loss.2} parent=23 // pred_check_branch
        %237 = sbr.rel (%p235) target = $region28
      $region27: #{aux_loss.2} parent=23 // pred_region
        %p238 = scmp.lt.s32.totalorder %s20, 1
        %s239 = scalar_select %p238, %s20, 1
        %s240 = smul.addr %s239, 4
        %s241 = smul.addr %s240, 8
        %s242 = scalar_lea.vmem %s0, %s241
      $region28: #{aux_loss.2} parent=23 // pred_fallthru
        _
      // Predicated region
      $region29: #{aux_loss.2} parent=23 // pred_check
        %p243 = pneg %p120
      $region30: #{aux_loss.2} parent=23 // pred_check_branch
        %245 = sbr.rel (%p243) target = $region32
      $region31: #{aux_loss.2} parent=23 // pred_region
        %s246 = smul.u32 2, %s21
        %p247 = scmp.lt.s32.totalorder %s20, 1
        %s248 = scalar_select %p247, %s20, 1
        %p249 = scmp.lt.s32.totalorder %s246, 1
        %s250 = scalar_select %p249, %s246, 1
        %s251 = smul.addr %s248, 2
        %s252 = sadd.s32 %s250, %s251
        %s253 = smul.addr %s252, 8
        %s254 = scalar_lea.vmem %s3, %s253
        %s255 = smul.u32 2, %s21
      $region32: #{aux_loss.2} parent=23 // pred_fallthru
        _
    $region24: #{aux_loss.2} parent=5 // pred_fallthru
      _
    %p256 = scmp.le.s32.totalorder 1, %s13
    %p257 = scmp.lt.s32.totalorder %s13, 3
    %p258 = pnand %p256, %p257
    %p259 = pneg %p258
    // Predicated region
    $region33: #{aux_loss.2} parent=5 // pred_check
      _
    $region34: #{aux_loss.2} parent=5 // pred_check_branch
      %261 = sbr.rel (%p258) target = $region36
    $region35: #{aux_loss.2} parent=5 // pred_region
      %s262 = ssub.s32 %s13, 1
      %p263 = scmp.lt.s32.totalorder %s22, 1
      %s264 = scalar_select %p263, %s22, 1
      %s265 = smul.addr %s264, 4
      %s266 = smul.addr %s265, 8
      %s267 = scalar_lea.vmem %s0, %s266
      %p268 = pneg %p51
      %p269 = pneg %p48
      %s270 = smul.u32 2, %s23
      %p271 = scmp.lt.s32.totalorder %s270, 1
      %s272 = scalar_select %p271, %s270, 1
      %s273 = smul.addr %s272, 8
      %s274 = scalar_lea.vmem %s1, %s273
      %p275 = pneg %p77
      %p276 = pneg %p74
      %p277 = pneg %p98
      %p278 = pneg %p95
      %s279 = smul.u32 2, %s23
      %p280 = scmp.lt.s32.totalorder %s22, 1
      %s281 = scalar_select %p280, %s22, 1
      %p282 = scmp.lt.s32.totalorder %s279, 1
      %s283 = scalar_select %p282, %s279, 1
      %s284 = smul.addr %s281, 2
      %s285 = sadd.s32 %s283, %s284
      %s286 = smul.addr %s285, 8
      %s287 = scalar_lea.vmem %s3, %s286
      %p288 = pneg %p126
      %p289 = pneg %p123
      %p290 = pneg %p152
      %p291 = pneg %p149
      %p292 = scmp.lt.s32.totalorder %s22, 1
      %s293 = scalar_select %p292, %s22, 1
      %s294 = scalar_lea.vmem %s4, %s293
      %p295 = pneg %p178
      %p296 = pneg %p175
      %p297 = scmp.lt.s32.totalorder %s22, 1
      %s298 = scalar_select %p297, %s22, 1
      %s299 = smul.addr %s298, 4
      %s300 = scalar_lea.vmem %s5, %s299
      %p301 = pneg %p204
      %p302 = pneg %p201
      %p303 = scmp.lt.s32.totalorder %s22, 1
      %s304 = scalar_select %p303, %s22, 1
      %s305 = smul.addr %s304, 4
      %s306 = scalar_lea.vmem %s6, %s305
      %p307 = scmp.lt.s32.totalorder %s22, 1
      %s308 = scalar_select %p307, %s22, 1
      %s309 = smul.addr %s308, 4
      %s310 = smul.addr %s309, 8
      %s311 = scalar_lea.vmem %s0, %s310
      %s312 = smul.u32 2, %s23
      %p313 = scmp.lt.s32.totalorder %s312, 1
      %s314 = scalar_select %p313, %s312, 1
      %s315 = smul.addr %s314, 8
      %s316 = scalar_lea.vmem %s1, %s315
      %s317 = smul.u32 2, %s23
      %s318 = smul.u32 2, %s23
      %p319 = scmp.lt.s32.totalorder %s22, 1
      %s320 = scalar_select %p319, %s22, 1
      %p321 = scmp.lt.s32.totalorder %s318, 1
      %s322 = scalar_select %p321, %s318, 1
      %s323 = smul.addr %s320, 2
      %s324 = sadd.s32 %s322, %s323
      %s325 = smul.addr %s324, 8
      %s326 = scalar_lea.vmem %s3, %s325
      %s327 = smul.u32 2, %s23
      %p328 = scmp.lt.s32.totalorder %s22, 1
      %s329 = scalar_select %p328, %s22, 1
      %s330 = scalar_lea.vmem %s4, %s329
      %p331 = scmp.lt.s32.totalorder %s22, 1
      %s332 = scalar_select %p331, %s22, 1
      %s333 = smul.addr %s332, 4
      %s334 = scalar_lea.vmem %s5, %s333
      %p335 = scmp.lt.s32.totalorder %s22, 1
      %s336 = scalar_select %p335, %s22, 1
      %s337 = smul.addr %s336, 4
      %s338 = scalar_lea.vmem %s6, %s337
      %p339 = scmp.eq.s32.totalorder %s23, 0
      // Predicated region
      $region37: #{aux_loss.2} parent=35 // pred_check
        %p340 = pneg %p339
      $region38: #{aux_loss.2} parent=35 // pred_check_branch
        %342 = sbr.rel (%p340) target = $region40
      $region39: #{aux_loss.2} parent=35 // pred_region
        %vm343 = vcmask 130048
        %344 = vst.msk [vmem:[#allocation2] sm:$0xff] %vm343, 0.0
        %vm345 = vcmask 122880
        %346 = vst.msk [vmem:[#allocation2 + $0x8] sm:$0x1] %vm345, 0.0
      $region40: #{aux_loss.2} parent=35 // pred_fallthru
        _
      %v347 = vld [vmem:[%s316] sm:$0xff]
      %v348 = vld [vmem:[%s316 + $0x8] sm:$0xff]
      %v349 = vld [vmem:[%s2] sm:$0xff]
      %v350 = vld [vmem:[%s326] sm:$0xff]
      %v351 = vld [vmem:[%s326 + $0x8] sm:$0xff]
      %v352 = vld [vmem:[%s311] sm:$0xff]
      %vm353 = vcmask 64512
      %v355 = vsel %vm353, %v347, 0
      %v358 = vsel %vm353, %v348, 0
      %360 = vmatprep.subr.mxu0 0.0
      %361 = vmatpush1.msra.mxu0 %v352
      %362 = vmatprep.subr.mxu0 0.0
      %363 = vmatpush1.msra.mxu0 0.0
      %364 = vmatprep.subr.mxu0 0.0
      %365 = vmatpush1.msra.mxu0 0.0
      %366 = vmatprep.subr.mxu0 0.0
      %367 = vmatpush1.msra.mxu0 0.0
      %368 = vmatprep.subr.mxu0 0.0
      %369 = vmatpush1.msra.mxu0 0.0
      %370 = vmatprep.subr.mxu0 0.0
      %371 = vmatpush1.msra.mxu0 0.0
      %372 = vmatprep.subr.mxu0 0.0
      %373 = vmatpush1.msra.mxu0 0.0
      %374 = vmatprep.subr.mxu0 0.0
      %375 = vmatpush1.msra.mxu0 0.0
      %376 = vmatprep.subr.mxu0 0.0
      %377 = vmatpush1.msra.mxu0 0.0
      %378 = vmatprep.subr.mxu0 0.0
      %379 = vmatpush1.msra.mxu0 0.0
      %380 = vmatprep.subr.mxu0 0.0
      %381 = vmatpush1.msra.mxu0 0.0
      %382 = vmatprep.subr.mxu0 0.0
      %383 = vmatpush1.msra.mxu0 0.0
      %384 = vmatprep.subr.mxu0 0.0
      %385 = vmatpush1.msra.mxu0 0.0
      %386 = vmatprep.subr.mxu0 0.0
      %387 = vmatpush1.msra.mxu0 0.0
      %388 = vmatprep.subr.mxu0 0.0
      %389 = vmatpush1.msra.mxu0 0.0
      %390 = vmatprep.subr.mxu0 0.0
      %391 = vmatpush1.msra.mxu0 0.0
      %392 = vmatprep.subr.mxu0 0.0
      %393 = vmatpush1.msra.mxu0 0.0
      %394 = vmatprep.subr.mxu0 0.0
      %395 = vmatpush1.msra.mxu0 0.0
      %396 = vmatprep.subr.mxu0 0.0
      %397 = vmatpush1.msra.mxu0 0.0
      %398 = vmatprep.subr.mxu0 0.0
      %399 = vmatpush1.msra.mxu0 0.0
      %400 = vmatprep.subr.mxu0 0.0
      %401 = vmatpush1.msra.mxu0 0.0
      %402 = vmatprep.subr.mxu0 0.0
      %403 = vmatpush1.msra.mxu0 0.0
      %404 = vmatprep.subr.mxu0 0.0
      %405 = vmatpush1.msra.mxu0 0.0
      %406 = vmatprep.subr.mxu0 0.0
      %407 = vmatpush1.msra.mxu0 0.0
      %408 = vmatprep.subr.mxu0 0.0
      %409 = vmatpush1.msra.mxu0 0.0
      %410 = vmatprep.subr.mxu0 0.0
      %411 = vmatpush1.msra.mxu0 0.0
      %412 = vmatprep.subr.mxu0 0.0
      %413 = vmatpush1.msra.mxu0 0.0
      %414 = vmatprep.subr.mxu0 0.0
      %415 = vmatpush1.msra.mxu0 0.0
      %416 = vmatprep.subr.mxu0 0.0
      %417 = vmatpush1.msra.mxu0 0.0
      %418 = vmatprep.subr.mxu0 0.0
      %419 = vmatpush1.msra.mxu0 0.0
      %420 = vmatprep.subr.mxu0 0.0
      %421 = vmatpush1.msra.mxu0 0.0
      %422 = vmatprep.subr.mxu0 0.0
      %423 = vmatpush1.msra.mxu0 0.0
      %424 = vmatprep.mubr.f32.mxu0 0.0
      %425 = vmatmul.mubr.f32.gmra.mrb[0].mxu0 %v355
      %v426 = vpop.f32.mrb[0].mxu0
      %v427 = vadd.f32 0.0, %v426
      %v428 = vpop.f32.mrb[0].mxu0
      %429 = vmatprep.mubr.f32.mxu0 0.0
      %430 = vmatmul.mubr.f32.gmra.mrb[0].mxu0 %v358
      %v431 = vpop.f32.mrb[0].mxu0
      %v432 = vadd.f32 0.0, %v431
      %v433 = vpop.f32.mrb[0].mxu0
      %434 = vdwg.mxu0
      %v436 = vsel %vm353, %v427, 0
      %v439 = vsel %vm353, %v432, 0
      %441 = vmatprep.subr.mxu0 0.0
      %442 = vmatpush1.msra.mxu0 %v349
      %443 = vmatprep.subr.mxu0 0.0
      %444 = vmatpush1.msra.mxu0 0.0
      %445 = vmatprep.subr.mxu0 0.0
      %446 = vmatpush1.msra.mxu0 0.0
      %447 = vmatprep.subr.mxu0 0.0
      %448 = vmatpush1.msra.mxu0 0.0
      %449 = vmatprep.subr.mxu0 0.0
      %450 = vmatpush1.msra.mxu0 0.0
      %451 = vmatprep.subr.mxu0 0.0
      %452 = vmatpush1.msra.mxu0 0.0
      %453 = vmatprep.subr.mxu0 0.0
      %454 = vmatpush1.msra.mxu0 0.0
      %455 = vmatprep.subr.mxu0 0.0
      %456 = vmatpush1.msra.mxu0 0.0
      %457 = vmatprep.subr.mxu0 0.0
      %458 = vmatpush1.msra.mxu0 0.0
      %459 = vmatprep.subr.mxu0 0.0
      %460 = vmatpush1.msra.mxu0 0.0
      %461 = vmatprep.subr.mxu0 0.0
      %462 = vmatpush1.msra.mxu0 0.0
      %463 = vmatprep.subr.mxu0 0.0
      %464 = vmatpush1.msra.mxu0 0.0
      %465 = vmatprep.subr.mxu0 0.0
      %466 = vmatpush1.msra.mxu0 0.0
      %467 = vmatprep.subr.mxu0 0.0
      %468 = vmatpush1.msra.mxu0 0.0
      %469 = vmatprep.subr.mxu0 0.0
      %470 = vmatpush1.msra.mxu0 0.0
      %471 = vmatprep.subr.mxu0 0.0
      %472 = vmatpush1.msra.mxu0 0.0
      %473 = vmatprep.subr.mxu0 0.0
      %474 = vmatpush1.msra.mxu0 0.0
      %475 = vmatprep.subr.mxu0 0.0
      %476 = vmatpush1.msra.mxu0 0.0
      %477 = vmatprep.subr.mxu0 0.0
      %478 = vmatpush1.msra.mxu0 0.0
      %479 = vmatprep.subr.mxu0 0.0
      %480 = vmatpush1.msra.mxu0 0.0
      %481 = vmatprep.subr.mxu0 0.0
      %482 = vmatpush1.msra.mxu0 0.0
      %483 = vmatprep.subr.mxu0 0.0
      %484 = vmatpush1.msra.mxu0 0.0
      %485 = vmatprep.subr.mxu0 0.0
      %486 = vmatpush1.msra.mxu0 0.0
      %487 = vmatprep.subr.mxu0 0.0
      %488 = vmatpush1.msra.mxu0 0.0
      %489 = vmatprep.subr.mxu0 0.0
      %490 = vmatpush1.msra.mxu0 0.0
      %491 = vmatprep.subr.mxu0 0.0
      %492 = vmatpush1.msra.mxu0 0.0
      %493 = vmatprep.subr.mxu0 0.0
      %494 = vmatpush1.msra.mxu0 0.0
      %495 = vmatprep.subr.mxu0 0.0
      %496 = vmatpush1.msra.mxu0 0.0
      %497 = vmatprep.subr.mxu0 0.0
      %498 = vmatpush1.msra.mxu0 0.0
      %499 = vmatprep.subr.mxu0 0.0
      %500 = vmatpush1.msra.mxu0 0.0
      %501 = vmatprep.subr.mxu0 0.0
      %502 = vmatpush1.msra.mxu0 0.0
      %503 = vmatprep.subr.mxu0 0.0
      %504 = vmatpush1.msra.mxu0 0.0
      %505 = vmatprep.mubr.f32.mxu0 0.0
      %506 = vmatmul.mubr.f32.gmra.mrb[0].mxu0 %v436
      %v507 = vpop.f32.mrb[0].mxu0
      %v508 = vadd.f32 0.0, %v507
      %v509 = vpop.f32.mrb[0].mxu0
      %510 = vmatprep.mubr.f32.mxu0 0.0
      %511 = vmatmul.mubr.f32.gmra.mrb[0].mxu0 %v439
      %v512 = vpop.f32.mrb[0].mxu0
      %v513 = vadd.f32 0.0, %v512
      %v514 = vpop.f32.mrb[0].mxu0
      %515 = vdwg.mxu0
      %s516 = scalar_lea.vmem %s311, 8
      %v517 = vld [vmem:[%s516] sm:$0xff]
      %518 = vmatprep.subr.mxu0 0.0
      %519 = vmatpush1.msra.mxu0 %v517
      %520 = vmatprep.subr.mxu0 0.0
      %521 = vmatpush1.msra.mxu0 0.0
      %522 = vmatprep.subr.mxu0 0.0
      %523 = vmatpush1.msra.mxu0 0.0
      %524 = vmatprep.subr.mxu0 0.0
      %525 = vmatpush1.msra.mxu0 0.0
      %526 = vmatprep.subr.mxu0 0.0
      %527 = vmatpush1.msra.mxu0 0.0
      %528 = vmatprep.subr.mxu0 0.0
      %529 = vmatpush1.msra.mxu0 0.0
      %530 = vmatprep.subr.mxu0 0.0
      %531 = vmatpush1.msra.mxu0 0.0
      %532 = vmatprep.subr.mxu0 0.0
      %533 = vmatpush1.msra.mxu0 0.0
      %534 = vmatprep.subr.mxu0 0.0
      %535 = vmatpush1.msra.mxu0 0.0
      %536 = vmatprep.subr.mxu0 0.0
      %537 = vmatpush1.msra.mxu0 0.0
      %538 = vmatprep.subr.mxu0 0.0
      %539 = vmatpush1.msra.mxu0 0.0
      %540 = vmatprep.subr.mxu0 0.0
      %541 = vmatpush1.msra.mxu0 0.0
      %542 = vmatprep.subr.mxu0 0.0
      %543 = vmatpush1.msra.mxu0 0.0
      %544 = vmatprep.subr.mxu0 0.0
      %545 = vmatpush1.msra.mxu0 0.0
      %546 = vmatprep.subr.mxu0 0.0
      %547 = vmatpush1.msra.mxu0 0.0
      %548 = vmatprep.subr.mxu0 0.0
      %549 = vmatpush1.msra.mxu0 0.0
      %550 = vmatprep.subr.mxu0 0.0
      %551 = vmatpush1.msra.mxu0 0.0
      %552 = vmatprep.subr.mxu0 0.0
      %553 = vmatpush1.msra.mxu0 0.0
      %554 = vmatprep.subr.mxu0 0.0
      %555 = vmatpush1.msra.mxu0 0.0
      %556 = vmatprep.subr.mxu0 0.0
      %557 = vmatpush1.msra.mxu0 0.0
      %558 = vmatprep.subr.mxu0 0.0
      %559 = vmatpush1.msra.mxu0 0.0
      %560 = vmatprep.subr.mxu0 0.0
      %561 = vmatpush1.msra.mxu0 0.0
      %562 = vmatprep.subr.mxu0 0.0
      %563 = vmatpush1.msra.mxu0 0.0
      %564 = vmatprep.subr.mxu0 0.0
      %565 = vmatpush1.msra.mxu0 0.0
      %566 = vmatprep.subr.mxu0 0.0
      %567 = vmatpush1.msra.mxu0 0.0
      %568 = vmatprep.subr.mxu0 0.0
      %569 = vmatpush1.msra.mxu0 0.0
      %570 = vmatprep.subr.mxu0 0.0
      %571 = vmatpush1.msra.mxu0 0.0
      %572 = vmatprep.subr.mxu0 0.0
      %573 = vmatpush1.msra.mxu0 0.0
      %574 = vmatprep.subr.mxu0 0.0
      %575 = vmatpush1.msra.mxu0 0.0
      %576 = vmatprep.subr.mxu0 0.0
      %577 = vmatpush1.msra.mxu0 0.0
      %578 = vmatprep.subr.mxu0 0.0
      %579 = vmatpush1.msra.mxu0 0.0
      %580 = vmatprep.subr.mxu0 0.0
      %581 = vmatpush1.msra.mxu0 0.0
      %582 = vmatprep.mubr.f32.mxu0 0.0
      %583 = vmatmul.mubr.f32.gmra.mrb[0].mxu0 %v355
      %v584 = vpop.f32.mrb[0].mxu0
      %v585 = vadd.f32 0.0, %v584
      %v586 = vpop.f32.mrb[0].mxu0
      %587 = vmatprep.mubr.f32.mxu0 0.0
      %588 = vmatmul.mubr.f32.gmra.mrb[0].mxu0 %v358
      %v589 = vpop.f32.mrb[0].mxu0
      %v590 = vadd.f32 0.0, %v589
      %v591 = vpop.f32.mrb[0].mxu0
      %592 = vdwg.mxu0
      %v594 = vsel %vm353, %v585, 0
      %v597 = vsel %vm353, %v590, 0
      %599 = vmatprep.subr.mxu0 0.0
      %600 = vmatpush1.msra.mxu0 %v349
      %601 = vmatprep.subr.mxu0 0.0
      %602 = vmatpush1.msra.mxu0 0.0
      %603 = vmatprep.subr.mxu0 0.0
      %604 = vmatpush1.msra.mxu0 0.0
      %605 = vmatprep.subr.mxu0 0.0
      %606 = vmatpush1.msra.mxu0 0.0
      %607 = vmatprep.subr.mxu0 0.0
      %608 = vmatpush1.msra.mxu0 0.0
      %609 = vmatprep.subr.mxu0 0.0
      %610 = vmatpush1.msra.mxu0 0.0
      %611 = vmatprep.subr.mxu0 0.0
      %612 = vmatpush1.msra.mxu0 0.0
      %613 = vmatprep.subr.mxu0 0.0
      %614 = vmatpush1.msra.mxu0 0.0
      %615 = vmatprep.subr.mxu0 0.0
      %616 = vmatpush1.msra.mxu0 0.0
      %617 = vmatprep.subr.mxu0 0.0
      %618 = vmatpush1.msra.mxu0 0.0
      %619 = vmatprep.subr.mxu0 0.0
      %620 = vmatpush1.msra.mxu0 0.0
      %621 = vmatprep.subr.mxu0 0.0
      %622 = vmatpush1.msra.mxu0 0.0
      %623 = vmatprep.subr.mxu0 0.0
      %624 = vmatpush1.msra.mxu0 0.0
      %625 = vmatprep.subr.mxu0 0.0
      %626 = vmatpush1.msra.mxu0 0.0
      %627 = vmatprep.subr.mxu0 0.0
      %628 = vmatpush1.msra.mxu0 0.0
      %629 = vmatprep.subr.mxu0 0.0
      %630 = vmatpush1.msra.mxu0 0.0
      %631 = vmatprep.subr.mxu0 0.0
      %632 = vmatpush1.msra.mxu0 0.0
      %633 = vmatprep.subr.mxu0 0.0
      %634 = vmatpush1.msra.mxu0 0.0
      %635 = vmatprep.subr.mxu0 0.0
      %636 = vmatpush1.msra.mxu0 0.0
      %637 = vmatprep.subr.mxu0 0.0
      %638 = vmatpush1.msra.mxu0 0.0
      %639 = vmatprep.subr.mxu0 0.0
      %640 = vmatpush1.msra.mxu0 0.0
      %641 = vmatprep.subr.mxu0 0.0
      %642 = vmatpush1.msra.mxu0 0.0
      %643 = vmatprep.subr.mxu0 0.0
      %644 = vmatpush1.msra.mxu0 0.0
      %645 = vmatprep.subr.mxu0 0.0
      %646 = vmatpush1.msra.mxu0 0.0
      %647 = vmatprep.subr.mxu0 0.0
      %648 = vmatpush1.msra.mxu0 0.0
      %649 = vmatprep.subr.mxu0 0.0
      %650 = vmatpush1.msra.mxu0 0.0
      %651 = vmatprep.subr.mxu0 0.0
      %652 = vmatpush1.msra.mxu0 0.0
      %653 = vmatprep.subr.mxu0 0.0
      %654 = vmatpush1.msra.mxu0 0.0
      %655 = vmatprep.subr.mxu0 0.0
      %656 = vmatpush1.msra.mxu0 0.0
      %657 = vmatprep.subr.mxu0 0.0
      %658 = vmatpush1.msra.mxu0 0.0
      %659 = vmatprep.subr.mxu0 0.0
      %660 = vmatpush1.msra.mxu0 0.0
      %661 = vmatprep.subr.mxu0 0.0
      %662 = vmatpush1.msra.mxu0 0.0
      %663 = vmatprep.mubr.f32.mxu0 0.0
      %664 = vmatmul.mubr.f32.gmra.mrb[0].mxu0 %v594
      %v665 = vpop.f32.mrb[0].mxu0
      %v666 = vadd.f32 0.0, %v665
      %v667 = vpop.f32.mrb[0].mxu0
      %668 = vmatprep.mubr.f32.mxu0 0.0
      %669 = vmatmul.mubr.f32.gmra.mrb[0].mxu0 %v597
      %v670 = vpop.f32.mrb[0].mxu0
      %v671 = vadd.f32 0.0, %v670
      %v672 = vpop.f32.mrb[0].mxu0
      %673 = vdwg.mxu0
      %s674 = scalar_lea.vmem %s311, 16
      %v675 = vld [vmem:[%s674] sm:$0xff]
      %676 = vmatprep.subr.mxu0 0.0
      %677 = vmatpush1.msra.mxu0 %v675
      %678 = vmatprep.subr.mxu0 0.0
      %679 = vmatpush1.msra.mxu0 0.0
      %680 = vmatprep.subr.mxu0 0.0
      %681 = vmatpush1.msra.mxu0 0.0
      %682 = vmatprep.subr.mxu0 0.0
      %683 = vmatpush1.msra.mxu0 0.0
      %684 = vmatprep.subr.mxu0 0.0
      %685 = vmatpush1.msra.mxu0 0.0
      %686 = vmatprep.subr.mxu0 0.0
      %687 = vmatpush1.msra.mxu0 0.0
      %688 = vmatprep.subr.mxu0 0.0
      %689 = vmatpush1.msra.mxu0 0.0
      %690 = vmatprep.subr.mxu0 0.0
      %691 = vmatpush1.msra.mxu0 0.0
      %692 = vmatprep.subr.mxu0 0.0
      %693 = vmatpush1.msra.mxu0 0.0
      %694 = vmatprep.subr.mxu0 0.0
      %695 = vmatpush1.msra.mxu0 0.0
      %696 = vmatprep.subr.mxu0 0.0
      %697 = vmatpush1.msra.mxu0 0.0
      %698 = vmatprep.subr.mxu0 0.0
      %699 = vmatpush1.msra.mxu0 0.0
      %700 = vmatprep.subr.mxu0 0.0
      %701 = vmatpush1.msra.mxu0 0.0
      %702 = vmatprep.subr.mxu0 0.0
      %703 = vmatpush1.msra.mxu0 0.0
      %704 = vmatprep.subr.mxu0 0.0
      %705 = vmatpush1.msra.mxu0 0.0
      %706 = vmatprep.subr.mxu0 0.0
      %707 = vmatpush1.msra.mxu0 0.0
      %708 = vmatprep.subr.mxu0 0.0
      %709 = vmatpush1.msra.mxu0 0.0
      %710 = vmatprep.subr.mxu0 0.0
      %711 = vmatpush1.msra.mxu0 0.0
      %712 = vmatprep.subr.mxu0 0.0
      %713 = vmatpush1.msra.mxu0 0.0
      %714 = vmatprep.subr.mxu0 0.0
      %715 = vmatpush1.msra.mxu0 0.0
      %716 = vmatprep.subr.mxu0 0.0
      %717 = vmatpush1.msra.mxu0 0.0
      %718 = vmatprep.subr.mxu0 0.0
      %719 = vmatpush1.msra.mxu0 0.0
      %720 = vmatprep.subr.mxu0 0.0
      %721 = vmatpush1.msra.mxu0 0.0
      %722 = vmatprep.subr.mxu0 0.0
      %723 = vmatpush1.msra.mxu0 0.0
      %724 = vmatprep.subr.mxu0 0.0
      %725 = vmatpush1.msra.mxu0 0.0
      %726 = vmatprep.subr.mxu0 0.0
      %727 = vmatpush1.msra.mxu0 0.0
      %728 = vmatprep.subr.mxu0 0.0
      %729 = vmatpush1.msra.mxu0 0.0
      %730 = vmatprep.subr.mxu0 0.0
      %731 = vmatpush1.msra.mxu0 0.0
      %732 = vmatprep.subr.mxu0 0.0
      %733 = vmatpush1.msra.mxu0 0.0
      %734 = vmatprep.subr.mxu0 0.0
      %735 = vmatpush1.msra.mxu0 0.0
      %736 = vmatprep.subr.mxu0 0.0
      %737 = vmatpush1.msra.mxu0 0.0
      %738 = vmatprep.subr.mxu0 0.0
      %739 = vmatpush1.msra.mxu0 0.0
      %740 = vmatprep.mubr.f32.mxu0 0.0
      %741 = vmatmul.mubr.f32.gmra.mrb[0].mxu0 %v355
      %v742 = vpop.f32.mrb[0].mxu0
      %v743 = vadd.f32 0.0, %v742
      %v744 = vpop.f32.mrb[0].mxu0
      %745 = vmatprep.mubr.f32.mxu0 0.0
      %746 = vmatmul.mubr.f32.gmra.mrb[0].mxu0 %v358
      %v747 = vpop.f32.mrb[0].mxu0
      %v748 = vadd.f32 0.0, %v747
      %v749 = vpop.f32.mrb[0].mxu0
      %750 = vdwg.mxu0
      %v752 = vsel %vm353, %v743, 0
      %v755 = vsel %vm353, %v748, 0
      %757 = vmatprep.subr.mxu0 0.0
      %758 = vmatpush1.msra.mxu0 %v349
      %759 = vmatprep.subr.mxu0 0.0
      %760 = vmatpush1.msra.mxu0 0.0
      %761 = vmatprep.subr.mxu0 0.0
      %762 = vmatpush1.msra.mxu0 0.0
      %763 = vmatprep.subr.mxu0 0.0
      %764 = vmatpush1.msra.mxu0 0.0
      %765 = vmatprep.subr.mxu0 0.0
      %766 = vmatpush1.msra.mxu0 0.0
      %767 = vmatprep.subr.mxu0 0.0
      %768 = vmatpush1.msra.mxu0 0.0
      %769 = vmatprep.subr.mxu0 0.0
      %770 = vmatpush1.msra.mxu0 0.0
      %771 = vmatprep.subr.mxu0 0.0
      %772 = vmatpush1.msra.mxu0 0.0
      %773 = vmatprep.subr.mxu0 0.0
      %774 = vmatpush1.msra.mxu0 0.0
      %775 = vmatprep.subr.mxu0 0.0
      %776 = vmatpush1.msra.mxu0 0.0
      %777 = vmatprep.subr.mxu0 0.0
      %778 = vmatpush1.msra.mxu0 0.0
      %779 = vmatprep.subr.mxu0 0.0
      %780 = vmatpush1.msra.mxu0 0.0
      %781 = vmatprep.subr.mxu0 0.0
      %782 = vmatpush1.msra.mxu0 0.0
      %783 = vmatprep.subr.mxu0 0.0
      %784 = vmatpush1.msra.mxu0 0.0
      %785 = vmatprep.subr.mxu0 0.0
      %786 = vmatpush1.msra.mxu0 0.0
      %787 = vmatprep.subr.mxu0 0.0
      %788 = vmatpush1.msra.mxu0 0.0
      %789 = vmatprep.subr.mxu0 0.0
      %790 = vmatpush1.msra.mxu0 0.0
      %791 = vmatprep.subr.mxu0 0.0
      %792 = vmatpush1.msra.mxu0 0.0
      %793 = vmatprep.subr.mxu0 0.0
      %794 = vmatpush1.msra.mxu0 0.0
      %795 = vmatprep.subr.mxu0 0.0
      %796 = vmatpush1.msra.mxu0 0.0
      %797 = vmatprep.subr.mxu0 0.0
      %798 = vmatpush1.msra.mxu0 0.0
      %799 = vmatprep.subr.mxu0 0.0
      %800 = vmatpush1.msra.mxu0 0.0
      %801 = vmatprep.subr.mxu0 0.0
      %802 = vmatpush1.msra.mxu0 0.0
      %803 = vmatprep.subr.mxu0 0.0
      %804 = vmatpush1.msra.mxu0 0.0
      %805 = vmatprep.subr.mxu0 0.0
      %806 = vmatpush1.msra.mxu0 0.0
      %807 = vmatprep.subr.mxu0 0.0
      %808 = vmatpush1.msra.mxu0 0.0
      %809 = vmatprep.subr.mxu0 0.0
      %810 = vmatpush1.msra.mxu0 0.0
      %811 = vmatprep.subr.mxu0 0.0
      %812 = vmatpush1.msra.mxu0 0.0
      %813 = vmatprep.subr.mxu0 0.0
      %814 = vmatpush1.msra.mxu0 0.0
      %815 = vmatprep.subr.mxu0 0.0
      %816 = vmatpush1.msra.mxu0 0.0
      %817 = vmatprep.subr.mxu0 0.0
      %818 = vmatpush1.msra.mxu0 0.0
      %819 = vmatprep.subr.mxu0 0.0
      %820 = vmatpush1.msra.mxu0 0.0
      %821 = vmatprep.mubr.f32.mxu0 0.0
      %822 = vmatmul.mubr.f32.gmra.mrb[0].mxu0 %v752
      %v823 = vpop.f32.mrb[0].mxu0
      %v824 = vadd.f32 0.0, %v823
      %v825 = vpop.f32.mrb[0].mxu0
      %826 = vmatprep.mubr.f32.mxu0 0.0
      %827 = vmatmul.mubr.f32.gmra.mrb[0].mxu0 %v755
      %v828 = vpop.f32.mrb[0].mxu0
      %v829 = vadd.f32 0.0, %v828
      %v830 = vpop.f32.mrb[0].mxu0
      %831 = vdwg.mxu0
      %s832 = scalar_lea.vmem %s311, 24
      %v833 = vld [vmem:[%s832] sm:$0xff]
      %834 = vmatprep.subr.mxu0 0.0
      %835 = vmatpush1.msra.mxu0 %v833
      %836 = vmatprep.subr.mxu0 0.0
      %837 = vmatpush1.msra.mxu0 0.0
      %838 = vmatprep.subr.mxu0 0.0
      %839 = vmatpush1.msra.mxu0 0.0
      %840 = vmatprep.subr.mxu0 0.0
      %841 = vmatpush1.msra.mxu0 0.0
      %842 = vmatprep.subr.mxu0 0.0
      %843 = vmatpush1.msra.mxu0 0.0
      %844 = vmatprep.subr.mxu0 0.0
      %845 = vmatpush1.msra.mxu0 0.0
      %846 = vmatprep.subr.mxu0 0.0
      %847 = vmatpush1.msra.mxu0 0.0
      %848 = vmatprep.subr.mxu0 0.0
      %849 = vmatpush1.msra.mxu0 0.0
      %850 = vmatprep.subr.mxu0 0.0
      %851 = vmatpush1.msra.mxu0 0.0
      %852 = vmatprep.subr.mxu0 0.0
      %853 = vmatpush1.msra.mxu0 0.0
      %854 = vmatprep.subr.mxu0 0.0
      %855 = vmatpush1.msra.mxu0 0.0
      %856 = vmatprep.subr.mxu0 0.0
      %857 = vmatpush1.msra.mxu0 0.0
      %858 = vmatprep.subr.mxu0 0.0
      %859 = vmatpush1.msra.mxu0 0.0
      %860 = vmatprep.subr.mxu0 0.0
      %861 = vmatpush1.msra.mxu0 0.0
      %862 = vmatprep.subr.mxu0 0.0
      %863 = vmatpush1.msra.mxu0 0.0
      %864 = vmatprep.subr.mxu0 0.0
      %865 = vmatpush1.msra.mxu0 0.0
      %866 = vmatprep.subr.mxu0 0.0
      %867 = vmatpush1.msra.mxu0 0.0
      %868 = vmatprep.subr.mxu0 0.0
      %869 = vmatpush1.msra.mxu0 0.0
      %870 = vmatprep.subr.mxu0 0.0
      %871 = vmatpush1.msra.mxu0 0.0
      %872 = vmatprep.subr.mxu0 0.0
      %873 = vmatpush1.msra.mxu0 0.0
      %874 = vmatprep.subr.mxu0 0.0
      %875 = vmatpush1.msra.mxu0 0.0
      %876 = vmatprep.subr.mxu0 0.0
      %877 = vmatpush1.msra.mxu0 0.0
      %878 = vmatprep.subr.mxu0 0.0
      %879 = vmatpush1.msra.mxu0 0.0
      %880 = vmatprep.subr.mxu0 0.0
      %881 = vmatpush1.msra.mxu0 0.0
      %882 = vmatprep.subr.mxu0 0.0
      %883 = vmatpush1.msra.mxu0 0.0
      %884 = vmatprep.subr.mxu0 0.0
      %885 = vmatpush1.msra.mxu0 0.0
      %886 = vmatprep.subr.mxu0 0.0
      %887 = vmatpush1.msra.mxu0 0.0
      %888 = vmatprep.subr.mxu0 0.0
      %889 = vmatpush1.msra.mxu0 0.0
      %890 = vmatprep.subr.mxu0 0.0
      %891 = vmatpush1.msra.mxu0 0.0
      %892 = vmatprep.subr.mxu0 0.0
      %893 = vmatpush1.msra.mxu0 0.0
      %894 = vmatprep.subr.mxu0 0.0
      %895 = vmatpush1.msra.mxu0 0.0
      %896 = vmatprep.subr.mxu0 0.0
      %897 = vmatpush1.msra.mxu0 0.0
      %898 = vmatprep.mubr.f32.mxu0 0.0
      %899 = vmatmul.mubr.f32.gmra.mrb[0].mxu0 %v355
      %v900 = vpop.f32.mrb[0].mxu0
      %v901 = vadd.f32 0.0, %v900
      %v902 = vpop.f32.mrb[0].mxu0
      %903 = vmatprep.mubr.f32.mxu0 0.0
      %904 = vmatmul.mubr.f32.gmra.mrb[0].mxu0 %v358
      %v905 = vpop.f32.mrb[0].mxu0
      %v906 = vadd.f32 0.0, %v905
      %v907 = vpop.f32.mrb[0].mxu0
      %908 = vdwg.mxu0
      %v910 = vsel %vm353, %v901, 0
      %v913 = vsel %vm353, %v906, 0
      %915 = vmatprep.subr.mxu0 0.0
      %916 = vmatpush1.msra.mxu0 %v349
      %917 = vmatprep.subr.mxu0 0.0
      %918 = vmatpush1.msra.mxu0 0.0
      %919 = vmatprep.subr.mxu0 0.0
      %920 = vmatpush1.msra.mxu0 0.0
      %921 = vmatprep.subr.mxu0 0.0
      %922 = vmatpush1.msra.mxu0 0.0
      %923 = vmatprep.subr.mxu0 0.0
      %924 = vmatpush1.msra.mxu0 0.0
      %925 = vmatprep.subr.mxu0 0.0
      %926 = vmatpush1.msra.mxu0 0.0
      %927 = vmatprep.subr.mxu0 0.0
      %928 = vmatpush1.msra.mxu0 0.0
      %929 = vmatprep.subr.mxu0 0.0
      %930 = vmatpush1.msra.mxu0 0.0
      %931 = vmatprep.subr.mxu0 0.0
      %932 = vmatpush1.msra.mxu0 0.0
      %933 = vmatprep.subr.mxu0 0.0
      %934 = vmatpush1.msra.mxu0 0.0
      %935 = vmatprep.subr.mxu0 0.0
      %936 = vmatpush1.msra.mxu0 0.0
      %937 = vmatprep.subr.mxu0 0.0
      %938 = vmatpush1.msra.mxu0 0.0
      %939 = vmatprep.subr.mxu0 0.0
      %940 = vmatpush1.msra.mxu0 0.0
      %941 = vmatprep.subr.mxu0 0.0
      %942 = vmatpush1.msra.mxu0 0.0
      %943 = vmatprep.subr.mxu0 0.0
      %944 = vmatpush1.msra.mxu0 0.0
      %945 = vmatprep.subr.mxu0 0.0
      %946 = vmatpush1.msra.mxu0 0.0
      %947 = vmatprep.subr.mxu0 0.0
      %948 = vmatpush1.msra.mxu0 0.0
      %949 = vmatprep.subr.mxu0 0.0
      %950 = vmatpush1.msra.mxu0 0.0
      %951 = vmatprep.subr.mxu0 0.0
      %952 = vmatpush1.msra.mxu0 0.0
      %953 = vmatprep.subr.mxu0 0.0
      %954 = vmatpush1.msra.mxu0 0.0
      %955 = vmatprep.subr.mxu0 0.0
      %956 = vmatpush1.msra.mxu0 0.0
      %957 = vmatprep.subr.mxu0 0.0
      %958 = vmatpush1.msra.mxu0 0.0
      %959 = vmatprep.subr.mxu0 0.0
      %960 = vmatpush1.msra.mxu0 0.0
      %961 = vmatprep.subr.mxu0 0.0
      %962 = vmatpush1.msra.mxu0 0.0
      %963 = vmatprep.subr.mxu0 0.0
      %964 = vmatpush1.msra.mxu0 0.0
      %965 = vmatprep.subr.mxu0 0.0
      %966 = vmatpush1.msra.mxu0 0.0
      %967 = vmatprep.subr.mxu0 0.0
      %968 = vmatpush1.msra.mxu0 0.0
      %969 = vmatprep.subr.mxu0 0.0
      %970 = vmatpush1.msra.mxu0 0.0
      %971 = vmatprep.subr.mxu0 0.0
      %972 = vmatpush1.msra.mxu0 0.0
      %973 = vmatprep.subr.mxu0 0.0
      %974 = vmatpush1.msra.mxu0 0.0
      %975 = vmatprep.subr.mxu0 0.0
      %976 = vmatpush1.msra.mxu0 0.0
      %977 = vmatprep.subr.mxu0 0.0
      %978 = vmatpush1.msra.mxu0 0.0
      %979 = vmatprep.mubr.f32.mxu0 0.0
      %980 = vmatmul.mubr.f32.gmra.mrb[0].mxu0 %v910
      %v981 = vpop.f32.mrb[0].mxu0
      %v982 = vadd.f32 0.0, %v981
      %v983 = vpop.f32.mrb[0].mxu0
      %984 = vmatprep.mubr.f32.mxu0 0.0
      %985 = vmatmul.mubr.f32.gmra.mrb[0].mxu0 %v913
      %v986 = vpop.f32.mrb[0].mxu0
      %v987 = vadd.f32 0.0, %v986
      %v988 = vpop.f32.mrb[0].mxu0
      %989 = vdwg.mxu0
      %v990 = vmax.f32 %v508, %v666
      %v991 = vmax.f32 %v513, %v671
      %v992 = vmax.f32 %v990, %v824
      %v993 = vmax.f32 %v991, %v829
      %v994 = vmax.f32 %v992, %v982
      %v995 = vmax.f32 %v993, %v987
      %v996 = vsub.f32 %v508, %v994
      %v997 = vsub.f32 %v513, %v995
      %v998 = vmul.f32 %v996, 1.442695
      %v999 = vpow.pop %v998
      %v1000 = vmul.f32 %v997, 1.442695
      %v1001 = vpow.pop %v1000
      %v1002 = vsub.f32 %v666, %v994
      %v1003 = vsub.f32 %v671, %v995
      %v1004 = vmul.f32 %v1002, 1.442695
      %v1005 = vpow.pop %v1004
      %v1006 = vmul.f32 %v1003, 1.442695
      %v1007 = vpow.pop %v1006
      %v1008 = vsub.f32 %v824, %v994
      %v1009 = vsub.f32 %v829, %v995
      %v1010 = vmul.f32 %v1008, 1.442695
      %v1011 = vpow.pop %v1010
      %v1012 = vmul.f32 %v1009, 1.442695
      %v1013 = vpow.pop %v1012
      %v1014 = vsub.f32 %v982, %v994
      %v1015 = vsub.f32 %v987, %v995
      %v1016 = vmul.f32 %v1014, 1.442695
      %v1017 = vpow.pop %v1016
      %v1018 = vmul.f32 %v1015, 1.442695
      %v1019 = vpow.pop %v1018
      %v1020 = vadd.f32 %v999, %v1005
      %v1021 = vadd.f32 %v1001, %v1007
      %v1022 = vadd.f32 %v1020, %v1011
      %v1023 = vadd.f32 %v1021, %v1013
      %v1024 = vadd.f32 %v1022, %v1017
      %v1025 = vadd.f32 %v1023, %v1019
      %v1026 = vrcp.pop %v1024
      %v1027 = vrcp.pop %v1025
      %v1028 = vlog2.pop %v1024
      %v1029 = vmul.f32 %v1028, 0.6931472
      %v1030 = vlog2.pop %v1025
      %v1031 = vmul.f32 %v1030, 0.6931472
      %vm1032 = vcmp.eq.s32.totalorder %v350, 0
      %vm1033 = vcmp.eq.s32.totalorder %v351, 0
      %v1034 = vsel %vm1032, %v508, 0.0
      %v1035 = vsel %vm1033, %v513, 0.0
      %vm1036 = vcmp.eq.s32.totalorder %v350, 1
      %vm1037 = vcmp.eq.s32.totalorder %v351, 1
      %v1038 = vsel %vm1036, %v666, %v1034
      %v1039 = vsel %vm1037, %v671, %v1035
      %vm1040 = vcmp.eq.s32.totalorder %v350, 2
      %vm1041 = vcmp.eq.s32.totalorder %v351, 2
      %v1042 = vsel %vm1040, %v824, %v1038
      %v1043 = vsel %vm1041, %v829, %v1039
      %vm1044 = vcmp.eq.s32.totalorder %v350, 3
      %vm1045 = vcmp.eq.s32.totalorder %v351, 3
      %v1046 = vsel %vm1044, %v982, %v1042
      %v1047 = vsel %vm1045, %v987, %v1043
      %v1048 = vadd.f32 %v1029, %v994
      %v1049 = vadd.f32 %v1031, %v995
      %v1050 = vsub.f32 %v1048, %v1046
      %v1051 = vsub.f32 %v1049, %v1047
      %v1052 = vmul.f32 %v999, %v1026
      %v1053 = vmul.f32 %v1001, %v1027
      %v1054 = vmul.f32 %v1005, %v1026
      %v1055 = vmul.f32 %v1007, %v1027
      %v1056 = vmul.f32 %v1011, %v1026
      %v1057 = vmul.f32 %v1013, %v1027
      %v1058 = vmul.f32 %v1017, %v1026
      %v1059 = vmul.f32 %v1019, %v1027
      %vm1060 = vcmask 130048
      %v1061 = vsel %vm1060, %v1050, 0.0
      %v1062 = vsel %vm1060, %v1051, 0.0
      %v1063 = vadd.f32 %v1061, %v1062
      %v1064 = vrot.slane %v1063, 4
      %v1065 = vadd.f32 %v1063, %v1064
      %v1066 = vrot.slane %v1065, 2
      %v1067 = vadd.f32 %v1065, %v1066
      %v1068 = vrot.slane %v1067, 1
      %v1069 = vadd.f32 %v1067, %v1068
      %v1070 = vsel %vm1032, 1, 0
      %v1071 = vsel %vm1033, 1, 0
      %v1072 = vcvt.s32.f32 %v1070
      %v1073 = vcvt.s32.f32 %v1071
      %v1074 = vmul.f32 %v1052, %v1072
      %v1075 = vmul.f32 %v1053, %v1073
      %v1076 = vsel %vm1060, %v1074, 0.0
      %v1077 = vsel %vm1060, %v1075, 0.0
      %v1078 = vadd.f32 %v1076, %v1077
      %v1079 = vrot.slane %v1078, 4
      %v1080 = vadd.f32 %v1078, %v1079
      %v1081 = vrot.slane %v1080, 2
      %v1082 = vadd.f32 %v1080, %v1081
      %v1083 = vrot.slane %v1082, 1
      %v1084 = vadd.f32 %v1082, %v1083
      %v1085 = vsel %vm1036, 1, 0
      %v1086 = vsel %vm1037, 1, 0
      %v1087 = vcvt.s32.f32 %v1085
      %v1088 = vcvt.s32.f32 %v1086
      %v1089 = vmul.f32 %v1054, %v1087
      %v1090 = vmul.f32 %v1055, %v1088
      %v1091 = vsel %vm1060, %v1089, 0.0
      %v1092 = vsel %vm1060, %v1090, 0.0
      %v1093 = vadd.f32 %v1091, %v1092
      %v1094 = vrot.slane %v1093, 4
      %v1095 = vadd.f32 %v1093, %v1094
      %v1096 = vrot.slane %v1095, 2
      %v1097 = vadd.f32 %v1095, %v1096
      %v1098 = vrot.slane %v1097, 1
      %v1099 = vadd.f32 %v1097, %v1098
      %v1100 = vsel %vm1040, 1, 0
      %v1101 = vsel %vm1041, 1, 0
      %v1102 = vcvt.s32.f32 %v1100
      %v1103 = vcvt.s32.f32 %v1101
      %v1104 = vmul.f32 %v1056, %v1102
      %v1105 = vmul.f32 %v1057, %v1103
      %v1106 = vsel %vm1060, %v1104, 0.0
      %v1107 = vsel %vm1060, %v1105, 0.0
      %v1108 = vadd.f32 %v1106, %v1107
      %v1109 = vrot.slane %v1108, 4
      %v1110 = vadd.f32 %v1108, %v1109
      %v1111 = vrot.slane %v1110, 2
      %v1112 = vadd.f32 %v1110, %v1111
      %v1113 = vrot.slane %v1112, 1
      %v1114 = vadd.f32 %v1112, %v1113
      %v1115 = vsel %vm1044, 1, 0
      %v1116 = vsel %vm1045, 1, 0
      %v1117 = vcvt.s32.f32 %v1115
      %v1118 = vcvt.s32.f32 %v1116
      %v1119 = vmul.f32 %v1058, %v1117
      %v1120 = vmul.f32 %v1059, %v1118
      %v1121 = vsel %vm1060, %v1119, 0.0
      %v1122 = vsel %vm1060, %v1120, 0.0
      %v1123 = vadd.f32 %v1121, %v1122
      %v1124 = vrot.slane %v1123, 4
      %v1125 = vadd.f32 %v1123, %v1124
      %v1126 = vrot.slane %v1125, 2
      %v1127 = vadd.f32 %v1125, %v1126
      %v1128 = vrot.slane %v1127, 1
      %v1129 = vadd.f32 %v1127, %v1128
      %v1130 = vmul.f32 %v1052, %v1052
      %v1131 = vmul.f32 %v1053, %v1053
      %v1132 = vsel %vm1060, %v1130, 0.0
      %v1133 = vsel %vm1060, %v1131, 0.0
      %v1134 = vadd.f32 %v1132, %v1133
      %v1135 = vrot.slane %v1134, 4
      %v1136 = vadd.f32 %v1134, %v1135
      %v1137 = vrot.slane %v1136, 2
      %v1138 = vadd.f32 %v1136, %v1137
      %v1139 = vrot.slane %v1138, 1
      %v1140 = vadd.f32 %v1138, %v1139
      %v1141 = vmul.f32 %v1054, %v1054
      %v1142 = vmul.f32 %v1055, %v1055
      %v1143 = vsel %vm1060, %v1141, 0.0
      %v1144 = vsel %vm1060, %v1142, 0.0
      %v1145 = vadd.f32 %v1143, %v1144
      %v1146 = vrot.slane %v1145, 4
      %v1147 = vadd.f32 %v1145, %v1146
      %v1148 = vrot.slane %v1147, 2
      %v1149 = vadd.f32 %v1147, %v1148
      %v1150 = vrot.slane %v1149, 1
      %v1151 = vadd.f32 %v1149, %v1150
      %v1152 = vmul.f32 %v1056, %v1056
      %v1153 = vmul.f32 %v1057, %v1057
      %v1154 = vsel %vm1060, %v1152, 0.0
      %v1155 = vsel %vm1060, %v1153, 0.0
      %v1156 = vadd.f32 %v1154, %v1155
      %v1157 = vrot.slane %v1156, 4
      %v1158 = vadd.f32 %v1156, %v1157
      %v1159 = vrot.slane %v1158, 2
      %v1160 = vadd.f32 %v1158, %v1159
      %v1161 = vrot.slane %v1160, 1
      %v1162 = vadd.f32 %v1160, %v1161
      %v1163 = vmul.f32 %v1058, %v1058
      %v1164 = vmul.f32 %v1059, %v1059
      %v1165 = vsel %vm1060, %v1163, 0.0
      %v1166 = vsel %vm1060, %v1164, 0.0
      %v1167 = vadd.f32 %v1165, %v1166
      %v1168 = vrot.slane %v1167, 4
      %v1169 = vadd.f32 %v1167, %v1168
      %v1170 = vrot.slane %v1169, 2
      %v1171 = vadd.f32 %v1169, %v1170
      %v1172 = vrot.slane %v1171, 1
      %v1173 = vadd.f32 %v1171, %v1172
      %v1174 = vld [vmem:[#allocation2] sm:$0xff]
      %v1175 = vld [vmem:[#allocation2 + $0x8] sm:$0x1]
      %vm1176 = vcmask 1040384
      %v1177 = vsel %vm1176, %v1069, %v1084
      %vm1178 = vcmask 1041408
      %v1179 = vsel %vm1178, %v1177, %v1099
      %vm1180 = vcmask 1042432
      %v1181 = vsel %vm1180, %v1179, %v1114
      %vm1182 = vcmask 1043456
      %v1183 = vsel %vm1182, %v1181, %v1129
      %vm1184 = vcmask 1044480
      %v1185 = vsel %vm1184, %v1183, %v1140
      %vm1186 = vcmask 1045504
      %v1187 = vsel %vm1186, %v1185, %v1151
      %vm1188 = vcmask 1046528
      %v1189 = vsel %vm1188, %v1187, %v1162
      %v1190 = vadd.f32 %v1174, %v1189
      %v1191 = vadd.f32 %v1175, %v1173
      %1192 = vst.msk [vmem:[#allocation2] sm:$0xff] %vm1060, %v1190
      %vm1193 = vcmask 122880
      %1194 = vst.msk [vmem:[#allocation2 + $0x8] sm:$0x1] %vm1193, %v1191
      // Predicated region
      $region41: #{aux_loss.2} parent=35 // pred_check
        %p1195 = pneg %p339
      $region42: #{aux_loss.2} parent=35 // pred_check_branch
        %1197 = sbr.rel (%p1195) target = $region44
      $region43: #{aux_loss.2} parent=35 // pred_region
        %v1198 = vld [vmem:[#allocation2] sm:$0xff]
        %v1199 = vld [vmem:[#allocation2 + $0x8] sm:$0x1]
        %v1200 = vsel %vm1060, %v1198, 0.0
        %1201 = vadd.xlane.f32.xlu0 %v1200
        %v1202 = vpop.xlane.xlu0 %1201
        %v1203 = vsel %vm1193, %v1199, 0.0
        %1204 = vadd.xlane.f32.xlu0 %v1203
        %v1205 = vpop.xlane.xlu0 %1204
        %vm1206 = vcmask 0
        %1207 = vst.msk [vmem:[%s330] sm:$0x1] %vm1206, %v1202
        %vm1208 = vcmask 4097
        %1209 = vst.msk [vmem:[%s334 - $0x1] sm:$0x1e] %vm1208, %v1202
        %vm1210 = vcmask 7173
        %1211 = vst.msk [vmem:[%s338 - $0x5] sm:$0xe0] %vm1210, %v1202
        %1212 = vst.msk [vmem:[%s338 + $0x3] sm:$0x1] %vm1206, %v1205
      $region44: #{aux_loss.2} parent=35 // pred_fallthru
        _
      %p1213 = scmp.lt.s32.totalorder %s22, 1
      %s1214 = scalar_select %p1213, %s22, 1
      %s1215 = scalar_lea.vmem %s4, %s1214
      %p1216 = scmp.lt.s32.totalorder %s22, 1
      %s1217 = scalar_select %p1216, %s22, 1
      %s1218 = smul.addr %s1217, 4
      %s1219 = scalar_lea.vmem %s5, %s1218
      %p1220 = scmp.lt.s32.totalorder %s22, 1
      %s1221 = scalar_select %p1220, %s22, 1
      %s1222 = smul.addr %s1221, 4
      %s1223 = scalar_lea.vmem %s6, %s1222
      // Predicated region
      $region45: #{aux_loss.2} parent=35 // pred_check
        %p1224 = pneg %p149
      $region46: #{aux_loss.2} parent=35 // pred_check_branch
        %1226 = sbr.rel (%p1224) target = $region48
      $region47: #{aux_loss.2} parent=35 // pred_region
        _
      $region48: #{aux_loss.2} parent=35 // pred_fallthru
        _
      // Predicated region
      $region49: #{aux_loss.2} parent=35 // pred_check
        %p1227 = pneg %p175
      $region50: #{aux_loss.2} parent=35 // pred_check_branch
        %1229 = sbr.rel (%p1227) target = $region52
      $region51: #{aux_loss.2} parent=35 // pred_region
        _
      $region52: #{aux_loss.2} parent=35 // pred_fallthru
        _
      // Predicated region
      $region53: #{aux_loss.2} parent=35 // pred_check
        %p1230 = pneg %p201
      $region54: #{aux_loss.2} parent=35 // pred_check_branch
        %1232 = sbr.rel (%p1230) target = $region56
      $region55: #{aux_loss.2} parent=35 // pred_region
        _
      $region56: #{aux_loss.2} parent=35 // pred_fallthru
        _
    $region36: #{aux_loss.2} parent=5 // pred_fallthru
      _
    %p1233 = scmp.le.s32.totalorder 2, %s13
    // Predicated region
    $region57: #{aux_loss.2} parent=5 // pred_check
      %p1234 = pneg %p1233
    $region58: #{aux_loss.2} parent=5 // pred_check_branch
      %1236 = sbr.rel (%p1234) target = $region60
    $region59: #{aux_loss.2} parent=5 // pred_region
      %s1237 = ssub.s32 %s13, 2
      // Predicated region
      $region61: #{aux_loss.2} parent=59 // pred_check
        %p1238 = pneg %p155
      $region62: #{aux_loss.2} parent=59 // pred_check_branch
        %1240 = sbr.rel (%p1238) target = $region64
      $region63: #{aux_loss.2} parent=59 // pred_region
        %p1241 = scmp.lt.s32.totalorder %s24, 1
        %s1242 = scalar_select %p1241, %s24, 1
        %s1243 = scalar_lea.vmem %s4, %s1242
      $region64: #{aux_loss.2} parent=59 // pred_fallthru
        _
      // Predicated region
      $region65: #{aux_loss.2} parent=59 // pred_check
        %p1244 = pneg %p181
      $region66: #{aux_loss.2} parent=59 // pred_check_branch
        %1246 = sbr.rel (%p1244) target = $region68
      $region67: #{aux_loss.2} parent=59 // pred_region
        %p1247 = scmp.lt.s32.totalorder %s24, 1
        %s1248 = scalar_select %p1247, %s24, 1
        %s1249 = smul.addr %s1248, 4
        %s1250 = scalar_lea.vmem %s5, %s1249
      $region68: #{aux_loss.2} parent=59 // pred_fallthru
        _
      // Predicated region
      $region69: #{aux_loss.2} parent=59 // pred_check
        %p1251 = pneg %p207
      $region70: #{aux_loss.2} parent=59 // pred_check_branch
        %1253 = sbr.rel (%p1251) target = $region72
      $region71: #{aux_loss.2} parent=59 // pred_region
        %p1254 = scmp.lt.s32.totalorder %s24, 1
        %s1255 = scalar_select %p1254, %s24, 1
        %s1256 = smul.addr %s1255, 4
        %s1257 = scalar_lea.vmem %s6, %s1256
      $region72: #{aux_loss.2} parent=59 // pred_fallthru
        _
    $region60: #{aux_loss.2} parent=5 // pred_fallthru
      _
  $region6: #{aux_loss.2} parent=0 // loop_footer
    %s17 = sadd.s32 1, %s13
  $region7: #{aux_loss.2} parent=0 // loop_footer_branch
    %12 = sbr.rel target = $region3
  $region8: #{aux_loss.2} parent=0 // loop_exit
    _

// kernel: aux_loss.3
$region0: #{aux_loss.3}
  #allocation0 [shape = 'u32[]', space=smem, size = 0x4, offset = 0x4, fixed_abs, tag = 'smem constant byte address 0x4 - core index']
  #allocation1 [shape = 'u32[144,128]{1,0:T(1,128)}', space=vmem, size = 0x12000, scoped, tag = 'internal scratch']
  #allocation2 [shape = 'f32[9,16]{1,0:T(8,128)}', space=vmem, size = 0x2000, scoped, tag = 'scratch operand']
  %s0 = inlined_call_operand.vmem [shape: f32[2,4,16,16], index: 0, kind: input, shape index: {}]
  %s1 = inlined_call_operand.vmem [shape: f32[16,16], index: 1, kind: input, shape index: {}]
  %s2 = inlined_call_operand.vmem [shape: f32[16,16], index: 2, kind: input, shape index: {}]
  %s3 = inlined_call_operand.vmem [shape: s32[2,16,16], index: 3, kind: input, shape index: {}]
  %s4 = inlined_call_operand.vmem [shape: f32[2,1,1], index: 4, kind: output, shape index: {0}]
  %s5 = inlined_call_operand.vmem [shape: f32[2,4,1], index: 5, kind: output, shape index: {1}]
  %s6 = inlined_call_operand.vmem [shape: f32[2,4,1], index: 6, kind: output, shape index: {2}]
  %7 = xla_tuple %s4, %s5, %s6
  %s8 = sld [smem:[#allocation0]]
  $region73: #{aux_loss.3} parent=0
    _
  %s10 = ssub.s32 1, %s8
  %s11 = scalar_select 0, %s10, %s8
  loop: start=0, step=1, limit=4
  $region2: #{aux_loss.3} parent=0 // loop_pre_header
    _
  $region3: #{aux_loss.3} parent=0 // loop_header
    %s13 = sphi 0, %s17
    %p14 = scmp.ge.s32.totalorder %s13, 4
    %s20 = sphi 0, %s32
    %s21 = sphi 0, %s28
    %s22 = sphi 0, %s20
    %s23 = sphi 0, %s21
    %s24 = sphi 0, %s22
    %s25 = sphi 0, %s23
    %s35 = sphi 0, %s37
    %s38 = sphi 0, %s35
    %s39 = sphi 0, %s38
    %s55 = sphi 0, %s39
    %s61 = sphi 0, %s63
    %s64 = sphi 0, %s61
    %s65 = sphi 0, %s64
    %s81 = sphi 0, %s65
    %s85 = sphi 0, %s85
    %s87 = sphi 0, %s85
    %s88 = sphi 0, %s87
    %s102 = sphi 0, %s88
    %s110 = sphi 0, %s112
    %s113 = sphi 0, %s110
    %s114 = sphi 0, %s113
    %s130 = sphi 0, %s114
    %s136 = sphi 0, %s138
    %s139 = sphi 0, %s136
    %s140 = sphi 0, %s139
    %s156 = sphi 0, %s140
    %s162 = sphi 0, %s164
    %s165 = sphi 0, %s162
    %s166 = sphi 0, %s165
    %s182 = sphi 0, %s166
    %s188 = sphi 0, %s190
    %s191 = sphi 0, %s188
    %s192 = sphi 0, %s191
    %s208 = sphi 0, %s192
  $region4: #{aux_loss.3} parent=0 // loop_header_branch
    %16 = sbr.rel (%p14) target = $region8
  $region5: #{aux_loss.3} parent=0 // loop_body
    %s18 = ssub.s32 %s13, 1
    %s19 = ssub.s32 %s13, 2
    %s26 = sadd.s32 1, %s21
    %p27 = scmp.ge.s32.totalorder %s26, 1
    %s28 = scalar_select %p27, 0, %s26
    %s29 = sadd.s32 1, %s20
    %s30 = scalar_select %p27, %s29, %s20
    %p31 = scmp.ge.s32.totalorder %s30, 2
    %s32 = scalar_select %p31, 0, %s30
    %s33 = ssub.s32 %s20, %s32
    %p34 = scmp.eq.s32.totalorder %s33, 0
    %s36 = sadd.s32 %s35, 1
    %s37 = scalar_select %p34, %s35, %s36
    %p40 = pneg %p34
    %p41 = scmp.eq.s32.totalorder %s13, 1
    %p42 = por %p40, %p41
    %p43 = scmp.ne.s32.totalorder %s35, %s38
    %p44 = scmp.eq.s32.totalorder %s13, 0
    %p45 = por %p43, %p44
    %p46 = scmp.ne.s32.totalorder %s35, %s38
    %p47 = scmp.eq.s32.totalorder %s18, 1
    %p48 = por %p46, %p47
    %p49 = scmp.ne.s32.totalorder %s38, %s39
    %p50 = scmp.eq.s32.totalorder %s18, 0
    %p51 = por %p49, %p50
    %p52 = scmp.ne.s32.totalorder %s38, %s39
    %p53 = scmp.eq.s32.totalorder %s19, 1
    %p54 = por %p52, %p53
    %p56 = scmp.ne.s32.totalorder %s39, %s55
    %p57 = scmp.eq.s32.totalorder %s19, 0
    %p58 = por %p56, %p57
    %s59 = ssub.s32 %s21, %s28
    %p60 = scmp.eq.s32.totalorder %s59, 0
    %s62 = sadd.s32 %s61, 1
    %s63 = scalar_select %p60, %s61, %s62
    %p66 = pneg %p60
    %p67 = scmp.eq.s32.totalorder %s13, 1
    %p68 = por %p66, %p67
    %p69 = scmp.ne.s32.totalorder %s61, %s64
    %p70 = scmp.eq.s32.totalorder %s13, 0
    %p71 = por %p69, %p70
    %p72 = scmp.ne.s32.totalorder %s61, %s64
    %p73 = scmp.eq.s32.totalorder %s18, 1
    %p74 = por %p72, %p73
    %p75 = scmp.ne.s32.totalorder %s64, %s65
    %p76 = scmp.eq.s32.totalorder %s18, 0
    %p77 = por %p75, %p76
    %p78 = scmp.ne.s32.totalorder %s64, %s65
    %p79 = scmp.eq.s32.totalorder %s19, 1
    %p80 = por %p78, %p79
    %p82 = scmp.ne.s32.totalorder %s65, %s81
    %p83 = scmp.eq.s32.totalorder %s19, 0
    %p84 = por %p82, %p83
    %s86 = sadd.s32 %s85, 1
    %p89 = scmp.eq.s32.totalorder %s13, 1
    %p90 = scmp.ne.s32.totalorder %s85, %s87
    %p91 = scmp.eq.s32.totalorder %s13, 0
    %p92 = por %p90, %p91
    %p93 = scmp.ne.s32.totalorder %s85, %s87
    %p94 = scmp.eq.s32.totalorder %s18, 1
    %p95 = por %p93, %p94
    %p96 = scmp.ne.s32.totalorder %s87, %s88
    %p97 = scmp.eq.s32.totalorder %s18, 0
    %p98 = por %p96, %p97
    %p99 = scmp.ne.s32.totalorder %s87, %s88
    %p100 = scmp.eq.s32.totalorder %s19, 1
    %p101 = por %p99, %p100
    %p103 = scmp.ne.s32.totalorder %s88, %s102
    %p104 = scmp.eq.s32.totalorder %s19, 0
    %p105 = por %p103, %p104
    %s106 = ssub.s32 %s20, %s32
    %s107 = ssub.s32 %s21, %s28
    %s108 = sor.u32 %s106, %s107
    %p109 = scmp.eq.s32.totalorder %s108, 0
    %s111 = sadd.s32 %s110, 1
    %s112 = scalar_select %p109, %s110, %s111
    %p115 = pneg %p109
    %p116 = scmp.eq.s32.totalorder %s13, 1
    %p117 = por %p115, %p116
    %p118 = scmp.ne.s32.totalorder %s110, %s113
    %p119 = scmp.eq.s32.totalorder %s13, 0
    %p120 = por %p118, %p119
    %p121 = scmp.ne.s32.totalorder %s110, %s113
    %p122 = scmp.eq.s32.totalorder %s18, 1
    %p123 = por %p121, %p122
    %p124 = scmp.ne.s32.totalorder %s113, %s114
    %p125 = scmp.eq.s32.totalorder %s18, 0
    %p126 = por %p124, %p125
    %p127 = scmp.ne.s32.totalorder %s113, %s114
    %p128 = scmp.eq.s32.totalorder %s19, 1
    %p129 = por %p127, %p128
    %p131 = scmp.ne.s32.totalorder %s114, %s130
    %p132 = scmp.eq.s32.totalorder %s19, 0
    %p133 = por %p131, %p132
    %s134 = ssub.s32 %s20, %s32
    %p135 = scmp.eq.s32.totalorder %s134, 0
    %s137 = sadd.s32 %s136, 1
    %s138 = scalar_select %p135, %s136, %s137
    %p141 = pneg %p135
    %p142 = scmp.eq.s32.totalorder %s13, 1
    %p143 = por %p141, %p142
    %p144 = scmp.ne.s32.totalorder %s136, %s139
    %p145 = scmp.eq.s32.totalorder %s13, 0
    %p146 = por %p144, %p145
    %p147 = scmp.ne.s32.totalorder %s136, %s139
    %p148 = scmp.eq.s32.totalorder %s18, 1
    %p149 = por %p147, %p148
    %p150 = scmp.ne.s32.totalorder %s139, %s140
    %p151 = scmp.eq.s32.totalorder %s18, 0
    %p152 = por %p150, %p151
    %p153 = scmp.ne.s32.totalorder %s139, %s140
    %p154 = scmp.eq.s32.totalorder %s19, 1
    %p155 = por %p153, %p154
    %p157 = scmp.ne.s32.totalorder %s140, %s156
    %p158 = scmp.eq.s32.totalorder %s19, 0
    %p159 = por %p157, %p158
    %s160 = ssub.s32 %s20, %s32
    %p161 = scmp.eq.s32.totalorder %s160, 0
    %s163 = sadd.s32 %s162, 1
    %s164 = scalar_select %p161, %s162, %s163
    %p167 = pneg %p161
    %p168 = scmp.eq.s32.totalorder %s13, 1
    %p169 = por %p167, %p168
    %p170 = scmp.ne.s32.totalorder %s162, %s165
    %p171 = scmp.eq.s32.totalorder %s13, 0
    %p172 = por %p170, %p171
    %p173 = scmp.ne.s32.totalorder %s162, %s165
    %p174 = scmp.eq.s32.totalorder %s18, 1
    %p175 = por %p173, %p174
    %p176 = scmp.ne.s32.totalorder %s165, %s166
    %p177 = scmp.eq.s32.totalorder %s18, 0
    %p178 = por %p176, %p177
    %p179 = scmp.ne.s32.totalorder %s165, %s166
    %p180 = scmp.eq.s32.totalorder %s19, 1
    %p181 = por %p179, %p180
    %p183 = scmp.ne.s32.totalorder %s166, %s182
    %p184 = scmp.eq.s32.totalorder %s19, 0
    %p185 = por %p183, %p184
    %s186 = ssub.s32 %s20, %s32
    %p187 = scmp.eq.s32.totalorder %s186, 0
    %s189 = sadd.s32 %s188, 1
    %s190 = scalar_select %p187, %s188, %s189
    %p193 = pneg %p187
    %p194 = scmp.eq.s32.totalorder %s13, 1
    %p195 = por %p193, %p194
    %p196 = scmp.ne.s32.totalorder %s188, %s191
    %p197 = scmp.eq.s32.totalorder %s13, 0
    %p198 = por %p196, %p197
    %p199 = scmp.ne.s32.totalorder %s188, %s191
    %p200 = scmp.eq.s32.totalorder %s18, 1
    %p201 = por %p199, %p200
    %p202 = scmp.ne.s32.totalorder %s191, %s192
    %p203 = scmp.eq.s32.totalorder %s18, 0
    %p204 = por %p202, %p203
    %p205 = scmp.ne.s32.totalorder %s191, %s192
    %p206 = scmp.eq.s32.totalorder %s19, 1
    %p207 = por %p205, %p206
    %p209 = scmp.ne.s32.totalorder %s192, %s208
    %p210 = scmp.eq.s32.totalorder %s19, 0
    %p211 = por %p209, %p210
    %p212 = scmp.le.s32.totalorder 1, %s13
    %p213 = scmp.lt.s32.totalorder %s13, 3
    %p214 = pnand %p212, %p213
    %p215 = pneg %p214
    // Predicated region
    $region9: #{aux_loss.3} parent=5 // pred_check
      _
    $region10: #{aux_loss.3} parent=5 // pred_check_branch
      %217 = sbr.rel (%p214) target = $region12
    $region11: #{aux_loss.3} parent=5 // pred_region
      %s218 = ssub.s32 %s13, 1
      // Predicated region
      $region13: #{aux_loss.3} parent=11 // pred_check
        %p219 = pneg %p77
      $region14: #{aux_loss.3} parent=11 // pred_check_branch
        %221 = sbr.rel (%p219) target = $region16
      $region15: #{aux_loss.3} parent=11 // pred_region
        %s222 = smul.u32 2, %s23
        %p223 = scmp.lt.s32.totalorder %s222, 1
        %s224 = scalar_select %p223, %s222, 1
        %s225 = smul.addr %s224, 8
        %s226 = scalar_lea.vmem %s1, %s225
        %s227 = smul.u32 2, %s23
      $region16: #{aux_loss.3} parent=11 // pred_fallthru
        _
      // Predicated region
      $region17: #{aux_loss.3} parent=11 // pred_check
        %p228 = pneg %p98
      $region18: #{aux_loss.3} parent=11 // pred_check_branch
        %230 = sbr.rel (%p228) target = $region20
      $region19: #{aux_loss.3} parent=11 // pred_region
        _
      $region20: #{aux_loss.3} parent=11 // pred_fallthru
        _
    $region12: #{aux_loss.3} parent=5 // pred_fallthru
      _
    %p231 = scmp.lt.s32.totalorder %s13, 2
    // Predicated region
    $region21: #{aux_loss.3} parent=5 // pred_check
      %p232 = pneg %p231
    $region22: #{aux_loss.3} parent=5 // pred_check_branch
      %234 = sbr.rel (%p232) target = $region24
    $region23: #{aux_loss.3} parent=5 // pred_region
      // Predicated region
      $region25: #{aux_loss.3} parent=23 // pred_check
        %p235 = pneg %p45
      $region26: #{aux_loss.3} parent=23 // pred_check_branch
        %237 = sbr.rel (%p235) target = $region28
      $region27: #{aux_loss.3} parent=23 // pred_region
        %p238 = scmp.lt.s32.totalorder %s20, 1
        %s239 = scalar_select %p238, %s20, 1
        %s240 = smul.addr %s239, 8
        %s241 = smul.addr %s240, 8
        %s242 = scalar_lea.vmem %s0, %s241
      $region28: #{aux_loss.3} parent=23 // pred_fallthru
        _
      // Predicated region
      $region29: #{aux_loss.3} parent=23 // pred_check
        %p243 = pneg %p120
      $region30: #{aux_loss.3} parent=23 // pred_check_branch
        %245 = sbr.rel (%p243) target = $region32
      $region31: #{aux_loss.3} parent=23 // pred_region
        %s246 = smul.u32 2, %s21
        %p247 = scmp.lt.s32.totalorder %s20, 1
        %s248 = scalar_select %p247, %s20, 1
        %p249 = scmp.lt.s32.totalorder %s246, 1
        %s250 = scalar_select %p249, %s246, 1
        %s251 = smul.addr %s248, 2
        %s252 = sadd.s32 %s250, %s251
        %s253 = smul.addr %s252, 8
        %s254 = scalar_lea.vmem %s3, %s253
        %s255 = smul.u32 2, %s21
      $region32: #{aux_loss.3} parent=23 // pred_fallthru
        _
    $region24: #{aux_loss.3} parent=5 // pred_fallthru
      _
    %p256 = scmp.le.s32.totalorder 1, %s13
    %p257 = scmp.lt.s32.totalorder %s13, 3
    %p258 = pnand %p256, %p257
    %p259 = pneg %p258
    // Predicated region
    $region33: #{aux_loss.3} parent=5 // pred_check
      _
    $region34: #{aux_loss.3} parent=5 // pred_check_branch
      %261 = sbr.rel (%p258) target = $region36
    $region35: #{aux_loss.3} parent=5 // pred_region
      %s262 = ssub.s32 %s13, 1
      %p263 = scmp.lt.s32.totalorder %s22, 1
      %s264 = scalar_select %p263, %s22, 1
      %s265 = smul.addr %s264, 8
      %s266 = smul.addr %s265, 8
      %s267 = scalar_lea.vmem %s0, %s266
      %p268 = pneg %p51
      %p269 = pneg %p48
      %s270 = smul.u32 2, %s23
      %p271 = scmp.lt.s32.totalorder %s270, 1
      %s272 = scalar_select %p271, %s270, 1
      %s273 = smul.addr %s272, 8
      %s274 = scalar_lea.vmem %s1, %s273
      %p275 = pneg %p77
      %p276 = pneg %p74
      %p277 = pneg %p98
      %p278 = pneg %p95
      %s279 = smul.u32 2, %s23
      %p280 = scmp.lt.s32.totalorder %s22, 1
      %s281 = scalar_select %p280, %s22, 1
      %p282 = scmp.lt.s32.totalorder %s279, 1
      %s283 = scalar_select %p282, %s279, 1
      %s284 = smul.addr %s281, 2
      %s285 = sadd.s32 %s283, %s284
      %s286 = smul.addr %s285, 8
      %s287 = scalar_lea.vmem %s3, %s286
      %p288 = pneg %p126
      %p289 = pneg %p123
      %p290 = pneg %p152
      %p291 = pneg %p149
      %p292 = scmp.lt.s32.totalorder %s22, 1
      %s293 = scalar_select %p292, %s22, 1
      %s294 = scalar_lea.vmem %s4, %s293
      %p295 = pneg %p178
      %p296 = pneg %p175
      %p297 = scmp.lt.s32.totalorder %s22, 1
      %s298 = scalar_select %p297, %s22, 1
      %s299 = smul.addr %s298, 4
      %s300 = scalar_lea.vmem %s5, %s299
      %p301 = pneg %p204
      %p302 = pneg %p201
      %p303 = scmp.lt.s32.totalorder %s22, 1
      %s304 = scalar_select %p303, %s22, 1
      %s305 = smul.addr %s304, 4
      %s306 = scalar_lea.vmem %s6, %s305
      %p307 = scmp.lt.s32.totalorder %s22, 1
      %s308 = scalar_select %p307, %s22, 1
      %s309 = smul.addr %s308, 8
      %s310 = smul.addr %s309, 8
      %s311 = scalar_lea.vmem %s0, %s310
      %s312 = smul.u32 2, %s23
      %p313 = scmp.lt.s32.totalorder %s312, 1
      %s314 = scalar_select %p313, %s312, 1
      %s315 = smul.addr %s314, 8
      %s316 = scalar_lea.vmem %s1, %s315
      %s317 = smul.u32 2, %s23
      %s318 = smul.u32 2, %s23
      %p319 = scmp.lt.s32.totalorder %s22, 1
      %s320 = scalar_select %p319, %s22, 1
      %p321 = scmp.lt.s32.totalorder %s318, 1
      %s322 = scalar_select %p321, %s318, 1
      %s323 = smul.addr %s320, 2
      %s324 = sadd.s32 %s322, %s323
      %s325 = smul.addr %s324, 8
      %s326 = scalar_lea.vmem %s3, %s325
      %s327 = smul.u32 2, %s23
      %p328 = scmp.lt.s32.totalorder %s22, 1
      %s329 = scalar_select %p328, %s22, 1
      %s330 = scalar_lea.vmem %s4, %s329
      %p331 = scmp.lt.s32.totalorder %s22, 1
      %s332 = scalar_select %p331, %s22, 1
      %s333 = smul.addr %s332, 4
      %s334 = scalar_lea.vmem %s5, %s333
      %p335 = scmp.lt.s32.totalorder %s22, 1
      %s336 = scalar_select %p335, %s22, 1
      %s337 = smul.addr %s336, 4
      %s338 = scalar_lea.vmem %s6, %s337
      %p339 = scmp.eq.s32.totalorder %s23, 0
      // Predicated region
      $region37: #{aux_loss.3} parent=35 // pred_check
        %p340 = pneg %p339
      $region38: #{aux_loss.3} parent=35 // pred_check_branch
        %342 = sbr.rel (%p340) target = $region40
      $region39: #{aux_loss.3} parent=35 // pred_region
        %vm343 = vcmask 130048
        %344 = vst.msk [vmem:[#allocation2] sm:$0xff] %vm343, 0.0
        %vm345 = vcmask 122880
        %346 = vst.msk [vmem:[#allocation2 + $0x8] sm:$0x1] %vm345, 0.0
      $region40: #{aux_loss.3} parent=35 // pred_fallthru
        _
      %v347 = vld [vmem:[%s316] sm:$0xff]
      %v348 = vld [vmem:[%s316 + $0x8] sm:$0xff]
      %v349 = vld [vmem:[%s2] sm:$0xff]
      %v350 = vld [vmem:[%s2 + $0x8] sm:$0xff]
      %v351 = vld [vmem:[%s326] sm:$0xff]
      %v352 = vld [vmem:[%s326 + $0x8] sm:$0xff]
      %v353 = vld [vmem:[%s311] sm:$0xff]
      %v354 = vld [vmem:[%s311 + $0x8] sm:$0xff]
      %vm355 = vcmask 130048
      %v357 = vsel %vm355, %v347, 0
      %v360 = vsel %vm355, %v348, 0
      %362 = vmatprep.subr.mxu0 0.0
      %363 = vmatpush1.msra.mxu0 %v353
      %364 = vmatprep.subr.mxu0 0.0
      %365 = vmatpush1.msra.mxu0 %v354
      %366 = vmatprep.subr.mxu0 0.0
      %367 = vmatpush1.msra.mxu0 0.0
      %368 = vmatprep.subr.mxu0 0.0
      %369 = vmatpush1.msra.mxu0 0.0
      %370 = vmatprep.subr.mxu0 0.0
      %371 = vmatpush1.msra.mxu0 0.0
      %372 = vmatprep.subr.mxu0 0.0
      %373 = vmatpush1.msra.mxu0 0.0
      %374 = vmatprep.subr.mxu0 0.0
      %375 = vmatpush1.msra.mxu0 0.0
      %376 = vmatprep.subr.mxu0 0.0
      %377 = vmatpush1.msra.mxu0 0.0
      %378 = vmatprep.subr.mxu0 0.0
      %379 = vmatpush1.msra.mxu0 0.0
      %380 = vmatprep.subr.mxu0 0.0
      %381 = vmatpush1.msra.mxu0 0.0
      %382 = vmatprep.subr.mxu0 0.0
      %383 = vmatpush1.msra.mxu0 0.0
      %384 = vmatprep.subr.mxu0 0.0
      %385 = vmatpush1.msra.mxu0 0.0
      %386 = vmatprep.subr.mxu0 0.0
      %387 = vmatpush1.msra.mxu0 0.0
      %388 = vmatprep.subr.mxu0 0.0
      %389 = vmatpush1.msra.mxu0 0.0
      %390 = vmatprep.subr.mxu0 0.0
      %391 = vmatpush1.msra.mxu0 0.0
      %392 = vmatprep.subr.mxu0 0.0
      %393 = vmatpush1.msra.mxu0 0.0
      %394 = vmatprep.subr.mxu0 0.0
      %395 = vmatpush1.msra.mxu0 0.0
      %396 = vmatprep.subr.mxu0 0.0
      %397 = vmatpush1.msra.mxu0 0.0
      %398 = vmatprep.subr.mxu0 0.0
      %399 = vmatpush1.msra.mxu0 0.0
      %400 = vmatprep.subr.mxu0 0.0
      %401 = vmatpush1.msra.mxu0 0.0
      %402 = vmatprep.subr.mxu0 0.0
      %403 = vmatpush1.msra.mxu0 0.0
      %404 = vmatprep.subr.mxu0 0.0
      %405 = vmatpush1.msra.mxu0 0.0
      %406 = vmatprep.subr.mxu0 0.0
      %407 = vmatpush1.msra.mxu0 0.0
      %408 = vmatprep.subr.mxu0 0.0
      %409 = vmatpush1.msra.mxu0 0.0
      %410 = vmatprep.subr.mxu0 0.0
      %411 = vmatpush1.msra.mxu0 0.0
      %412 = vmatprep.subr.mxu0 0.0
      %413 = vmatpush1.msra.mxu0 0.0
      %414 = vmatprep.subr.mxu0 0.0
      %415 = vmatpush1.msra.mxu0 0.0
      %416 = vmatprep.subr.mxu0 0.0
      %417 = vmatpush1.msra.mxu0 0.0
      %418 = vmatprep.subr.mxu0 0.0
      %419 = vmatpush1.msra.mxu0 0.0
      %420 = vmatprep.subr.mxu0 0.0
      %421 = vmatpush1.msra.mxu0 0.0
      %422 = vmatprep.subr.mxu0 0.0
      %423 = vmatpush1.msra.mxu0 0.0
      %424 = vmatprep.subr.mxu0 0.0
      %425 = vmatpush1.msra.mxu0 0.0
      %426 = vmatprep.mubr.f32.mxu0 0.0
      %427 = vmatmul.mubr.f32.gmra.mrb[0].mxu0 %v357
      %v428 = vpop.f32.mrb[0].mxu0
      %v429 = vadd.f32 0.0, %v428
      %v430 = vpop.f32.mrb[0].mxu0
      %431 = vmatprep.mubr.f32.mxu0 0.0
      %432 = vmatmul.mubr.f32.gmra.mrb[0].mxu0 %v360
      %v433 = vpop.f32.mrb[0].mxu0
      %v434 = vadd.f32 0.0, %v433
      %v435 = vpop.f32.mrb[0].mxu0
      %436 = vdwg.mxu0
      %v438 = vsel %vm355, %v429, 0
      %v441 = vsel %vm355, %v434, 0
      %443 = vmatprep.subr.mxu0 0.0
      %444 = vmatpush1.msra.mxu0 %v349
      %445 = vmatprep.subr.mxu0 0.0
      %446 = vmatpush1.msra.mxu0 %v350
      %447 = vmatprep.subr.mxu0 0.0
      %448 = vmatpush1.msra.mxu0 0.0
      %449 = vmatprep.subr.mxu0 0.0
      %450 = vmatpush1.msra.mxu0 0.0
      %451 = vmatprep.subr.mxu0 0.0
      %452 = vmatpush1.msra.mxu0 0.0
      %453 = vmatprep.subr.mxu0 0.0
      %454 = vmatpush1.msra.mxu0 0.0
      %455 = vmatprep.subr.mxu0 0.0
      %456 = vmatpush1.msra.mxu0 0.0
      %457 = vmatprep.subr.mxu0 0.0
      %458 = vmatpush1.msra.mxu0 0.0
      %459 = vmatprep.subr.mxu0 0.0
      %460 = vmatpush1.msra.mxu0 0.0
      %461 = vmatprep.subr.mxu0 0.0
      %462 = vmatpush1.msra.mxu0 0.0
      %463 = vmatprep.subr.mxu0 0.0
      %464 = vmatpush1.msra.mxu0 0.0
      %465 = vmatprep.subr.mxu0 0.0
      %466 = vmatpush1.msra.mxu0 0.0
      %467 = vmatprep.subr.mxu0 0.0
      %468 = vmatpush1.msra.mxu0 0.0
      %469 = vmatprep.subr.mxu0 0.0
      %470 = vmatpush1.msra.mxu0 0.0
      %471 = vmatprep.subr.mxu0 0.0
      %472 = vmatpush1.msra.mxu0 0.0
      %473 = vmatprep.subr.mxu0 0.0
      %474 = vmatpush1.msra.mxu0 0.0
      %475 = vmatprep.subr.mxu0 0.0
      %476 = vmatpush1.msra.mxu0 0.0
      %477 = vmatprep.subr.mxu0 0.0
      %478 = vmatpush1.msra.mxu0 0.0
      %479 = vmatprep.subr.mxu0 0.0
      %480 = vmatpush1.msra.mxu0 0.0
      %481 = vmatprep.subr.mxu0 0.0
      %482 = vmatpush1.msra.mxu0 0.0
      %483 = vmatprep.subr.mxu0 0.0
      %484 = vmatpush1.msra.mxu0 0.0
      %485 = vmatprep.subr.mxu0 0.0
      %486 = vmatpush1.msra.mxu0 0.0
      %487 = vmatprep.subr.mxu0 0.0
      %488 = vmatpush1.msra.mxu0 0.0
      %489 = vmatprep.subr.mxu0 0.0
      %490 = vmatpush1.msra.mxu0 0.0
      %491 = vmatprep.subr.mxu0 0.0
      %492 = vmatpush1.msra.mxu0 0.0
      %493 = vmatprep.subr.mxu0 0.0
      %494 = vmatpush1.msra.mxu0 0.0
      %495 = vmatprep.subr.mxu0 0.0
      %496 = vmatpush1.msra.mxu0 0.0
      %497 = vmatprep.subr.mxu0 0.0
      %498 = vmatpush1.msra.mxu0 0.0
      %499 = vmatprep.subr.mxu0 0.0
      %500 = vmatpush1.msra.mxu0 0.0
      %501 = vmatprep.subr.mxu0 0.0
      %502 = vmatpush1.msra.mxu0 0.0
      %503 = vmatprep.subr.mxu0 0.0
      %504 = vmatpush1.msra.mxu0 0.0
      %505 = vmatprep.subr.mxu0 0.0
      %506 = vmatpush1.msra.mxu0 0.0
      %507 = vmatprep.mubr.f32.mxu0 0.0
      %508 = vmatmul.mubr.f32.gmra.mrb[0].mxu0 %v438
      %v509 = vpop.f32.mrb[0].mxu0
      %v510 = vadd.f32 0.0, %v509
      %v511 = vpop.f32.mrb[0].mxu0
      %512 = vmatprep.mubr.f32.mxu0 0.0
      %513 = vmatmul.mubr.f32.gmra.mrb[0].mxu0 %v441
      %v514 = vpop.f32.mrb[0].mxu0
      %v515 = vadd.f32 0.0, %v514
      %v516 = vpop.f32.mrb[0].mxu0
      %517 = vdwg.mxu0
      %s518 = scalar_lea.vmem %s311, 16
      %v519 = vld [vmem:[%s518] sm:$0xff]
      %v520 = vld [vmem:[%s518 + $0x8] sm:$0xff]
      %521 = vmatprep.subr.mxu0 0.0
      %522 = vmatpush1.msra.mxu0 %v519
      %523 = vmatprep.subr.mxu0 0.0
      %524 = vmatpush1.msra.mxu0 %v520
      %525 = vmatprep.subr.mxu0 0.0
      %526 = vmatpush1.msra.mxu0 0.0
      %527 = vmatprep.subr.mxu0 0.0
      %528 = vmatpush1.msra.mxu0 0.0
      %529 = vmatprep.subr.mxu0 0.0
      %530 = vmatpush1.msra.mxu0 0.0
      %531 = vmatprep.subr.mxu0 0.0
      %532 = vmatpush1.msra.mxu0 0.0
      %533 = vmatprep.subr.mxu0 0.0
      %534 = vmatpush1.msra.mxu0 0.0
      %535 = vmatprep.subr.mxu0 0.0
      %536 = vmatpush1.msra.mxu0 0.0
      %537 = vmatprep.subr.mxu0 0.0
      %538 = vmatpush1.msra.mxu0 0.0
      %539 = vmatprep.subr.mxu0 0.0
      %540 = vmatpush1.msra.mxu0 0.0
      %541 = vmatprep.subr.mxu0 0.0
      %542 = vmatpush1.msra.mxu0 0.0
      %543 = vmatprep.subr.mxu0 0.0
      %544 = vmatpush1.msra.mxu0 0.0
      %545 = vmatprep.subr.mxu0 0.0
      %546 = vmatpush1.msra.mxu0 0.0
      %547 = vmatprep.subr.mxu0 0.0
      %548 = vmatpush1.msra.mxu0 0.0
      %549 = vmatprep.subr.mxu0 0.0
      %550 = vmatpush1.msra.mxu0 0.0
      %551 = vmatprep.subr.mxu0 0.0
      %552 = vmatpush1.msra.mxu0 0.0
      %553 = vmatprep.subr.mxu0 0.0
      %554 = vmatpush1.msra.mxu0 0.0
      %555 = vmatprep.subr.mxu0 0.0
      %556 = vmatpush1.msra.mxu0 0.0
      %557 = vmatprep.subr.mxu0 0.0
      %558 = vmatpush1.msra.mxu0 0.0
      %559 = vmatprep.subr.mxu0 0.0
      %560 = vmatpush1.msra.mxu0 0.0
      %561 = vmatprep.subr.mxu0 0.0
      %562 = vmatpush1.msra.mxu0 0.0
      %563 = vmatprep.subr.mxu0 0.0
      %564 = vmatpush1.msra.mxu0 0.0
      %565 = vmatprep.subr.mxu0 0.0
      %566 = vmatpush1.msra.mxu0 0.0
      %567 = vmatprep.subr.mxu0 0.0
      %568 = vmatpush1.msra.mxu0 0.0
      %569 = vmatprep.subr.mxu0 0.0
      %570 = vmatpush1.msra.mxu0 0.0
      %571 = vmatprep.subr.mxu0 0.0
      %572 = vmatpush1.msra.mxu0 0.0
      %573 = vmatprep.subr.mxu0 0.0
      %574 = vmatpush1.msra.mxu0 0.0
      %575 = vmatprep.subr.mxu0 0.0
      %576 = vmatpush1.msra.mxu0 0.0
      %577 = vmatprep.subr.mxu0 0.0
      %578 = vmatpush1.msra.mxu0 0.0
      %579 = vmatprep.subr.mxu0 0.0
      %580 = vmatpush1.msra.mxu0 0.0
      %581 = vmatprep.subr.mxu0 0.0
      %582 = vmatpush1.msra.mxu0 0.0
      %583 = vmatprep.subr.mxu0 0.0
      %584 = vmatpush1.msra.mxu0 0.0
      %585 = vmatprep.mubr.f32.mxu0 0.0
      %586 = vmatmul.mubr.f32.gmra.mrb[0].mxu0 %v357
      %v587 = vpop.f32.mrb[0].mxu0
      %v588 = vadd.f32 0.0, %v587
      %v589 = vpop.f32.mrb[0].mxu0
      %590 = vmatprep.mubr.f32.mxu0 0.0
      %591 = vmatmul.mubr.f32.gmra.mrb[0].mxu0 %v360
      %v592 = vpop.f32.mrb[0].mxu0
      %v593 = vadd.f32 0.0, %v592
      %v594 = vpop.f32.mrb[0].mxu0
      %595 = vdwg.mxu0
      %v597 = vsel %vm355, %v588, 0
      %v600 = vsel %vm355, %v593, 0
      %602 = vmatprep.subr.mxu0 0.0
      %603 = vmatpush1.msra.mxu0 %v349
      %604 = vmatprep.subr.mxu0 0.0
      %605 = vmatpush1.msra.mxu0 %v350
      %606 = vmatprep.subr.mxu0 0.0
      %607 = vmatpush1.msra.mxu0 0.0
      %608 = vmatprep.subr.mxu0 0.0
      %609 = vmatpush1.msra.mxu0 0.0
      %610 = vmatprep.subr.mxu0 0.0
      %611 = vmatpush1.msra.mxu0 0.0
      %612 = vmatprep.subr.mxu0 0.0
      %613 = vmatpush1.msra.mxu0 0.0
      %614 = vmatprep.subr.mxu0 0.0
      %615 = vmatpush1.msra.mxu0 0.0
      %616 = vmatprep.subr.mxu0 0.0
      %617 = vmatpush1.msra.mxu0 0.0
      %618 = vmatprep.subr.mxu0 0.0
      %619 = vmatpush1.msra.mxu0 0.0
      %620 = vmatprep.subr.mxu0 0.0
      %621 = vmatpush1.msra.mxu0 0.0
      %622 = vmatprep.subr.mxu0 0.0
      %623 = vmatpush1.msra.mxu0 0.0
      %624 = vmatprep.subr.mxu0 0.0
      %625 = vmatpush1.msra.mxu0 0.0
      %626 = vmatprep.subr.mxu0 0.0
      %627 = vmatpush1.msra.mxu0 0.0
      %628 = vmatprep.subr.mxu0 0.0
      %629 = vmatpush1.msra.mxu0 0.0
      %630 = vmatprep.subr.mxu0 0.0
      %631 = vmatpush1.msra.mxu0 0.0
      %632 = vmatprep.subr.mxu0 0.0
      %633 = vmatpush1.msra.mxu0 0.0
      %634 = vmatprep.subr.mxu0 0.0
      %635 = vmatpush1.msra.mxu0 0.0
      %636 = vmatprep.subr.mxu0 0.0
      %637 = vmatpush1.msra.mxu0 0.0
      %638 = vmatprep.subr.mxu0 0.0
      %639 = vmatpush1.msra.mxu0 0.0
      %640 = vmatprep.subr.mxu0 0.0
      %641 = vmatpush1.msra.mxu0 0.0
      %642 = vmatprep.subr.mxu0 0.0
      %643 = vmatpush1.msra.mxu0 0.0
      %644 = vmatprep.subr.mxu0 0.0
      %645 = vmatpush1.msra.mxu0 0.0
      %646 = vmatprep.subr.mxu0 0.0
      %647 = vmatpush1.msra.mxu0 0.0
      %648 = vmatprep.subr.mxu0 0.0
      %649 = vmatpush1.msra.mxu0 0.0
      %650 = vmatprep.subr.mxu0 0.0
      %651 = vmatpush1.msra.mxu0 0.0
      %652 = vmatprep.subr.mxu0 0.0
      %653 = vmatpush1.msra.mxu0 0.0
      %654 = vmatprep.subr.mxu0 0.0
      %655 = vmatpush1.msra.mxu0 0.0
      %656 = vmatprep.subr.mxu0 0.0
      %657 = vmatpush1.msra.mxu0 0.0
      %658 = vmatprep.subr.mxu0 0.0
      %659 = vmatpush1.msra.mxu0 0.0
      %660 = vmatprep.subr.mxu0 0.0
      %661 = vmatpush1.msra.mxu0 0.0
      %662 = vmatprep.subr.mxu0 0.0
      %663 = vmatpush1.msra.mxu0 0.0
      %664 = vmatprep.subr.mxu0 0.0
      %665 = vmatpush1.msra.mxu0 0.0
      %666 = vmatprep.mubr.f32.mxu0 0.0
      %667 = vmatmul.mubr.f32.gmra.mrb[0].mxu0 %v597
      %v668 = vpop.f32.mrb[0].mxu0
      %v669 = vadd.f32 0.0, %v668
      %v670 = vpop.f32.mrb[0].mxu0
      %671 = vmatprep.mubr.f32.mxu0 0.0
      %672 = vmatmul.mubr.f32.gmra.mrb[0].mxu0 %v600
      %v673 = vpop.f32.mrb[0].mxu0
      %v674 = vadd.f32 0.0, %v673
      %v675 = vpop.f32.mrb[0].mxu0
      %676 = vdwg.mxu0
      %s677 = scalar_lea.vmem %s311, 32
      %v678 = vld [vmem:[%s677] sm:$0xff]
      %v679 = vld [vmem:[%s677 + $0x8] sm:$0xff]
      %680 = vmatprep.subr.mxu0 0.0
      %681 = vmatpush1.msra.mxu0 %v678
      %682 = vmatprep.subr.mxu0 0.0
      %683 = vmatpush1.msra.mxu0 %v679
      %684 = vmatprep.subr.mxu0 0.0
      %685 = vmatpush1.msra.mxu0 0.0
      %686 = vmatprep.subr.mxu0 0.0
      %687 = vmatpush1.msra.mxu0 0.0
      %688 = vmatprep.subr.mxu0 0.0
      %689 = vmatpush1.msra.mxu0 0.0
      %690 = vmatprep.subr.mxu0 0.0
      %691 = vmatpush1.msra.mxu0 0.0
      %692 = vmatprep.subr.mxu0 0.0
      %693 = vmatpush1.msra.mxu0 0.0
      %694 = vmatprep.subr.mxu0 0.0
      %695 = vmatpush1.msra.mxu0 0.0
      %696 = vmatprep.subr.mxu0 0.0
      %697 = vmatpush1.msra.mxu0 0.0
      %698 = vmatprep.subr.mxu0 0.0
      %699 = vmatpush1.msra.mxu0 0.0
      %700 = vmatprep.subr.mxu0 0.0
      %701 = vmatpush1.msra.mxu0 0.0
      %702 = vmatprep.subr.mxu0 0.0
      %703 = vmatpush1.msra.mxu0 0.0
      %704 = vmatprep.subr.mxu0 0.0
      %705 = vmatpush1.msra.mxu0 0.0
      %706 = vmatprep.subr.mxu0 0.0
      %707 = vmatpush1.msra.mxu0 0.0
      %708 = vmatprep.subr.mxu0 0.0
      %709 = vmatpush1.msra.mxu0 0.0
      %710 = vmatprep.subr.mxu0 0.0
      %711 = vmatpush1.msra.mxu0 0.0
      %712 = vmatprep.subr.mxu0 0.0
      %713 = vmatpush1.msra.mxu0 0.0
      %714 = vmatprep.subr.mxu0 0.0
      %715 = vmatpush1.msra.mxu0 0.0
      %716 = vmatprep.subr.mxu0 0.0
      %717 = vmatpush1.msra.mxu0 0.0
      %718 = vmatprep.subr.mxu0 0.0
      %719 = vmatpush1.msra.mxu0 0.0
      %720 = vmatprep.subr.mxu0 0.0
      %721 = vmatpush1.msra.mxu0 0.0
      %722 = vmatprep.subr.mxu0 0.0
      %723 = vmatpush1.msra.mxu0 0.0
      %724 = vmatprep.subr.mxu0 0.0
      %725 = vmatpush1.msra.mxu0 0.0
      %726 = vmatprep.subr.mxu0 0.0
      %727 = vmatpush1.msra.mxu0 0.0
      %728 = vmatprep.subr.mxu0 0.0
      %729 = vmatpush1.msra.mxu0 0.0
      %730 = vmatprep.subr.mxu0 0.0
      %731 = vmatpush1.msra.mxu0 0.0
      %732 = vmatprep.subr.mxu0 0.0
      %733 = vmatpush1.msra.mxu0 0.0
      %734 = vmatprep.subr.mxu0 0.0
      %735 = vmatpush1.msra.mxu0 0.0
      %736 = vmatprep.subr.mxu0 0.0
      %737 = vmatpush1.msra.mxu0 0.0
      %738 = vmatprep.subr.mxu0 0.0
      %739 = vmatpush1.msra.mxu0 0.0
      %740 = vmatprep.subr.mxu0 0.0
      %741 = vmatpush1.msra.mxu0 0.0
      %742 = vmatprep.subr.mxu0 0.0
      %743 = vmatpush1.msra.mxu0 0.0
      %744 = vmatprep.mubr.f32.mxu0 0.0
      %745 = vmatmul.mubr.f32.gmra.mrb[0].mxu0 %v357
      %v746 = vpop.f32.mrb[0].mxu0
      %v747 = vadd.f32 0.0, %v746
      %v748 = vpop.f32.mrb[0].mxu0
      %749 = vmatprep.mubr.f32.mxu0 0.0
      %750 = vmatmul.mubr.f32.gmra.mrb[0].mxu0 %v360
      %v751 = vpop.f32.mrb[0].mxu0
      %v752 = vadd.f32 0.0, %v751
      %v753 = vpop.f32.mrb[0].mxu0
      %754 = vdwg.mxu0
      %v756 = vsel %vm355, %v747, 0
      %v759 = vsel %vm355, %v752, 0
      %761 = vmatprep.subr.mxu0 0.0
      %762 = vmatpush1.msra.mxu0 %v349
      %763 = vmatprep.subr.mxu0 0.0
      %764 = vmatpush1.msra.mxu0 %v350
      %765 = vmatprep.subr.mxu0 0.0
      %766 = vmatpush1.msra.mxu0 0.0
      %767 = vmatprep.subr.mxu0 0.0
      %768 = vmatpush1.msra.mxu0 0.0
      %769 = vmatprep.subr.mxu0 0.0
      %770 = vmatpush1.msra.mxu0 0.0
      %771 = vmatprep.subr.mxu0 0.0
      %772 = vmatpush1.msra.mxu0 0.0
      %773 = vmatprep.subr.mxu0 0.0
      %774 = vmatpush1.msra.mxu0 0.0
      %775 = vmatprep.subr.mxu0 0.0
      %776 = vmatpush1.msra.mxu0 0.0
      %777 = vmatprep.subr.mxu0 0.0
      %778 = vmatpush1.msra.mxu0 0.0
      %779 = vmatprep.subr.mxu0 0.0
      %780 = vmatpush1.msra.mxu0 0.0
      %781 = vmatprep.subr.mxu0 0.0
      %782 = vmatpush1.msra.mxu0 0.0
      %783 = vmatprep.subr.mxu0 0.0
      %784 = vmatpush1.msra.mxu0 0.0
      %785 = vmatprep.subr.mxu0 0.0
      %786 = vmatpush1.msra.mxu0 0.0
      %787 = vmatprep.subr.mxu0 0.0
      %788 = vmatpush1.msra.mxu0 0.0
      %789 = vmatprep.subr.mxu0 0.0
      %790 = vmatpush1.msra.mxu0 0.0
      %791 = vmatprep.subr.mxu0 0.0
      %792 = vmatpush1.msra.mxu0 0.0
      %793 = vmatprep.subr.mxu0 0.0
      %794 = vmatpush1.msra.mxu0 0.0
      %795 = vmatprep.subr.mxu0 0.0
      %796 = vmatpush1.msra.mxu0 0.0
      %797 = vmatprep.subr.mxu0 0.0
      %798 = vmatpush1.msra.mxu0 0.0
      %799 = vmatprep.subr.mxu0 0.0
      %800 = vmatpush1.msra.mxu0 0.0
      %801 = vmatprep.subr.mxu0 0.0
      %802 = vmatpush1.msra.mxu0 0.0
      %803 = vmatprep.subr.mxu0 0.0
      %804 = vmatpush1.msra.mxu0 0.0
      %805 = vmatprep.subr.mxu0 0.0
      %806 = vmatpush1.msra.mxu0 0.0
      %807 = vmatprep.subr.mxu0 0.0
      %808 = vmatpush1.msra.mxu0 0.0
      %809 = vmatprep.subr.mxu0 0.0
      %810 = vmatpush1.msra.mxu0 0.0
      %811 = vmatprep.subr.mxu0 0.0
      %812 = vmatpush1.msra.mxu0 0.0
      %813 = vmatprep.subr.mxu0 0.0
      %814 = vmatpush1.msra.mxu0 0.0
      %815 = vmatprep.subr.mxu0 0.0
      %816 = vmatpush1.msra.mxu0 0.0
      %817 = vmatprep.subr.mxu0 0.0
      %818 = vmatpush1.msra.mxu0 0.0
      %819 = vmatprep.subr.mxu0 0.0
      %820 = vmatpush1.msra.mxu0 0.0
      %821 = vmatprep.subr.mxu0 0.0
      %822 = vmatpush1.msra.mxu0 0.0
      %823 = vmatprep.subr.mxu0 0.0
      %824 = vmatpush1.msra.mxu0 0.0
      %825 = vmatprep.mubr.f32.mxu0 0.0
      %826 = vmatmul.mubr.f32.gmra.mrb[0].mxu0 %v756
      %v827 = vpop.f32.mrb[0].mxu0
      %v828 = vadd.f32 0.0, %v827
      %v829 = vpop.f32.mrb[0].mxu0
      %830 = vmatprep.mubr.f32.mxu0 0.0
      %831 = vmatmul.mubr.f32.gmra.mrb[0].mxu0 %v759
      %v832 = vpop.f32.mrb[0].mxu0
      %v833 = vadd.f32 0.0, %v832
      %v834 = vpop.f32.mrb[0].mxu0
      %835 = vdwg.mxu0
      %s836 = scalar_lea.vmem %s311, 48
      %v837 = vld [vmem:[%s836] sm:$0xff]
      %v838 = vld [vmem:[%s836 + $0x8] sm:$0xff]
      %839 = vmatprep.subr.mxu0 0.0
      %840 = vmatpush1.msra.mxu0 %v837
      %841 = vmatprep.subr.mxu0 0.0
      %842 = vmatpush1.msra.mxu0 %v838
      %843 = vmatprep.subr.mxu0 0.0
      %844 = vmatpush1.msra.mxu0 0.0
      %845 = vmatprep.subr.mxu0 0.0
      %846 = vmatpush1.msra.mxu0 0.0
      %847 = vmatprep.subr.mxu0 0.0
      %848 = vmatpush1.msra.mxu0 0.0
      %849 = vmatprep.subr.mxu0 0.0
      %850 = vmatpush1.msra.mxu0 0.0
      %851 = vmatprep.subr.mxu0 0.0
      %852 = vmatpush1.msra.mxu0 0.0
      %853 = vmatprep.subr.mxu0 0.0
      %854 = vmatpush1.msra.mxu0 0.0
      %855 = vmatprep.subr.mxu0 0.0
      %856 = vmatpush1.msra.mxu0 0.0
      %857 = vmatprep.subr.mxu0 0.0
      %858 = vmatpush1.msra.mxu0 0.0
      %859 = vmatprep.subr.mxu0 0.0
      %860 = vmatpush1.msra.mxu0 0.0
      %861 = vmatprep.subr.mxu0 0.0
      %862 = vmatpush1.msra.mxu0 0.0
      %863 = vmatprep.subr.mxu0 0.0
      %864 = vmatpush1.msra.mxu0 0.0
      %865 = vmatprep.subr.mxu0 0.0
      %866 = vmatpush1.msra.mxu0 0.0
      %867 = vmatprep.subr.mxu0 0.0
      %868 = vmatpush1.msra.mxu0 0.0
      %869 = vmatprep.subr.mxu0 0.0
      %870 = vmatpush1.msra.mxu0 0.0
      %871 = vmatprep.subr.mxu0 0.0
      %872 = vmatpush1.msra.mxu0 0.0
      %873 = vmatprep.subr.mxu0 0.0
      %874 = vmatpush1.msra.mxu0 0.0
      %875 = vmatprep.subr.mxu0 0.0
      %876 = vmatpush1.msra.mxu0 0.0
      %877 = vmatprep.subr.mxu0 0.0
      %878 = vmatpush1.msra.mxu0 0.0
      %879 = vmatprep.subr.mxu0 0.0
      %880 = vmatpush1.msra.mxu0 0.0
      %881 = vmatprep.subr.mxu0 0.0
      %882 = vmatpush1.msra.mxu0 0.0
      %883 = vmatprep.subr.mxu0 0.0
      %884 = vmatpush1.msra.mxu0 0.0
      %885 = vmatprep.subr.mxu0 0.0
      %886 = vmatpush1.msra.mxu0 0.0
      %887 = vmatprep.subr.mxu0 0.0
      %888 = vmatpush1.msra.mxu0 0.0
      %889 = vmatprep.subr.mxu0 0.0
      %890 = vmatpush1.msra.mxu0 0.0
      %891 = vmatprep.subr.mxu0 0.0
      %892 = vmatpush1.msra.mxu0 0.0
      %893 = vmatprep.subr.mxu0 0.0
      %894 = vmatpush1.msra.mxu0 0.0
      %895 = vmatprep.subr.mxu0 0.0
      %896 = vmatpush1.msra.mxu0 0.0
      %897 = vmatprep.subr.mxu0 0.0
      %898 = vmatpush1.msra.mxu0 0.0
      %899 = vmatprep.subr.mxu0 0.0
      %900 = vmatpush1.msra.mxu0 0.0
      %901 = vmatprep.subr.mxu0 0.0
      %902 = vmatpush1.msra.mxu0 0.0
      %903 = vmatprep.mubr.f32.mxu0 0.0
      %904 = vmatmul.mubr.f32.gmra.mrb[0].mxu0 %v357
      %v905 = vpop.f32.mrb[0].mxu0
      %v906 = vadd.f32 0.0, %v905
      %v907 = vpop.f32.mrb[0].mxu0
      %908 = vmatprep.mubr.f32.mxu0 0.0
      %909 = vmatmul.mubr.f32.gmra.mrb[0].mxu0 %v360
      %v910 = vpop.f32.mrb[0].mxu0
      %v911 = vadd.f32 0.0, %v910
      %v912 = vpop.f32.mrb[0].mxu0
      %913 = vdwg.mxu0
      %v915 = vsel %vm355, %v906, 0
      %v918 = vsel %vm355, %v911, 0
      %920 = vmatprep.subr.mxu0 0.0
      %921 = vmatpush1.msra.mxu0 %v349
      %922 = vmatprep.subr.mxu0 0.0
      %923 = vmatpush1.msra.mxu0 %v350
      %924 = vmatprep.subr.mxu0 0.0
      %925 = vmatpush1.msra.mxu0 0.0
      %926 = vmatprep.subr.mxu0 0.0
      %927 = vmatpush1.msra.mxu0 0.0
      %928 = vmatprep.subr.mxu0 0.0
      %929 = vmatpush1.msra.mxu0 0.0
      %930 = vmatprep.subr.mxu0 0.0
      %931 = vmatpush1.msra.mxu0 0.0
      %932 = vmatprep.subr.mxu0 0.0
      %933 = vmatpush1.msra.mxu0 0.0
      %934 = vmatprep.subr.mxu0 0.0
      %935 = vmatpush1.msra.mxu0 0.0
      %936 = vmatprep.subr.mxu0 0.0
      %937 = vmatpush1.msra.mxu0 0.0
      %938 = vmatprep.subr.mxu0 0.0
      %939 = vmatpush1.msra.mxu0 0.0
      %940 = vmatprep.subr.mxu0 0.0
      %941 = vmatpush1.msra.mxu0 0.0
      %942 = vmatprep.subr.mxu0 0.0
      %943 = vmatpush1.msra.mxu0 0.0
      %944 = vmatprep.subr.mxu0 0.0
      %945 = vmatpush1.msra.mxu0 0.0
      %946 = vmatprep.subr.mxu0 0.0
      %947 = vmatpush1.msra.mxu0 0.0
      %948 = vmatprep.subr.mxu0 0.0
      %949 = vmatpush1.msra.mxu0 0.0
      %950 = vmatprep.subr.mxu0 0.0
      %951 = vmatpush1.msra.mxu0 0.0
      %952 = vmatprep.subr.mxu0 0.0
      %953 = vmatpush1.msra.mxu0 0.0
      %954 = vmatprep.subr.mxu0 0.0
      %955 = vmatpush1.msra.mxu0 0.0
      %956 = vmatprep.subr.mxu0 0.0
      %957 = vmatpush1.msra.mxu0 0.0
      %958 = vmatprep.subr.mxu0 0.0
      %959 = vmatpush1.msra.mxu0 0.0
      %960 = vmatprep.subr.mxu0 0.0
      %961 = vmatpush1.msra.mxu0 0.0
      %962 = vmatprep.subr.mxu0 0.0
      %963 = vmatpush1.msra.mxu0 0.0
      %964 = vmatprep.subr.mxu0 0.0
      %965 = vmatpush1.msra.mxu0 0.0
      %966 = vmatprep.subr.mxu0 0.0
      %967 = vmatpush1.msra.mxu0 0.0
      %968 = vmatprep.subr.mxu0 0.0
      %969 = vmatpush1.msra.mxu0 0.0
      %970 = vmatprep.subr.mxu0 0.0
      %971 = vmatpush1.msra.mxu0 0.0
      %972 = vmatprep.subr.mxu0 0.0
      %973 = vmatpush1.msra.mxu0 0.0
      %974 = vmatprep.subr.mxu0 0.0
      %975 = vmatpush1.msra.mxu0 0.0
      %976 = vmatprep.subr.mxu0 0.0
      %977 = vmatpush1.msra.mxu0 0.0
      %978 = vmatprep.subr.mxu0 0.0
      %979 = vmatpush1.msra.mxu0 0.0
      %980 = vmatprep.subr.mxu0 0.0
      %981 = vmatpush1.msra.mxu0 0.0
      %982 = vmatprep.subr.mxu0 0.0
      %983 = vmatpush1.msra.mxu0 0.0
      %984 = vmatprep.mubr.f32.mxu0 0.0
      %985 = vmatmul.mubr.f32.gmra.mrb[0].mxu0 %v915
      %v986 = vpop.f32.mrb[0].mxu0
      %v987 = vadd.f32 0.0, %v986
      %v988 = vpop.f32.mrb[0].mxu0
      %989 = vmatprep.mubr.f32.mxu0 0.0
      %990 = vmatmul.mubr.f32.gmra.mrb[0].mxu0 %v918
      %v991 = vpop.f32.mrb[0].mxu0
      %v992 = vadd.f32 0.0, %v991
      %v993 = vpop.f32.mrb[0].mxu0
      %994 = vdwg.mxu0
      %v995 = vmax.f32 %v510, %v669
      %v996 = vmax.f32 %v515, %v674
      %v997 = vmax.f32 %v995, %v828
      %v998 = vmax.f32 %v996, %v833
      %v999 = vmax.f32 %v997, %v987
      %v1000 = vmax.f32 %v998, %v992
      %v1001 = vsub.f32 %v510, %v999
      %v1002 = vsub.f32 %v515, %v1000
      %v1003 = vmul.f32 %v1001, 1.442695
      %v1004 = vpow.pop %v1003
      %v1005 = vmul.f32 %v1002, 1.442695
      %v1006 = vpow.pop %v1005
      %v1007 = vsub.f32 %v669, %v999
      %v1008 = vsub.f32 %v674, %v1000
      %v1009 = vmul.f32 %v1007, 1.442695
      %v1010 = vpow.pop %v1009
      %v1011 = vmul.f32 %v1008, 1.442695
      %v1012 = vpow.pop %v1011
      %v1013 = vsub.f32 %v828, %v999
      %v1014 = vsub.f32 %v833, %v1000
      %v1015 = vmul.f32 %v1013, 1.442695
      %v1016 = vpow.pop %v1015
      %v1017 = vmul.f32 %v1014, 1.442695
      %v1018 = vpow.pop %v1017
      %v1019 = vsub.f32 %v987, %v999
      %v1020 = vsub.f32 %v992, %v1000
      %v1021 = vmul.f32 %v1019, 1.442695
      %v1022 = vpow.pop %v1021
      %v1023 = vmul.f32 %v1020, 1.442695
      %v1024 = vpow.pop %v1023
      %v1025 = vadd.f32 %v1004, %v1010
      %v1026 = vadd.f32 %v1006, %v1012
      %v1027 = vadd.f32 %v1025, %v1016
      %v1028 = vadd.f32 %v1026, %v1018
      %v1029 = vadd.f32 %v1027, %v1022
      %v1030 = vadd.f32 %v1028, %v1024
      %v1031 = vrcp.pop %v1029
      %v1032 = vrcp.pop %v1030
      %v1033 = vlog2.pop %v1029
      %v1034 = vmul.f32 %v1033, 0.6931472
      %v1035 = vlog2.pop %v1030
      %v1036 = vmul.f32 %v1035, 0.6931472
      %vm1037 = vcmp.eq.s32.totalorder %v351, 0
      %vm1038 = vcmp.eq.s32.totalorder %v352, 0
      %v1039 = vsel %vm1037, %v510, 0.0
      %v1040 = vsel %vm1038, %v515, 0.0
      %vm1041 = vcmp.eq.s32.totalorder %v351, 1
      %vm1042 = vcmp.eq.s32.totalorder %v352, 1
      %v1043 = vsel %vm1041, %v669, %v1039
      %v1044 = vsel %vm1042, %v674, %v1040
      %vm1045 = vcmp.eq.s32.totalorder %v351, 2
      %vm1046 = vcmp.eq.s32.totalorder %v352, 2
      %v1047 = vsel %vm1045, %v828, %v1043
      %v1048 = vsel %vm1046, %v833, %v1044
      %vm1049 = vcmp.eq.s32.totalorder %v351, 3
      %vm1050 = vcmp.eq.s32.totalorder %v352, 3
      %v1051 = vsel %vm1049, %v987, %v1047
      %v1052 = vsel %vm1050, %v992, %v1048
      %v1053 = vadd.f32 %v1034, %v999
      %v1054 = vadd.f32 %v1036, %v1000
      %v1055 = vsub.f32 %v1053, %v1051
      %v1056 = vsub.f32 %v1054, %v1052
      %v1057 = vmul.f32 %v1004, %v1031
      %v1058 = vmul.f32 %v1006, %v1032
      %v1059 = vmul.f32 %v1010, %v1031
      %v1060 = vmul.f32 %v1012, %v1032
      %v1061 = vmul.f32 %v1016, %v1031
      %v1062 = vmul.f32 %v1018, %v1032
      %v1063 = vmul.f32 %v1022, %v1031
      %v1064 = vmul.f32 %v1024, %v1032
      %v1065 = vsel %vm355, %v1055, 0.0
      %v1066 = vsel %vm355, %v1056, 0.0
      %v1067 = vadd.f32 %v1065, %v1066
      %v1068 = vrot.slane %v1067, 4
      %v1069 = vadd.f32 %v1067, %v1068
      %v1070 = vrot.slane %v1069, 2
      %v1071 = vadd.f32 %v1069, %v1070
      %v1072 = vrot.slane %v1071, 1
      %v1073 = vadd.f32 %v1071, %v1072
      %v1074 = vsel %vm1037, 1, 0
      %v1075 = vsel %vm1038, 1, 0
      %v1076 = vcvt.s32.f32 %v1074
      %v1077 = vcvt.s32.f32 %v1075
      %v1078 = vmul.f32 %v1057, %v1076
      %v1079 = vmul.f32 %v1058, %v1077
      %v1080 = vsel %vm355, %v1078, 0.0
      %v1081 = vsel %vm355, %v1079, 0.0
      %v1082 = vadd.f32 %v1080, %v1081
      %v1083 = vrot.slane %v1082, 4
      %v1084 = vadd.f32 %v1082, %v1083
      %v1085 = vrot.slane %v1084, 2
      %v1086 = vadd.f32 %v1084, %v1085
      %v1087 = vrot.slane %v1086, 1
      %v1088 = vadd.f32 %v1086, %v1087
      %v1089 = vsel %vm1041, 1, 0
      %v1090 = vsel %vm1042, 1, 0
      %v1091 = vcvt.s32.f32 %v1089
      %v1092 = vcvt.s32.f32 %v1090
      %v1093 = vmul.f32 %v1059, %v1091
      %v1094 = vmul.f32 %v1060, %v1092
      %v1095 = vsel %vm355, %v1093, 0.0
      %v1096 = vsel %vm355, %v1094, 0.0
      %v1097 = vadd.f32 %v1095, %v1096
      %v1098 = vrot.slane %v1097, 4
      %v1099 = vadd.f32 %v1097, %v1098
      %v1100 = vrot.slane %v1099, 2
      %v1101 = vadd.f32 %v1099, %v1100
      %v1102 = vrot.slane %v1101, 1
      %v1103 = vadd.f32 %v1101, %v1102
      %v1104 = vsel %vm1045, 1, 0
      %v1105 = vsel %vm1046, 1, 0
      %v1106 = vcvt.s32.f32 %v1104
      %v1107 = vcvt.s32.f32 %v1105
      %v1108 = vmul.f32 %v1061, %v1106
      %v1109 = vmul.f32 %v1062, %v1107
      %v1110 = vsel %vm355, %v1108, 0.0
      %v1111 = vsel %vm355, %v1109, 0.0
      %v1112 = vadd.f32 %v1110, %v1111
      %v1113 = vrot.slane %v1112, 4
      %v1114 = vadd.f32 %v1112, %v1113
      %v1115 = vrot.slane %v1114, 2
      %v1116 = vadd.f32 %v1114, %v1115
      %v1117 = vrot.slane %v1116, 1
      %v1118 = vadd.f32 %v1116, %v1117
      %v1119 = vsel %vm1049, 1, 0
      %v1120 = vsel %vm1050, 1, 0
      %v1121 = vcvt.s32.f32 %v1119
      %v1122 = vcvt.s32.f32 %v1120
      %v1123 = vmul.f32 %v1063, %v1121
      %v1124 = vmul.f32 %v1064, %v1122
      %v1125 = vsel %vm355, %v1123, 0.0
      %v1126 = vsel %vm355, %v1124, 0.0
      %v1127 = vadd.f32 %v1125, %v1126
      %v1128 = vrot.slane %v1127, 4
      %v1129 = vadd.f32 %v1127, %v1128
      %v1130 = vrot.slane %v1129, 2
      %v1131 = vadd.f32 %v1129, %v1130
      %v1132 = vrot.slane %v1131, 1
      %v1133 = vadd.f32 %v1131, %v1132
      %v1134 = vmul.f32 %v1057, %v1057
      %v1135 = vmul.f32 %v1058, %v1058
      %v1136 = vsel %vm355, %v1134, 0.0
      %v1137 = vsel %vm355, %v1135, 0.0
      %v1138 = vadd.f32 %v1136, %v1137
      %v1139 = vrot.slane %v1138, 4
      %v1140 = vadd.f32 %v1138, %v1139
      %v1141 = vrot.slane %v1140, 2
      %v1142 = vadd.f32 %v1140, %v1141
      %v1143 = vrot.slane %v1142, 1
      %v1144 = vadd.f32 %v1142, %v1143
      %v1145 = vmul.f32 %v1059, %v1059
      %v1146 = vmul.f32 %v1060, %v1060
      %v1147 = vsel %vm355, %v1145, 0.0
      %v1148 = vsel %vm355, %v1146, 0.0
      %v1149 = vadd.f32 %v1147, %v1148
      %v1150 = vrot.slane %v1149, 4
      %v1151 = vadd.f32 %v1149, %v1150
      %v1152 = vrot.slane %v1151, 2
      %v1153 = vadd.f32 %v1151, %v1152
      %v1154 = vrot.slane %v1153, 1
      %v1155 = vadd.f32 %v1153, %v1154
      %v1156 = vmul.f32 %v1061, %v1061
      %v1157 = vmul.f32 %v1062, %v1062
      %v1158 = vsel %vm355, %v1156, 0.0
      %v1159 = vsel %vm355, %v1157, 0.0
      %v1160 = vadd.f32 %v1158, %v1159
      %v1161 = vrot.slane %v1160, 4
      %v1162 = vadd.f32 %v1160, %v1161
      %v1163 = vrot.slane %v1162, 2
      %v1164 = vadd.f32 %v1162, %v1163
      %v1165 = vrot.slane %v1164, 1
      %v1166 = vadd.f32 %v1164, %v1165
      %v1167 = vmul.f32 %v1063, %v1063
      %v1168 = vmul.f32 %v1064, %v1064
      %v1169 = vsel %vm355, %v1167, 0.0
      %v1170 = vsel %vm355, %v1168, 0.0
      %v1171 = vadd.f32 %v1169, %v1170
      %v1172 = vrot.slane %v1171, 4
      %v1173 = vadd.f32 %v1171, %v1172
      %v1174 = vrot.slane %v1173, 2
      %v1175 = vadd.f32 %v1173, %v1174
      %v1176 = vrot.slane %v1175, 1
      %v1177 = vadd.f32 %v1175, %v1176
      %v1178 = vld [vmem:[#allocation2] sm:$0xff]
      %v1179 = vld [vmem:[#allocation2 + $0x8] sm:$0x1]
      %vm1180 = vcmask 1040384
      %v1181 = vsel %vm1180, %v1073, %v1088
      %vm1182 = vcmask 1041408
      %v1183 = vsel %vm1182, %v1181, %v1103
      %vm1184 = vcmask 1042432
      %v1185 = vsel %vm1184, %v1183, %v1118
      %vm1186 = vcmask 1043456
      %v1187 = vsel %vm1186, %v1185, %v1133
      %vm1188 = vcmask 1044480
      %v1189 = vsel %vm1188, %v1187, %v1144
      %vm1190 = vcmask 1045504
      %v1191 = vsel %vm1190, %v1189, %v1155
      %vm1192 = vcmask 1046528
      %v1193 = vsel %vm1192, %v1191, %v1166
      %v1194 = vadd.f32 %v1178, %v1193
      %v1195 = vadd.f32 %v1179, %v1177
      %1196 = vst.msk [vmem:[#allocation2] sm:$0xff] %vm355, %v1194
      %vm1197 = vcmask 122880
      %1198 = vst.msk [vmem:[#allocation2 + $0x8] sm:$0x1] %vm1197, %v1195
      // Predicated region
      $region41: #{aux_loss.3} parent=35 // pred_check
        %p1199 = pneg %p339
      $region42: #{aux_loss.3} parent=35 // pred_check_branch
        %1201 = sbr.rel (%p1199) target = $region44
      $region43: #{aux_loss.3} parent=35 // pred_region
        %v1202 = vld [vmem:[#allocation2] sm:$0xff]
        %v1203 = vld [vmem:[#allocation2 + $0x8] sm:$0x1]
        %v1204 = vsel %vm355, %v1202, 0.0
        %1205 = vadd.xlane.f32.xlu0 %v1204
        %v1206 = vpop.xlane.xlu0 %1205
        %v1207 = vsel %vm1197, %v1203, 0.0
        %1208 = vadd.xlane.f32.xlu0 %v1207
        %v1209 = vpop.xlane.xlu0 %1208
        %vm1210 = vcmask 0
        %1211 = vst.msk [vmem:[%s330] sm:$0x1] %vm1210, %v1206
        %vm1212 = vcmask 4097
        %1213 = vst.msk [vmem:[%s334 - $0x1] sm:$0x1e] %vm1212, %v1206
        %vm1214 = vcmask 7173
        %1215 = vst.msk [vmem:[%s338 - $0x5] sm:$0xe0] %vm1214, %v1206
        %1216 = vst.msk [vmem:[%s338 + $0x3] sm:$0x1] %vm1210, %v1209
      $region44: #{aux_loss.3} parent=35 // pred_fallthru
        _
      %p1217 = scmp.lt.s32.totalorder %s22, 1
      %s1218 = scalar_select %p1217, %s22, 1
      %s1219 = scalar_lea.vmem %s4, %s1218
      %p1220 = scmp.lt.s32.totalorder %s22, 1
      %s1221 = scalar_select %p1220, %s22, 1
      %s1222 = smul.addr %s1221, 4
      %s1223 = scalar_lea.vmem %s5, %s1222
      %p1224 = scmp.lt.s32.totalorder %s22, 1
      %s1225 = scalar_select %p1224, %s22, 1
      %s1226 = smul.addr %s1225, 4
      %s1227 = scalar_lea.vmem %s6, %s1226
      // Predicated region
      $region45: #{aux_loss.3} parent=35 // pred_check
        %p1228 = pneg %p149
      $region46: #{aux_loss.3} parent=35 // pred_check_branch
        %1230 = sbr.rel (%p1228) target = $region48
      $region47: #{aux_loss.3} parent=35 // pred_region
        _
      $region48: #{aux_loss.3} parent=35 // pred_fallthru
        _
      // Predicated region
      $region49: #{aux_loss.3} parent=35 // pred_check
        %p1231 = pneg %p175
      $region50: #{aux_loss.3} parent=35 // pred_check_branch
        %1233 = sbr.rel (%p1231) target = $region52
      $region51: #{aux_loss.3} parent=35 // pred_region
        _
      $region52: #{aux_loss.3} parent=35 // pred_fallthru
        _
      // Predicated region
      $region53: #{aux_loss.3} parent=35 // pred_check
        %p1234 = pneg %p201
      $region54: #{aux_loss.3} parent=35 // pred_check_branch
        %1236 = sbr.rel (%p1234) target = $region56
      $region55: #{aux_loss.3} parent=35 // pred_region
        _
      $region56: #{aux_loss.3} parent=35 // pred_fallthru
        _
    $region36: #{aux_loss.3} parent=5 // pred_fallthru
      _
    %p1237 = scmp.le.s32.totalorder 2, %s13
    // Predicated region
    $region57: #{aux_loss.3} parent=5 // pred_check
      %p1238 = pneg %p1237
    $region58: #{aux_loss.3} parent=5 // pred_check_branch
      %1240 = sbr.rel (%p1238) target = $region60
    $region59: #{aux_loss.3} parent=5 // pred_region
      %s1241 = ssub.s32 %s13, 2
      // Predicated region
      $region61: #{aux_loss.3} parent=59 // pred_check
        %p1242 = pneg %p155
      $region62: #{aux_loss.3} parent=59 // pred_check_branch
        %1244 = sbr.rel (%p1242) target = $region64
      $region63: #{aux_loss.3} parent=59 // pred_region
        %p1245 = scmp.lt.s32.totalorder %s24, 1
        %s1246 = scalar_select %p1245, %s24, 1
        %s1247 = scalar_lea.vmem %s4, %s1246
      $region64: #{aux_loss.3} parent=59 // pred_fallthru
        _
      // Predicated region
      $region65: #{aux_loss.3} parent=59 // pred_check
        %p1248 = pneg %p181
      $region66: #{aux_loss.3} parent=59 // pred_check_branch
        %1250 = sbr.rel (%p1248) target = $region68
      $region67: #{aux_loss.3} parent=59 // pred_region
        %p1251 = scmp.lt.s32.totalorder %s24, 1
        %s1252 = scalar_select %p1251, %s24, 1
        %s1253 = smul.addr %s1252, 4
        %s1254 = scalar_lea.vmem %s5, %s1253
      $region68: #{aux_loss.3} parent=59 // pred_fallthru
        _
      // Predicated region
      $region69: #{aux_loss.3} parent=59 // pred_check
        %p1255 = pneg %p207
      $region70: #{aux_loss.3} parent=59 // pred_check_branch
        %1257 = sbr.rel (%p1255) target = $region72
      $region71: #{aux_loss.3} parent=59 // pred_region
        %p1258 = scmp.lt.s32.totalorder %s24, 1
        %s1259 = scalar_select %p1258, %s24, 1
        %s1260 = smul.addr %s1259, 4
        %s1261 = scalar_lea.vmem %s6, %s1260
      $region72: #{aux_loss.3} parent=59 // pred_fallthru
        _
    $region60: #{aux_loss.3} parent=5 // pred_fallthru
      _
  $region6: #{aux_loss.3} parent=0 // loop_footer
    %s17 = sadd.s32 1, %s13
  $region7: #{aux_loss.3} parent=0 // loop_footer_branch
    %12 = sbr.rel target = $region3
  $region8: #{aux_loss.3} parent=0 // loop_exit
    _

</llo_original>
